<compile_context>
chip_gen: v7x
topology: tpu7x:2x2x1
jax: 0.10.0
libtpu: 0.0.40
codegen_flags: <defaults>
</compile_context>

<pallas_src>
import functools
import math

import jax
import jax.numpy as jnp
from jax import lax
from jax.experimental import pallas as pl
from jax.experimental.pallas import tpu as pltpu


def _full_spec(shape):
    """BlockSpec covering the whole array (grid-less pallas_call)."""
    zeros = (0,) * len(shape)
    return pl.BlockSpec(shape, lambda *_: zeros)


def _nbytes(shape, dtype):
    return math.prod(shape) * jnp.dtype(dtype).itemsize


def _sigmoid(x):
    # 0.5*(tanh(0.5x)+1): one EUP pass per gate instead of exp + reciprocal.
    return 0.5 * (jnp.tanh(0.5 * x) + 1.0)


def _lstm_cell(z, c, H):
    """PyTorch LSTM cell. z: (B, 4H) f32 pre-activations [i,f,g,o], c: (B, H) f32."""
    i_g = _sigmoid(z[:, 0 * H:1 * H])
    f_g = _sigmoid(z[:, 1 * H:2 * H])
    g_g = jnp.tanh(z[:, 2 * H:3 * H])
    o_g = _sigmoid(z[:, 3 * H:4 * H])
    c_new = f_g * c + i_g * g_g
    h_new = o_g * jnp.tanh(c_new)
    return h_new, c_new


def _bilstm_body(x_ref, wih_ref, bih_ref, whh_ref, out_ref, gp_sc, *, T, B, H):
    """Fused bidirectional LSTM layer; writes time-major (T, B, 2H) to out_ref."""
    # ---- Phase 1: input projection for all timesteps + both directions ------
    gp_sc[...] = (
        jnp.dot(x_ref[...], wih_ref[...], preferred_element_type=jnp.float32)
        + bih_ref[...]
    )

    w_dtype = whh_ref.dtype
    whh = whh_ref[...]   # (2H, 8H) block-diagonal [fwd | bwd]; loop invariant

    def row(i):
        r = i * B
        return pl.multiple_of(r, 8) if B % 8 == 0 else r

    # ---- Phase 2: sequential recurrence --------------------------------------
    def step(t, carry):
        h_f, c_f, h_b, c_b = carry                                  # (B, H) f32
        pre_f = gp_sc[pl.ds(row(t), B), 0:4 * H]                    # fwd gates of x[t]
        pre_b = gp_sc[pl.ds(row(T - 1 - t), B), 4 * H:8 * H]        # bwd gates of x[T-1-t]
        # One fused recurrent matmul for both directions (block-diagonal weight).
        h_cat = jnp.concatenate([h_f, h_b], axis=1).astype(w_dtype)  # (B, 2H)
        z = jnp.dot(h_cat, whh, preferred_element_type=jnp.float32)  # (B, 8H)
        h_f, c_f = _lstm_cell(pre_f + z[:, 0:4 * H], c_f, H)
        h_b, c_b = _lstm_cell(pre_b + z[:, 4 * H:8 * H], c_b, H)
        # Direct time-major writes (no h scratch, no later assembly pass).
        out_ref[t, :, 0:H] = h_f.astype(out_ref.dtype)
        out_ref[T - 1 - t, :, H:2 * H] = h_b.astype(out_ref.dtype)
        return h_f, c_f, h_b, c_b

    zeros = jnp.zeros((B, H), jnp.float32)   # h0 = c0 = 0, as in the module
    unroll = True if T <= 16 else 4          # TODO(synk): sweep unroll at production H
    lax.fori_loop(0, T, step, (zeros, zeros, zeros, zeros), unroll=unroll)


def _bilstm_layer_kernel(x_ref, wih_ref, bih_ref, whh_ref, out_ref, gp_sc,
                         *, T, B, H):
    _bilstm_body(x_ref, wih_ref, bih_ref, whh_ref, out_ref, gp_sc, T=T, B=B, H=H)


def _bilstm_head_kernel(x_ref, wih_ref, bih_ref, whh_ref, wfc_ref, bfc_ref,
                        out_ref, logits_ref, gp_sc, *, T, B, H):
    _bilstm_body(x_ref, wih_ref, bih_ref, whh_ref, out_ref, gp_sc, T=T, B=B, H=H)
    # final_hidden_state = lstm_output[:, -1, :] == time-major out[T-1].
    # nn.Dropout is identity at inference; fc is fused here (no extra launch).
    last = out_ref[T - 1, :, :].astype(wfc_ref.dtype)                 # (B, 2H)
    logits = (
        jnp.dot(last, wfc_ref[...], preferred_element_type=jnp.float32)
        + bfc_ref[...]
    )
    logits_ref[...] = logits.astype(logits_ref.dtype)


def bilstm_layer(x_flat, wih, bih, whh_block, wfc=None, bfc=None, *, T, B,
                 compute_dtype=jnp.bfloat16, out_dtype=jnp.float32):
    """One fused bidirectional LSTM layer (+ fused fc head when wfc/bfc given).

    x_flat: (T*B, E) time-major flattened input.
    Returns time-major (T, B, 2H), or ((T, B, 2H), (B, C)) with the fused fc.
    """
    TB, E = x_flat.shape
    assert TB == T * B
    H = whh_block.shape[0] // 2

    x_flat = x_flat.astype(compute_dtype)
    wih = wih.astype(compute_dtype)
    whh = whh_block.astype(compute_dtype)
    bih = bih.astype(jnp.float32)           # added to the f32 accumulation

    in_arrays = [x_flat, wih, bih, whh]
    out_shapes = [jax.ShapeDtypeStruct((T, B, 2 * H), out_dtype)]
    scratch = [pltpu.VMEM((T * B, 8 * H), jnp.float32)]   # gate pre-activations
    # TODO(synk): at production T/B/H (esp. v7x 64 MiB VMEM) chunk this buffer
    # over T and stream Phase 1 instead of holding it fully resident.

    if wfc is not None:
        wfc = wfc.astype(compute_dtype)
        bfc = bfc.astype(jnp.float32)
        C = wfc.shape[1]
        in_arrays += [wfc, bfc]
        out_shapes.append(jax.ShapeDtypeStruct((B, C), jnp.float32))
        kernel = functools.partial(_bilstm_head_kernel, T=T, B=B, H=H)
    else:
        kernel = functools.partial(_bilstm_layer_kernel, T=T, B=B, H=H)

    in_specs = [_full_spec(a.shape) for a in in_arrays]
    out_specs = tuple(_full_spec(s.shape) for s in out_shapes)

    total = sum(_nbytes(a.shape, a.dtype) for a in in_arrays)
    total += sum(_nbytes(s.shape, s.dtype) for s in out_shapes)
    total += _nbytes((T * B, 8 * H), jnp.float32)
    vmem_limit = min(max(2 * total + (4 << 20), 32 << 20), 64 << 20)

    result = pl.pallas_call(
        kernel,
        out_shape=tuple(out_shapes),
        in_specs=in_specs,
        out_specs=out_specs,
        scratch_shapes=scratch,
        compiler_params=pltpu.CompilerParams(vmem_limit_bytes=vmem_limit),
    )(*in_arrays)

    if wfc is None:
        return result[0]
    return result


# ----------------------------------------------------------------------------
# Full TargetModel forward
# ----------------------------------------------------------------------------
def init_params(key, vocab_size, embedding_dim, hidden_dim, num_classes,
                lstm_layers, bidirectional=True, pad_idx=0):
    # TODO(synk): only the bidirectional=True path (the module default) is implemented.
    assert bidirectional
    H = hidden_dim
    k = 1.0 / math.sqrt(H)
    keys = jax.random.split(key, 1 + 8 * lstm_layers + 2)
    it = iter(keys)

    emb = jax.random.normal(next(it), (vocab_size, embedding_dim), jnp.float32)
    emb = emb.at[pad_idx].set(0.0)   # nn.Embedding padding_idx row is zero

    lstm = []
    for layer in range(lstm_layers):
        in_dim = embedding_dim if layer == 0 else 2 * H
        wih_parts, b_parts, whh_parts = [], [], []
        for _ in range(2):           # forward, backward; PyTorch gate order [i,f,g,o]
            w_ih_t = jax.random.uniform(next(it), (in_dim, 4 * H), jnp.float32, -k, k)
            w_hh_t = jax.random.uniform(next(it), (H, 4 * H), jnp.float32, -k, k)
            b_ih = jax.random.uniform(next(it), (1, 4 * H), jnp.float32, -k, k)
            b_hh = jax.random.uniform(next(it), (1, 4 * H), jnp.float32, -k, k)
            wih_parts.append(w_ih_t)
            b_parts.append(b_ih + b_hh)
            whh_parts.append(w_hh_t)
        wih = jnp.concatenate(wih_parts, axis=1)   # (in_dim, 8H): [fwd | bwd]
        bih = jnp.concatenate(b_parts, axis=1)     # (1, 8H)
        whh_block = jnp.zeros((2 * H, 8 * H), jnp.float32)   # block-diag [fwd | bwd]
        whh_block = whh_block.at[:H, :4 * H].set(whh_parts[0])
        whh_block = whh_block.at[H:, 4 * H:].set(whh_parts[1])
        lstm.append((wih, bih, whh_block))

    kf = 1.0 / math.sqrt(2 * H)
    w_fc_t = jax.random.uniform(next(it), (2 * H, num_classes), jnp.float32, -kf, kf)
    b_fc = jax.random.uniform(next(it), (1, num_classes), jnp.float32, -kf, kf)
    return dict(emb=emb, lstm=lstm, w_fc_t=w_fc_t, b_fc=b_fc)


@jax.jit
def target_model_forward(text, emb, lstm_params, w_fc_t, b_fc):
    """text: int32 (B, S). Returns (logits (B, C), lstm_output (B, S, 2H))."""
    B, S = text.shape
    Bp = ((B + 7) // 8) * 8     # pad batch to a sublane multiple (aligned slices)
    # Embedding lookup (plain-JAX gather glue), produced directly in time-major
    # layout so no (B,S,E) float transpose is materialized in HBM.
    x = jnp.take(emb, jnp.transpose(text), axis=0)           # (S, B, E)
    if Bp != B:
        x = jnp.pad(x, ((0, 0), (0, Bp - B), (0, 0)))
    x = x.reshape(S * Bp, emb.shape[1]).astype(jnp.bfloat16)

    n_layers = len(lstm_params)
    out_tm = None
    logits = None
    for li, (wih, bih, whh_block) in enumerate(lstm_params):
        if li == n_layers - 1:
            out_tm, logits = bilstm_layer(x, wih, bih, whh_block, w_fc_t, b_fc,
                                          T=S, B=Bp, out_dtype=jnp.float32)
        else:
            # TODO(synk): nn.LSTM inter-layer dropout is identity at inference.
            out_tm = bilstm_layer(x, wih, bih, whh_block, T=S, B=Bp,
                                  out_dtype=jnp.bfloat16)
            # Already time-major: next layer's input needs only a free reshape.
            x = out_tm.reshape(S * Bp, -1)

    # Single batch-major layout pass for the module's (B, S, 2H) output.
    lstm_out = jnp.transpose(out_tm[:, :B, :], (1, 0, 2))
    return logits[:B], lstm_out


if __name__ == "__main__":
    # Small, module-consistent shapes.
    VOCAB, EMB, HID, CLS, LAYERS, B, S = 64, 32, 32, 4, 2, 2, 8

    key = jax.random.PRNGKey(0)
    pkey, tkey = jax.random.split(key)
    params = init_params(pkey, VOCAB, EMB, HID, CLS, LAYERS,
                         bidirectional=True, pad_idx=0)

    text = jax.random.randint(tkey, (B, S), 0, VOCAB, dtype=jnp.int32)

    logits, lstm_out = target_model_forward(
        text, params["emb"], params["lstm"], params["w_fc_t"], params["b_fc"])
    jax.block_until_ready((logits, lstm_out))

    assert logits.shape == (B, CLS)
    assert lstm_out.shape == (B, S, HID * 2)
    assert bool(jnp.all(jnp.isfinite(logits)))
    assert bool(jnp.all(jnp.isfinite(lstm_out)))
    print("KERNEL_OK")
</pallas_src>

<mosaic_0001>
module attributes {stable_mosaic.version = 11 : i64} {
  func.func @_bilstm_layer_kernel(%arg0: memref<64x32xbf16, #tpu.memory_space<vmem>>, %arg1: memref<32x256xbf16, #tpu.memory_space<vmem>>, %arg2: memref<1x256xf32, #tpu.memory_space<vmem>>, %arg3: memref<64x256xbf16, #tpu.memory_space<vmem>>, %arg4: memref<8x8x64xbf16, #tpu.memory_space<vmem>>, %arg5: memref<64x256xf32, #tpu.memory_space<vmem>>) attributes {dimension_semantics = [], scalar_prefetch = 0 : i64, scratch_operands = 1 : i64, tpu.core_type = #tpu.core_type<tc>} {
    %c0 = arith.constant 0 : index
    %c0_0 = arith.constant 0 : index
    %0 = vector.load %arg0[%c0, %c0_0] : memref<64x32xbf16, #tpu.memory_space<vmem>>, vector<64x32xbf16>
    %c0_1 = arith.constant 0 : index
    %c0_2 = arith.constant 0 : index
    %1 = vector.load %arg1[%c0_1, %c0_2] : memref<32x256xbf16, #tpu.memory_space<vmem>>, vector<32x256xbf16>
    %cst = arith.constant dense<0.000000e+00> : vector<64x256xf32>
    %2 = tpu.matmul %0, %1, %cst {dimension_numbers = #tpu.dot_dimension_numbers<[1], [0], [0], [1], [0, 0, 1, 1], [], []>} : vector<64x32xbf16>, vector<32x256xbf16>, vector<64x256xf32> -> vector<64x256xf32>
    %c0_3 = arith.constant 0 : index
    %c0_4 = arith.constant 0 : index
    %3 = vector.load %arg2[%c0_3, %c0_4] : memref<1x256xf32, #tpu.memory_space<vmem>>, vector<1x256xf32>
    %4 = vector.broadcast %3 : vector<1x256xf32> to vector<64x256xf32>
    %5 = arith.addf %2, %4 : vector<64x256xf32>
    %c0_5 = arith.constant 0 : index
    %c0_6 = arith.constant 0 : index
    %6 = vector.load %arg5[%c0_5, %c0_6] : memref<64x256xf32, #tpu.memory_space<vmem>>, vector<64x256xf32>
    tpu.vector_store %arg5[%c0_5, %c0_6], %5 {strides = array<i32>} : memref<64x256xf32, #tpu.memory_space<vmem>>, vector<64x256xf32>,
    %c0_7 = arith.constant 0 : index
    %c0_8 = arith.constant 0 : index
    %7 = vector.load %arg3[%c0_7, %c0_8] : memref<64x256xbf16, #tpu.memory_space<vmem>>, vector<64x256xbf16>
    %cst_9 = arith.constant 0.000000e+00 : f32
    %8 = vector.broadcast %cst_9 : f32 to vector<8x32xf32>
    %c0_i32 = arith.constant 0 : i32
    %c8_i32 = arith.constant 8 : i32
    %9 = arith.muli %c0_i32, %c8_i32 : i32
    %10 = tpu.assume_multiple %9, 8 : i32
    %11 = arith.index_cast %10 : i32 to index
    %c0_10 = arith.constant 0 : index
    %12 = vector.load %arg5[%11, %c0_10] : memref<64x256xf32, #tpu.memory_space<vmem>>, vector<8x128xf32>
    %c7_i32 = arith.constant 7 : i32
    %13 = arith.subi %c7_i32, %c0_i32 : i32
    %c8_i32_11 = arith.constant 8 : i32
    %14 = arith.muli %13, %c8_i32_11 : i32
    %15 = tpu.assume_multiple %14, 8 : i32
    %16 = arith.index_cast %15 : i32 to index
    %c128 = arith.constant 128 : index
    %17 = vector.load %arg5[%16, %c128] : memref<64x256xf32, #tpu.memory_space<vmem>>, vector<8x128xf32>
    %18 = tpu.concatenate %8, %8 in 1 : vector<8x32xf32>, vector<8x32xf32> -> vector<8x64xf32>
    %19 = arith.truncf %18 : vector<8x64xf32> to vector<8x64xbf16>
    %cst_12 = arith.constant dense<0.000000e+00> : vector<8x256xf32>
    %20 = tpu.matmul %19, %7, %cst_12 {dimension_numbers = #tpu.dot_dimension_numbers<[1], [0], [0], [1], [0, 0, 1, 1], [], []>} : vector<8x64xbf16>, vector<64x256xbf16>, vector<8x256xf32> -> vector<8x256xf32>
    %21 = vector.extract_strided_slice %20 {offsets = [0, 0], sizes = [8, 128], strides = [1, 1]} : vector<8x256xf32> to vector<8x128xf32>
    %22 = arith.addf %12, %21 : vector<8x128xf32>
    %23 = vector.extract_strided_slice %22 {offsets = [0, 0], sizes = [8, 32], strides = [1, 1]} : vector<8x128xf32> to vector<8x32xf32>
    %cst_13 = arith.constant 5.000000e-01 : f32
    %24 = vector.broadcast %cst_13 : f32 to vector<8x32xf32>
    %25 = arith.mulf %24, %23 : vector<8x32xf32>
    %26 = math.tanh %25 : vector<8x32xf32>
    %cst_14 = arith.constant 1.000000e+00 : f32
    %27 = vector.broadcast %cst_14 : f32 to vector<8x32xf32>
    %28 = arith.addf %26, %27 : vector<8x32xf32>
    %cst_15 = arith.constant 5.000000e-01 : f32
    %29 = vector.broadcast %cst_15 : f32 to vector<8x32xf32>
    %30 = arith.mulf %29, %28 : vector<8x32xf32>
    %31 = vector.extract_strided_slice %22 {offsets = [0, 32], sizes = [8, 32], strides = [1, 1]} : vector<8x128xf32> to vector<8x32xf32>
    %cst_16 = arith.constant 5.000000e-01 : f32
    %32 = vector.broadcast %cst_16 : f32 to vector<8x32xf32>
    %33 = arith.mulf %32, %31 : vector<8x32xf32>
    %34 = math.tanh %33 : vector<8x32xf32>
    %cst_17 = arith.constant 1.000000e+00 : f32
    %35 = vector.broadcast %cst_17 : f32 to vector<8x32xf32>
    %36 = arith.addf %34, %35 : vector<8x32xf32>
    %cst_18 = arith.constant 5.000000e-01 : f32
    %37 = vector.broadcast %cst_18 : f32 to vector<8x32xf32>
    %38 = arith.mulf %37, %36 : vector<8x32xf32>
    %39 = vector.extract_strided_slice %22 {offsets = [0, 64], sizes = [8, 32], strides = [1, 1]} : vector<8x128xf32> to vector<8x32xf32>
    %40 = math.tanh %39 : vector<8x32xf32>
    %41 = vector.extract_strided_slice %22 {offsets = [0, 96], sizes = [8, 32], strides = [1, 1]} : vector<8x128xf32> to vector<8x32xf32>
    %cst_19 = arith.constant 5.000000e-01 : f32
    %42 = vector.broadcast %cst_19 : f32 to vector<8x32xf32>
    %43 = arith.mulf %42, %41 : vector<8x32xf32>
    %44 = math.tanh %43 : vector<8x32xf32>
    %cst_20 = arith.constant 1.000000e+00 : f32
    %45 = vector.broadcast %cst_20 : f32 to vector<8x32xf32>
    %46 = arith.addf %44, %45 : vector<8x32xf32>
    %cst_21 = arith.constant 5.000000e-01 : f32
    %47 = vector.broadcast %cst_21 : f32 to vector<8x32xf32>
    %48 = arith.mulf %47, %46 : vector<8x32xf32>
    %49 = arith.mulf %38, %8 : vector<8x32xf32>
    %50 = arith.mulf %30, %40 : vector<8x32xf32>
    %51 = arith.addf %49, %50 : vector<8x32xf32>
    %52 = math.tanh %51 : vector<8x32xf32>
    %53 = arith.mulf %48, %52 : vector<8x32xf32>
    %54 = vector.extract_strided_slice %20 {offsets = [0, 128], sizes = [8, 128], strides = [1, 1]} : vector<8x256xf32> to vector<8x128xf32>
    %55 = arith.addf %17, %54 : vector<8x128xf32>
    %56 = vector.extract_strided_slice %55 {offsets = [0, 0], sizes = [8, 32], strides = [1, 1]} : vector<8x128xf32> to vector<8x32xf32>
    %cst_22 = arith.constant 5.000000e-01 : f32
    %57 = vector.broadcast %cst_22 : f32 to vector<8x32xf32>
    %58 = arith.mulf %57, %56 : vector<8x32xf32>
    %59 = math.tanh %58 : vector<8x32xf32>
    %cst_23 = arith.constant 1.000000e+00 : f32
    %60 = vector.broadcast %cst_23 : f32 to vector<8x32xf32>
    %61 = arith.addf %59, %60 : vector<8x32xf32>
    %cst_24 = arith.constant 5.000000e-01 : f32
    %62 = vector.broadcast %cst_24 : f32 to vector<8x32xf32>
    %63 = arith.mulf %62, %61 : vector<8x32xf32>
    %64 = vector.extract_strided_slice %55 {offsets = [0, 32], sizes = [8, 32], strides = [1, 1]} : vector<8x128xf32> to vector<8x32xf32>
    %cst_25 = arith.constant 5.000000e-01 : f32
    %65 = vector.broadcast %cst_25 : f32 to vector<8x32xf32>
    %66 = arith.mulf %65, %64 : vector<8x32xf32>
    %67 = math.tanh %66 : vector<8x32xf32>
    %cst_26 = arith.constant 1.000000e+00 : f32
    %68 = vector.broadcast %cst_26 : f32 to vector<8x32xf32>
    %69 = arith.addf %67, %68 : vector<8x32xf32>
    %cst_27 = arith.constant 5.000000e-01 : f32
    %70 = vector.broadcast %cst_27 : f32 to vector<8x32xf32>
    %71 = arith.mulf %70, %69 : vector<8x32xf32>
    %72 = vector.extract_strided_slice %55 {offsets = [0, 64], sizes = [8, 32], strides = [1, 1]} : vector<8x128xf32> to vector<8x32xf32>
    %73 = math.tanh %72 : vector<8x32xf32>
    %74 = vector.extract_strided_slice %55 {offsets = [0, 96], sizes = [8, 32], strides = [1, 1]} : vector<8x128xf32> to vector<8x32xf32>
    %cst_28 = arith.constant 5.000000e-01 : f32
    %75 = vector.broadcast %cst_28 : f32 to vector<8x32xf32>
    %76 = arith.mulf %75, %74 : vector<8x32xf32>
    %77 = math.tanh %76 : vector<8x32xf32>
    %cst_29 = arith.constant 1.000000e+00 : f32
    %78 = vector.broadcast %cst_29 : f32 to vector<8x32xf32>
    %79 = arith.addf %77, %78 : vector<8x32xf32>
    %cst_30 = arith.constant 5.000000e-01 : f32
    %80 = vector.broadcast %cst_30 : f32 to vector<8x32xf32>
    %81 = arith.mulf %80, %79 : vector<8x32xf32>
    %82 = arith.mulf %71, %8 : vector<8x32xf32>
    %83 = arith.mulf %63, %73 : vector<8x32xf32>
    %84 = arith.addf %82, %83 : vector<8x32xf32>
    %85 = math.tanh %84 : vector<8x32xf32>
    %86 = arith.mulf %81, %85 : vector<8x32xf32>
    %87 = arith.truncf %53 : vector<8x32xf32> to vector<8x32xbf16>
    %88 = arith.index_cast %c0_i32 : i32 to index
    %c0_31 = arith.constant 0 : index
    %c0_32 = arith.constant 0 : index
    %89 = vector.load %arg4[%88, %c0_31, %c0_32] : memref<8x8x64xbf16, #tpu.memory_space<vmem>>, vector<1x8x32xbf16>
    %90 = vector.shape_cast %89 : vector<1x8x32xbf16> to vector<8x32xbf16>
    %91 = vector.shape_cast %87 : vector<8x32xbf16> to vector<1x8x32xbf16>
    tpu.vector_store %arg4[%88, %c0_31, %c0_32], %91 {strides = array<i32>} : memref<8x8x64xbf16, #tpu.memory_space<vmem>>, vector<1x8x32xbf16>,
    %92 = arith.truncf %86 : vector<8x32xf32> to vector<8x32xbf16>
    %c7_i32_33 = arith.constant 7 : i32
    %93 = arith.subi %c7_i32_33, %c0_i32 : i32
    %94 = arith.index_cast %93 : i32 to index
    %c0_34 = arith.constant 0 : index
    %c32 = arith.constant 32 : index
    %95 = vector.load %arg4[%94, %c0_34, %c32] : memref<8x8x64xbf16, #tpu.memory_space<vmem>>, vector<1x8x32xbf16>
    %96 = vector.shape_cast %95 : vector<1x8x32xbf16> to vector<8x32xbf16>
    %97 = vector.shape_cast %92 : vector<8x32xbf16> to vector<1x8x32xbf16>
    tpu.vector_store %arg4[%94, %c0_34, %c32], %97 {strides = array<i32>} : memref<8x8x64xbf16, #tpu.memory_space<vmem>>, vector<1x8x32xbf16>,
    %c1_i32 = arith.constant 1 : i32
    %c8_i32_35 = arith.constant 8 : i32
    %98 = arith.muli %c1_i32, %c8_i32_35 : i32
    %99 = tpu.assume_multiple %98, 8 : i32
    %100 = arith.index_cast %99 : i32 to index
    %c0_36 = arith.constant 0 : index
    %101 = vector.load %arg5[%100, %c0_36] : memref<64x256xf32, #tpu.memory_space<vmem>>, vector<8x128xf32>
    %c7_i32_37 = arith.constant 7 : i32
    %102 = arith.subi %c7_i32_37, %c1_i32 : i32
    %c8_i32_38 = arith.constant 8 : i32
    %103 = arith.muli %102, %c8_i32_38 : i32
    %104 = tpu.assume_multiple %103, 8 : i32
    %105 = arith.index_cast %104 : i32 to index
    %c128_39 = arith.constant 128 : index
    %106 = vector.load %arg5[%105, %c128_39] : memref<64x256xf32, #tpu.memory_space<vmem>>, vector<8x128xf32>
    %107 = tpu.concatenate %53, %86 in 1 : vector<8x32xf32>, vector<8x32xf32> -> vector<8x64xf32>
    %108 = arith.truncf %107 : vector<8x64xf32> to vector<8x64xbf16>
    %cst_40 = arith.constant dense<0.000000e+00> : vector<8x256xf32>
    %109 = tpu.matmul %108, %7, %cst_40 {dimension_numbers = #tpu.dot_dimension_numbers<[1], [0], [0], [1], [0, 0, 1, 1], [], []>} : vector<8x64xbf16>, vector<64x256xbf16>, vector<8x256xf32> -> vector<8x256xf32>
    %110 = vector.extract_strided_slice %109 {offsets = [0, 0], sizes = [8, 128], strides = [1, 1]} : vector<8x256xf32> to vector<8x128xf32>
    %111 = arith.addf %101, %110 : vector<8x128xf32>
    %112 = vector.extract_strided_slice %111 {offsets = [0, 0], sizes = [8, 32], strides = [1, 1]} : vector<8x128xf32> to vector<8x32xf32>
    %cst_41 = arith.constant 5.000000e-01 : f32
    %113 = vector.broadcast %cst_41 : f32 to vector<8x32xf32>
    %114 = arith.mulf %113, %112 : vector<8x32xf32>
    %115 = math.tanh %114 : vector<8x32xf32>
    %cst_42 = arith.constant 1.000000e+00 : f32
    %116 = vector.broadcast %cst_42 : f32 to vector<8x32xf32>
    %117 = arith.addf %115, %116 : vector<8x32xf32>
    %cst_43 = arith.constant 5.000000e-01 : f32
    %118 = vector.broadcast %cst_43 : f32 to vector<8x32xf32>
    %119 = arith.mulf %118, %117 : vector<8x32xf32>
    %120 = vector.extract_strided_slice %111 {offsets = [0, 32], sizes = [8, 32], strides = [1, 1]} : vector<8x128xf32> to vector<8x32xf32>
    %cst_44 = arith.constant 5.000000e-01 : f32
    %121 = vector.broadcast %cst_44 : f32 to vector<8x32xf32>
    %122 = arith.mulf %121, %120 : vector<8x32xf32>
    %123 = math.tanh %122 : vector<8x32xf32>
    %cst_45 = arith.constant 1.000000e+00 : f32
    %124 = vector.broadcast %cst_45 : f32 to vector<8x32xf32>
    %125 = arith.addf %123, %124 : vector<8x32xf32>
    %cst_46 = arith.constant 5.000000e-01 : f32
    %126 = vector.broadcast %cst_46 : f32 to vector<8x32xf32>
    %127 = arith.mulf %126, %125 : vector<8x32xf32>
    %128 = vector.extract_strided_slice %111 {offsets = [0, 64], sizes = [8, 32], strides = [1, 1]} : vector<8x128xf32> to vector<8x32xf32>
    %129 = math.tanh %128 : vector<8x32xf32>
    %130 = vector.extract_strided_slice %111 {offsets = [0, 96], sizes = [8, 32], strides = [1, 1]} : vector<8x128xf32> to vector<8x32xf32>
    %cst_47 = arith.constant 5.000000e-01 : f32
    %131 = vector.broadcast %cst_47 : f32 to vector<8x32xf32>
    %132 = arith.mulf %131, %130 : vector<8x32xf32>
    %133 = math.tanh %132 : vector<8x32xf32>
    %cst_48 = arith.constant 1.000000e+00 : f32
    %134 = vector.broadcast %cst_48 : f32 to vector<8x32xf32>
    %135 = arith.addf %133, %134 : vector<8x32xf32>
    %cst_49 = arith.constant 5.000000e-01 : f32
    %136 = vector.broadcast %cst_49 : f32 to vector<8x32xf32>
    %137 = arith.mulf %136, %135 : vector<8x32xf32>
    %138 = arith.mulf %127, %51 : vector<8x32xf32>
    %139 = arith.mulf %119, %129 : vector<8x32xf32>
    %140 = arith.addf %138, %139 : vector<8x32xf32>
    %141 = math.tanh %140 : vector<8x32xf32>
    %142 = arith.mulf %137, %141 : vector<8x32xf32>
    %143 = vector.extract_strided_slice %109 {offsets = [0, 128], sizes = [8, 128], strides = [1, 1]} : vector<8x256xf32> to vector<8x128xf32>
    %144 = arith.addf %106, %143 : vector<8x128xf32>
    %145 = vector.extract_strided_slice %144 {offsets = [0, 0], sizes = [8, 32], strides = [1, 1]} : vector<8x128xf32> to vector<8x32xf32>
    %cst_50 = arith.constant 5.000000e-01 : f32
    %146 = vector.broadcast %cst_50 : f32 to vector<8x32xf32>
    %147 = arith.mulf %146, %145 : vector<8x32xf32>
    %148 = math.tanh %147 : vector<8x32xf32>
    %cst_51 = arith.constant 1.000000e+00 : f32
    %149 = vector.broadcast %cst_51 : f32 to vector<8x32xf32>
    %150 = arith.addf %148, %149 : vector<8x32xf32>
    %cst_52 = arith.constant 5.000000e-01 : f32
    %151 = vector.broadcast %cst_52 : f32 to vector<8x32xf32>
    %152 = arith.mulf %151, %150 : vector<8x32xf32>
    %153 = vector.extract_strided_slice %144 {offsets = [0, 32], sizes = [8, 32], strides = [1, 1]} : vector<8x128xf32> to vector<8x32xf32>
    %cst_53 = arith.constant 5.000000e-01 : f32
    %154 = vector.broadcast %cst_53 : f32 to vector<8x32xf32>
    %155 = arith.mulf %154, %153 : vector<8x32xf32>
    %156 = math.tanh %155 : vector<8x32xf32>
    %cst_54 = arith.constant 1.000000e+00 : f32
    %157 = vector.broadcast %cst_54 : f32 to vector<8x32xf32>
    %158 = arith.addf %156, %157 : vector<8x32xf32>
    %cst_55 = arith.constant 5.000000e-01 : f32
    %159 = vector.broadcast %cst_55 : f32 to vector<8x32xf32>
    %160 = arith.mulf %159, %158 : vector<8x32xf32>
    %161 = vector.extract_strided_slice %144 {offsets = [0, 64], sizes = [8, 32], strides = [1, 1]} : vector<8x128xf32> to vector<8x32xf32>
    %162 = math.tanh %161 : vector<8x32xf32>
    %163 = vector.extract_strided_slice %144 {offsets = [0, 96], sizes = [8, 32], strides = [1, 1]} : vector<8x128xf32> to vector<8x32xf32>
    %cst_56 = arith.constant 5.000000e-01 : f32
    %164 = vector.broadcast %cst_56 : f32 to vector<8x32xf32>
    %165 = arith.mulf %164, %163 : vector<8x32xf32>
    %166 = math.tanh %165 : vector<8x32xf32>
    %cst_57 = arith.constant 1.000000e+00 : f32
    %167 = vector.broadcast %cst_57 : f32 to vector<8x32xf32>
    %168 = arith.addf %166, %167 : vector<8x32xf32>
    %cst_58 = arith.constant 5.000000e-01 : f32
    %169 = vector.broadcast %cst_58 : f32 to vector<8x32xf32>
    %170 = arith.mulf %169, %168 : vector<8x32xf32>
    %171 = arith.mulf %160, %84 : vector<8x32xf32>
    %172 = arith.mulf %152, %162 : vector<8x32xf32>
    %173 = arith.addf %171, %172 : vector<8x32xf32>
    %174 = math.tanh %173 : vector<8x32xf32>
    %175 = arith.mulf %170, %174 : vector<8x32xf32>
    %176 = arith.truncf %142 : vector<8x32xf32> to vector<8x32xbf16>
    %177 = arith.index_cast %c1_i32 : i32 to index
    %c0_59 = arith.constant 0 : index
    %c0_60 = arith.constant 0 : index
    %178 = vector.load %arg4[%177, %c0_59, %c0_60] : memref<8x8x64xbf16, #tpu.memory_space<vmem>>, vector<1x8x32xbf16>
    %179 = vector.shape_cast %178 : vector<1x8x32xbf16> to vector<8x32xbf16>
    %180 = vector.shape_cast %176 : vector<8x32xbf16> to vector<1x8x32xbf16>
    tpu.vector_store %arg4[%177, %c0_59, %c0_60], %180 {strides = array<i32>} : memref<8x8x64xbf16, #tpu.memory_space<vmem>>, vector<1x8x32xbf16>,
    %181 = arith.truncf %175 : vector<8x32xf32> to vector<8x32xbf16>
    %c7_i32_61 = arith.constant 7 : i32
    %182 = arith.subi %c7_i32_61, %c1_i32 : i32
    %183 = arith.index_cast %182 : i32 to index
    %c0_62 = arith.constant 0 : index
    %c32_63 = arith.constant 32 : index
    %184 = vector.load %arg4[%183, %c0_62, %c32_63] : memref<8x8x64xbf16, #tpu.memory_space<vmem>>, vector<1x8x32xbf16>
    %185 = vector.shape_cast %184 : vector<1x8x32xbf16> to vector<8x32xbf16>
    %186 = vector.shape_cast %181 : vector<8x32xbf16> to vector<1x8x32xbf16>
    tpu.vector_store %arg4[%183, %c0_62, %c32_63], %186 {strides = array<i32>} : memref<8x8x64xbf16, #tpu.memory_space<vmem>>, vector<1x8x32xbf16>,
    %c2_i32 = arith.constant 2 : i32
    %c8_i32_64 = arith.constant 8 : i32
    %187 = arith.muli %c2_i32, %c8_i32_64 : i32
    %188 = tpu.assume_multiple %187, 8 : i32
    %189 = arith.index_cast %188 : i32 to index
    %c0_65 = arith.constant 0 : index
    %190 = vector.load %arg5[%189, %c0_65] : memref<64x256xf32, #tpu.memory_space<vmem>>, vector<8x128xf32>
    %c7_i32_66 = arith.constant 7 : i32
    %191 = arith.subi %c7_i32_66, %c2_i32 : i32
    %c8_i32_67 = arith.constant 8 : i32
    %192 = arith.muli %191, %c8_i32_67 : i32
    %193 = tpu.assume_multiple %192, 8 : i32
    %194 = arith.index_cast %193 : i32 to index
    %c128_68 = arith.constant 128 : index
    %195 = vector.load %arg5[%194, %c128_68] : memref<64x256xf32, #tpu.memory_space<vmem>>, vector<8x128xf32>
    %196 = tpu.concatenate %142, %175 in 1 : vector<8x32xf32>, vector<8x32xf32> -> vector<8x64xf32>
    %197 = arith.truncf %196 : vector<8x64xf32> to vector<8x64xbf16>
    %cst_69 = arith.constant dense<0.000000e+00> : vector<8x256xf32>
    %198 = tpu.matmul %197, %7, %cst_69 {dimension_numbers = #tpu.dot_dimension_numbers<[1], [0], [0], [1], [0, 0, 1, 1], [], []>} : vector<8x64xbf16>, vector<64x256xbf16>, vector<8x256xf32> -> vector<8x256xf32>
    %199 = vector.extract_strided_slice %198 {offsets = [0, 0], sizes = [8, 128], strides = [1, 1]} : vector<8x256xf32> to vector<8x128xf32>
    %200 = arith.addf %190, %199 : vector<8x128xf32>
    %201 = vector.extract_strided_slice %200 {offsets = [0, 0], sizes = [8, 32], strides = [1, 1]} : vector<8x128xf32> to vector<8x32xf32>
    %cst_70 = arith.constant 5.000000e-01 : f32
    %202 = vector.broadcast %cst_70 : f32 to vector<8x32xf32>
    %203 = arith.mulf %202, %201 : vector<8x32xf32>
    %204 = math.tanh %203 : vector<8x32xf32>
    %cst_71 = arith.constant 1.000000e+00 : f32
    %205 = vector.broadcast %cst_71 : f32 to vector<8x32xf32>
    %206 = arith.addf %204, %205 : vector<8x32xf32>
    %cst_72 = arith.constant 5.000000e-01 : f32
    %207 = vector.broadcast %cst_72 : f32 to vector<8x32xf32>
    %208 = arith.mulf %207, %206 : vector<8x32xf32>
    %209 = vector.extract_strided_slice %200 {offsets = [0, 32], sizes = [8, 32], strides = [1, 1]} : vector<8x128xf32> to vector<8x32xf32>
    %cst_73 = arith.constant 5.000000e-01 : f32
    %210 = vector.broadcast %cst_73 : f32 to vector<8x32xf32>
    %211 = arith.mulf %210, %209 : vector<8x32xf32>
    %212 = math.tanh %211 : vector<8x32xf32>
    %cst_74 = arith.constant 1.000000e+00 : f32
    %213 = vector.broadcast %cst_74 : f32 to vector<8x32xf32>
    %214 = arith.addf %212, %213 : vector<8x32xf32>
    %cst_75 = arith.constant 5.000000e-01 : f32
    %215 = vector.broadcast %cst_75 : f32 to vector<8x32xf32>
    %216 = arith.mulf %215, %214 : vector<8x32xf32>
    %217 = vector.extract_strided_slice %200 {offsets = [0, 64], sizes = [8, 32], strides = [1, 1]} : vector<8x128xf32> to vector<8x32xf32>
    %218 = math.tanh %217 : vector<8x32xf32>
    %219 = vector.extract_strided_slice %200 {offsets = [0, 96], sizes = [8, 32], strides = [1, 1]} : vector<8x128xf32> to vector<8x32xf32>
    %cst_76 = arith.constant 5.000000e-01 : f32
    %220 = vector.broadcast %cst_76 : f32 to vector<8x32xf32>
    %221 = arith.mulf %220, %219 : vector<8x32xf32>
    %222 = math.tanh %221 : vector<8x32xf32>
    %cst_77 = arith.constant 1.000000e+00 : f32
    %223 = vector.broadcast %cst_77 : f32 to vector<8x32xf32>
    %224 = arith.addf %222, %223 : vector<8x32xf32>
    %cst_78 = arith.constant 5.000000e-01 : f32
    %225 = vector.broadcast %cst_78 : f32 to vector<8x32xf32>
    %226 = arith.mulf %225, %224 : vector<8x32xf32>
    %227 = arith.mulf %216, %140 : vector<8x32xf32>
    %228 = arith.mulf %208, %218 : vector<8x32xf32>
    %229 = arith.addf %227, %228 : vector<8x32xf32>
    %230 = math.tanh %229 : vector<8x32xf32>
    %231 = arith.mulf %226, %230 : vector<8x32xf32>
    %232 = vector.extract_strided_slice %198 {offsets = [0, 128], sizes = [8, 128], strides = [1, 1]} : vector<8x256xf32> to vector<8x128xf32>
    %233 = arith.addf %195, %232 : vector<8x128xf32>
    %234 = vector.extract_strided_slice %233 {offsets = [0, 0], sizes = [8, 32], strides = [1, 1]} : vector<8x128xf32> to vector<8x32xf32>
    %cst_79 = arith.constant 5.000000e-01 : f32
    %235 = vector.broadcast %cst_79 : f32 to vector<8x32xf32>
    %236 = arith.mulf %235, %234 : vector<8x32xf32>
    %237 = math.tanh %236 : vector<8x32xf32>
    %cst_80 = arith.constant 1.000000e+00 : f32
    %238 = vector.broadcast %cst_80 : f32 to vector<8x32xf32>
    %239 = arith.addf %237, %238 : vector<8x32xf32>
    %cst_81 = arith.constant 5.000000e-01 : f32
    %240 = vector.broadcast %cst_81 : f32 to vector<8x32xf32>
    %241 = arith.mulf %240, %239 : vector<8x32xf32>
    %242 = vector.extract_strided_slice %233 {offsets = [0, 32], sizes = [8, 32], strides = [1, 1]} : vector<8x128xf32> to vector<8x32xf32>
    %cst_82 = arith.constant 5.000000e-01 : f32
    %243 = vector.broadcast %cst_82 : f32 to vector<8x32xf32>
    %244 = arith.mulf %243, %242 : vector<8x32xf32>
    %245 = math.tanh %244 : vector<8x32xf32>
    %cst_83 = arith.constant 1.000000e+00 : f32
    %246 = vector.broadcast %cst_83 : f32 to vector<8x32xf32>
    %247 = arith.addf %245, %246 : vector<8x32xf32>
    %cst_84 = arith.constant 5.000000e-01 : f32
    %248 = vector.broadcast %cst_84 : f32 to vector<8x32xf32>
    %249 = arith.mulf %248, %247 : vector<8x32xf32>
    %250 = vector.extract_strided_slice %233 {offsets = [0, 64], sizes = [8, 32], strides = [1, 1]} : vector<8x128xf32> to vector<8x32xf32>
    %251 = math.tanh %250 : vector<8x32xf32>
    %252 = vector.extract_strided_slice %233 {offsets = [0, 96], sizes = [8, 32], strides = [1, 1]} : vector<8x128xf32> to vector<8x32xf32>
    %cst_85 = arith.constant 5.000000e-01 : f32
    %253 = vector.broadcast %cst_85 : f32 to vector<8x32xf32>
    %254 = arith.mulf %253, %252 : vector<8x32xf32>
    %255 = math.tanh %254 : vector<8x32xf32>
    %cst_86 = arith.constant 1.000000e+00 : f32
    %256 = vector.broadcast %cst_86 : f32 to vector<8x32xf32>
    %257 = arith.addf %255, %256 : vector<8x32xf32>
    %cst_87 = arith.constant 5.000000e-01 : f32
    %258 = vector.broadcast %cst_87 : f32 to vector<8x32xf32>
    %259 = arith.mulf %258, %257 : vector<8x32xf32>
    %260 = arith.mulf %249, %173 : vector<8x32xf32>
    %261 = arith.mulf %241, %251 : vector<8x32xf32>
    %262 = arith.addf %260, %261 : vector<8x32xf32>
    %263 = math.tanh %262 : vector<8x32xf32>
    %264 = arith.mulf %259, %263 : vector<8x32xf32>
    %265 = arith.truncf %231 : vector<8x32xf32> to vector<8x32xbf16>
    %266 = arith.index_cast %c2_i32 : i32 to index
    %c0_88 = arith.constant 0 : index
    %c0_89 = arith.constant 0 : index
    %267 = vector.load %arg4[%266, %c0_88, %c0_89] : memref<8x8x64xbf16, #tpu.memory_space<vmem>>, vector<1x8x32xbf16>
    %268 = vector.shape_cast %267 : vector<1x8x32xbf16> to vector<8x32xbf16>
    %269 = vector.shape_cast %265 : vector<8x32xbf16> to vector<1x8x32xbf16>
    tpu.vector_store %arg4[%266, %c0_88, %c0_89], %269 {strides = array<i32>} : memref<8x8x64xbf16, #tpu.memory_space<vmem>>, vector<1x8x32xbf16>,
    %270 = arith.truncf %264 : vector<8x32xf32> to vector<8x32xbf16>
    %c7_i32_90 = arith.constant 7 : i32
    %271 = arith.subi %c7_i32_90, %c2_i32 : i32
    %272 = arith.index_cast %271 : i32 to index
    %c0_91 = arith.constant 0 : index
    %c32_92 = arith.constant 32 : index
    %273 = vector.load %arg4[%272, %c0_91, %c32_92] : memref<8x8x64xbf16, #tpu.memory_space<vmem>>, vector<1x8x32xbf16>
    %274 = vector.shape_cast %273 : vector<1x8x32xbf16> to vector<8x32xbf16>
    %275 = vector.shape_cast %270 : vector<8x32xbf16> to vector<1x8x32xbf16>
    tpu.vector_store %arg4[%272, %c0_91, %c32_92], %275 {strides = array<i32>} : memref<8x8x64xbf16, #tpu.memory_space<vmem>>, vector<1x8x32xbf16>,
    %c3_i32 = arith.constant 3 : i32
    %c8_i32_93 = arith.constant 8 : i32
    %276 = arith.muli %c3_i32, %c8_i32_93 : i32
    %277 = tpu.assume_multiple %276, 8 : i32
    %278 = arith.index_cast %277 : i32 to index
    %c0_94 = arith.constant 0 : index
    %279 = vector.load %arg5[%278, %c0_94] : memref<64x256xf32, #tpu.memory_space<vmem>>, vector<8x128xf32>
    %c7_i32_95 = arith.constant 7 : i32
    %280 = arith.subi %c7_i32_95, %c3_i32 : i32
    %c8_i32_96 = arith.constant 8 : i32
    %281 = arith.muli %280, %c8_i32_96 : i32
    %282 = tpu.assume_multiple %281, 8 : i32
    %283 = arith.index_cast %282 : i32 to index
    %c128_97 = arith.constant 128 : index
    %284 = vector.load %arg5[%283, %c128_97] : memref<64x256xf32, #tpu.memory_space<vmem>>, vector<8x128xf32>
    %285 = tpu.concatenate %231, %264 in 1 : vector<8x32xf32>, vector<8x32xf32> -> vector<8x64xf32>
    %286 = arith.truncf %285 : vector<8x64xf32> to vector<8x64xbf16>
    %cst_98 = arith.constant dense<0.000000e+00> : vector<8x256xf32>
    %287 = tpu.matmul %286, %7, %cst_98 {dimension_numbers = #tpu.dot_dimension_numbers<[1], [0], [0], [1], [0, 0, 1, 1], [], []>} : vector<8x64xbf16>, vector<64x256xbf16>, vector<8x256xf32> -> vector<8x256xf32>
    %288 = vector.extract_strided_slice %287 {offsets = [0, 0], sizes = [8, 128], strides = [1, 1]} : vector<8x256xf32> to vector<8x128xf32>
    %289 = arith.addf %279, %288 : vector<8x128xf32>
    %290 = vector.extract_strided_slice %289 {offsets = [0, 0], sizes = [8, 32], strides = [1, 1]} : vector<8x128xf32> to vector<8x32xf32>
    %cst_99 = arith.constant 5.000000e-01 : f32
    %291 = vector.broadcast %cst_99 : f32 to vector<8x32xf32>
    %292 = arith.mulf %291, %290 : vector<8x32xf32>
    %293 = math.tanh %292 : vector<8x32xf32>
    %cst_100 = arith.constant 1.000000e+00 : f32
    %294 = vector.broadcast %cst_100 : f32 to vector<8x32xf32>
    %295 = arith.addf %293, %294 : vector<8x32xf32>
    %cst_101 = arith.constant 5.000000e-01 : f32
    %296 = vector.broadcast %cst_101 : f32 to vector<8x32xf32>
    %297 = arith.mulf %296, %295 : vector<8x32xf32>
    %298 = vector.extract_strided_slice %289 {offsets = [0, 32], sizes = [8, 32], strides = [1, 1]} : vector<8x128xf32> to vector<8x32xf32>
    %cst_102 = arith.constant 5.000000e-01 : f32
    %299 = vector.broadcast %cst_102 : f32 to vector<8x32xf32>
    %300 = arith.mulf %299, %298 : vector<8x32xf32>
    %301 = math.tanh %300 : vector<8x32xf32>
    %cst_103 = arith.constant 1.000000e+00 : f32
    %302 = vector.broadcast %cst_103 : f32 to vector<8x32xf32>
    %303 = arith.addf %301, %302 : vector<8x32xf32>
    %cst_104 = arith.constant 5.000000e-01 : f32
    %304 = vector.broadcast %cst_104 : f32 to vector<8x32xf32>
    %305 = arith.mulf %304, %303 : vector<8x32xf32>
    %306 = vector.extract_strided_slice %289 {offsets = [0, 64], sizes = [8, 32], strides = [1, 1]} : vector<8x128xf32> to vector<8x32xf32>
    %307 = math.tanh %306 : vector<8x32xf32>
    %308 = vector.extract_strided_slice %289 {offsets = [0, 96], sizes = [8, 32], strides = [1, 1]} : vector<8x128xf32> to vector<8x32xf32>
    %cst_105 = arith.constant 5.000000e-01 : f32
    %309 = vector.broadcast %cst_105 : f32 to vector<8x32xf32>
    %310 = arith.mulf %309, %308 : vector<8x32xf32>
    %311 = math.tanh %310 : vector<8x32xf32>
    %cst_106 = arith.constant 1.000000e+00 : f32
    %312 = vector.broadcast %cst_106 : f32 to vector<8x32xf32>
    %313 = arith.addf %311, %312 : vector<8x32xf32>
    %cst_107 = arith.constant 5.000000e-01 : f32
    %314 = vector.broadcast %cst_107 : f32 to vector<8x32xf32>
    %315 = arith.mulf %314, %313 : vector<8x32xf32>
    %316 = arith.mulf %305, %229 : vector<8x32xf32>
    %317 = arith.mulf %297, %307 : vector<8x32xf32>
    %318 = arith.addf %316, %317 : vector<8x32xf32>
    %319 = math.tanh %318 : vector<8x32xf32>
    %320 = arith.mulf %315, %319 : vector<8x32xf32>
    %321 = vector.extract_strided_slice %287 {offsets = [0, 128], sizes = [8, 128], strides = [1, 1]} : vector<8x256xf32> to vector<8x128xf32>
    %322 = arith.addf %284, %321 : vector<8x128xf32>
    %323 = vector.extract_strided_slice %322 {offsets = [0, 0], sizes = [8, 32], strides = [1, 1]} : vector<8x128xf32> to vector<8x32xf32>
    %cst_108 = arith.constant 5.000000e-01 : f32
    %324 = vector.broadcast %cst_108 : f32 to vector<8x32xf32>
    %325 = arith.mulf %324, %323 : vector<8x32xf32>
    %326 = math.tanh %325 : vector<8x32xf32>
    %cst_109 = arith.constant 1.000000e+00 : f32
    %327 = vector.broadcast %cst_109 : f32 to vector<8x32xf32>
    %328 = arith.addf %326, %327 : vector<8x32xf32>
    %cst_110 = arith.constant 5.000000e-01 : f32
    %329 = vector.broadcast %cst_110 : f32 to vector<8x32xf32>
    %330 = arith.mulf %329, %328 : vector<8x32xf32>
    %331 = vector.extract_strided_slice %322 {offsets = [0, 32], sizes = [8, 32], strides = [1, 1]} : vector<8x128xf32> to vector<8x32xf32>
    %cst_111 = arith.constant 5.000000e-01 : f32
    %332 = vector.broadcast %cst_111 : f32 to vector<8x32xf32>
    %333 = arith.mulf %332, %331 : vector<8x32xf32>
    %334 = math.tanh %333 : vector<8x32xf32>
    %cst_112 = arith.constant 1.000000e+00 : f32
    %335 = vector.broadcast %cst_112 : f32 to vector<8x32xf32>
    %336 = arith.addf %334, %335 : vector<8x32xf32>
    %cst_113 = arith.constant 5.000000e-01 : f32
    %337 = vector.broadcast %cst_113 : f32 to vector<8x32xf32>
    %338 = arith.mulf %337, %336 : vector<8x32xf32>
    %339 = vector.extract_strided_slice %322 {offsets = [0, 64], sizes = [8, 32], strides = [1, 1]} : vector<8x128xf32> to vector<8x32xf32>
    %340 = math.tanh %339 : vector<8x32xf32>
    %341 = vector.extract_strided_slice %322 {offsets = [0, 96], sizes = [8, 32], strides = [1, 1]} : vector<8x128xf32> to vector<8x32xf32>
    %cst_114 = arith.constant 5.000000e-01 : f32
    %342 = vector.broadcast %cst_114 : f32 to vector<8x32xf32>
    %343 = arith.mulf %342, %341 : vector<8x32xf32>
    %344 = math.tanh %343 : vector<8x32xf32>
    %cst_115 = arith.constant 1.000000e+00 : f32
    %345 = vector.broadcast %cst_115 : f32 to vector<8x32xf32>
    %346 = arith.addf %344, %345 : vector<8x32xf32>
    %cst_116 = arith.constant 5.000000e-01 : f32
    %347 = vector.broadcast %cst_116 : f32 to vector<8x32xf32>
    %348 = arith.mulf %347, %346 : vector<8x32xf32>
    %349 = arith.mulf %338, %262 : vector<8x32xf32>
    %350 = arith.mulf %330, %340 : vector<8x32xf32>
    %351 = arith.addf %349, %350 : vector<8x32xf32>
    %352 = math.tanh %351 : vector<8x32xf32>
    %353 = arith.mulf %348, %352 : vector<8x32xf32>
    %354 = arith.truncf %320 : vector<8x32xf32> to vector<8x32xbf16>
    %355 = arith.index_cast %c3_i32 : i32 to index
    %c0_117 = arith.constant 0 : index
    %c0_118 = arith.constant 0 : index
    %356 = vector.load %arg4[%355, %c0_117, %c0_118] : memref<8x8x64xbf16, #tpu.memory_space<vmem>>, vector<1x8x32xbf16>
    %357 = vector.shape_cast %356 : vector<1x8x32xbf16> to vector<8x32xbf16>
    %358 = vector.shape_cast %354 : vector<8x32xbf16> to vector<1x8x32xbf16>
    tpu.vector_store %arg4[%355, %c0_117, %c0_118], %358 {strides = array<i32>} : memref<8x8x64xbf16, #tpu.memory_space<vmem>>, vector<1x8x32xbf16>,
    %359 = arith.truncf %353 : vector<8x32xf32> to vector<8x32xbf16>
    %c7_i32_119 = arith.constant 7 : i32
    %360 = arith.subi %c7_i32_119, %c3_i32 : i32
    %361 = arith.index_cast %360 : i32 to index
    %c0_120 = arith.constant 0 : index
    %c32_121 = arith.constant 32 : index
    %362 = vector.load %arg4[%361, %c0_120, %c32_121] : memref<8x8x64xbf16, #tpu.memory_space<vmem>>, vector<1x8x32xbf16>
    %363 = vector.shape_cast %362 : vector<1x8x32xbf16> to vector<8x32xbf16>
    %364 = vector.shape_cast %359 : vector<8x32xbf16> to vector<1x8x32xbf16>
    tpu.vector_store %arg4[%361, %c0_120, %c32_121], %364 {strides = array<i32>} : memref<8x8x64xbf16, #tpu.memory_space<vmem>>, vector<1x8x32xbf16>,
    %c4_i32 = arith.constant 4 : i32
    %c8_i32_122 = arith.constant 8 : i32
    %365 = arith.muli %c4_i32, %c8_i32_122 : i32
    %366 = tpu.assume_multiple %365, 8 : i32
    %367 = arith.index_cast %366 : i32 to index
    %c0_123 = arith.constant 0 : index
    %368 = vector.load %arg5[%367, %c0_123] : memref<64x256xf32, #tpu.memory_space<vmem>>, vector<8x128xf32>
    %c7_i32_124 = arith.constant 7 : i32
    %369 = arith.subi %c7_i32_124, %c4_i32 : i32
    %c8_i32_125 = arith.constant 8 : i32
    %370 = arith.muli %369, %c8_i32_125 : i32
    %371 = tpu.assume_multiple %370, 8 : i32
    %372 = arith.index_cast %371 : i32 to index
    %c128_126 = arith.constant 128 : index
    %373 = vector.load %arg5[%372, %c128_126] : memref<64x256xf32, #tpu.memory_space<vmem>>, vector<8x128xf32>
    %374 = tpu.concatenate %320, %353 in 1 : vector<8x32xf32>, vector<8x32xf32> -> vector<8x64xf32>
    %375 = arith.truncf %374 : vector<8x64xf32> to vector<8x64xbf16>
    %cst_127 = arith.constant dense<0.000000e+00> : vector<8x256xf32>
    %376 = tpu.matmul %375, %7, %cst_127 {dimension_numbers = #tpu.dot_dimension_numbers<[1], [0], [0], [1], [0, 0, 1, 1], [], []>} : vector<8x64xbf16>, vector<64x256xbf16>, vector<8x256xf32> -> vector<8x256xf32>
    %377 = vector.extract_strided_slice %376 {offsets = [0, 0], sizes = [8, 128], strides = [1, 1]} : vector<8x256xf32> to vector<8x128xf32>
    %378 = arith.addf %368, %377 : vector<8x128xf32>
    %379 = vector.extract_strided_slice %378 {offsets = [0, 0], sizes = [8, 32], strides = [1, 1]} : vector<8x128xf32> to vector<8x32xf32>
    %cst_128 = arith.constant 5.000000e-01 : f32
    %380 = vector.broadcast %cst_128 : f32 to vector<8x32xf32>
    %381 = arith.mulf %380, %379 : vector<8x32xf32>
    %382 = math.tanh %381 : vector<8x32xf32>
    %cst_129 = arith.constant 1.000000e+00 : f32
    %383 = vector.broadcast %cst_129 : f32 to vector<8x32xf32>
    %384 = arith.addf %382, %383 : vector<8x32xf32>
    %cst_130 = arith.constant 5.000000e-01 : f32
    %385 = vector.broadcast %cst_130 : f32 to vector<8x32xf32>
    %386 = arith.mulf %385, %384 : vector<8x32xf32>
    %387 = vector.extract_strided_slice %378 {offsets = [0, 32], sizes = [8, 32], strides = [1, 1]} : vector<8x128xf32> to vector<8x32xf32>
    %cst_131 = arith.constant 5.000000e-01 : f32
    %388 = vector.broadcast %cst_131 : f32 to vector<8x32xf32>
    %389 = arith.mulf %388, %387 : vector<8x32xf32>
    %390 = math.tanh %389 : vector<8x32xf32>
    %cst_132 = arith.constant 1.000000e+00 : f32
    %391 = vector.broadcast %cst_132 : f32 to vector<8x32xf32>
    %392 = arith.addf %390, %391 : vector<8x32xf32>
    %cst_133 = arith.constant 5.000000e-01 : f32
    %393 = vector.broadcast %cst_133 : f32 to vector<8x32xf32>
    %394 = arith.mulf %393, %392 : vector<8x32xf32>
    %395 = vector.extract_strided_slice %378 {offsets = [0, 64], sizes = [8, 32], strides = [1, 1]} : vector<8x128xf32> to vector<8x32xf32>
    %396 = math.tanh %395 : vector<8x32xf32>
    %397 = vector.extract_strided_slice %378 {offsets = [0, 96], sizes = [8, 32], strides = [1, 1]} : vector<8x128xf32> to vector<8x32xf32>
    %cst_134 = arith.constant 5.000000e-01 : f32
    %398 = vector.broadcast %cst_134 : f32 to vector<8x32xf32>
    %399 = arith.mulf %398, %397 : vector<8x32xf32>
    %400 = math.tanh %399 : vector<8x32xf32>
    %cst_135 = arith.constant 1.000000e+00 : f32
    %401 = vector.broadcast %cst_135 : f32 to vector<8x32xf32>
    %402 = arith.addf %400, %401 : vector<8x32xf32>
    %cst_136 = arith.constant 5.000000e-01 : f32
    %403 = vector.broadcast %cst_136 : f32 to vector<8x32xf32>
    %404 = arith.mulf %403, %402 : vector<8x32xf32>
    %405 = arith.mulf %394, %318 : vector<8x32xf32>
    %406 = arith.mulf %386, %396 : vector<8x32xf32>
    %407 = arith.addf %405, %406 : vector<8x32xf32>
    %408 = math.tanh %407 : vector<8x32xf32>
    %409 = arith.mulf %404, %408 : vector<8x32xf32>
    %410 = vector.extract_strided_slice %376 {offsets = [0, 128], sizes = [8, 128], strides = [1, 1]} : vector<8x256xf32> to vector<8x128xf32>
    %411 = arith.addf %373, %410 : vector<8x128xf32>
    %412 = vector.extract_strided_slice %411 {offsets = [0, 0], sizes = [8, 32], strides = [1, 1]} : vector<8x128xf32> to vector<8x32xf32>
    %cst_137 = arith.constant 5.000000e-01 : f32
    %413 = vector.broadcast %cst_137 : f32 to vector<8x32xf32>
    %414 = arith.mulf %413, %412 : vector<8x32xf32>
    %415 = math.tanh %414 : vector<8x32xf32>
    %cst_138 = arith.constant 1.000000e+00 : f32
    %416 = vector.broadcast %cst_138 : f32 to vector<8x32xf32>
    %417 = arith.addf %415, %416 : vector<8x32xf32>
    %cst_139 = arith.constant 5.000000e-01 : f32
    %418 = vector.broadcast %cst_139 : f32 to vector<8x32xf32>
    %419 = arith.mulf %418, %417 : vector<8x32xf32>
    %420 = vector.extract_strided_slice %411 {offsets = [0, 32], sizes = [8, 32], strides = [1, 1]} : vector<8x128xf32> to vector<8x32xf32>
    %cst_140 = arith.constant 5.000000e-01 : f32
    %421 = vector.broadcast %cst_140 : f32 to vector<8x32xf32>
    %422 = arith.mulf %421, %420 : vector<8x32xf32>
    %423 = math.tanh %422 : vector<8x32xf32>
    %cst_141 = arith.constant 1.000000e+00 : f32
    %424 = vector.broadcast %cst_141 : f32 to vector<8x32xf32>
    %425 = arith.addf %423, %424 : vector<8x32xf32>
    %cst_142 = arith.constant 5.000000e-01 : f32
    %426 = vector.broadcast %cst_142 : f32 to vector<8x32xf32>
    %427 = arith.mulf %426, %425 : vector<8x32xf32>
    %428 = vector.extract_strided_slice %411 {offsets = [0, 64], sizes = [8, 32], strides = [1, 1]} : vector<8x128xf32> to vector<8x32xf32>
    %429 = math.tanh %428 : vector<8x32xf32>
    %430 = vector.extract_strided_slice %411 {offsets = [0, 96], sizes = [8, 32], strides = [1, 1]} : vector<8x128xf32> to vector<8x32xf32>
    %cst_143 = arith.constant 5.000000e-01 : f32
    %431 = vector.broadcast %cst_143 : f32 to vector<8x32xf32>
    %432 = arith.mulf %431, %430 : vector<8x32xf32>
    %433 = math.tanh %432 : vector<8x32xf32>
    %cst_144 = arith.constant 1.000000e+00 : f32
    %434 = vector.broadcast %cst_144 : f32 to vector<8x32xf32>
    %435 = arith.addf %433, %434 : vector<8x32xf32>
    %cst_145 = arith.constant 5.000000e-01 : f32
    %436 = vector.broadcast %cst_145 : f32 to vector<8x32xf32>
    %437 = arith.mulf %436, %435 : vector<8x32xf32>
    %438 = arith.mulf %427, %351 : vector<8x32xf32>
    %439 = arith.mulf %419, %429 : vector<8x32xf32>
    %440 = arith.addf %438, %439 : vector<8x32xf32>
    %441 = math.tanh %440 : vector<8x32xf32>
    %442 = arith.mulf %437, %441 : vector<8x32xf32>
    %443 = arith.truncf %409 : vector<8x32xf32> to vector<8x32xbf16>
    %444 = arith.index_cast %c4_i32 : i32 to index
    %c0_146 = arith.constant 0 : index
    %c0_147 = arith.constant 0 : index
    %445 = vector.load %arg4[%444, %c0_146, %c0_147] : memref<8x8x64xbf16, #tpu.memory_space<vmem>>, vector<1x8x32xbf16>
    %446 = vector.shape_cast %445 : vector<1x8x32xbf16> to vector<8x32xbf16>
    %447 = vector.shape_cast %443 : vector<8x32xbf16> to vector<1x8x32xbf16>
    tpu.vector_store %arg4[%444, %c0_146, %c0_147], %447 {strides = array<i32>} : memref<8x8x64xbf16, #tpu.memory_space<vmem>>, vector<1x8x32xbf16>,
    %448 = arith.truncf %442 : vector<8x32xf32> to vector<8x32xbf16>
    %c7_i32_148 = arith.constant 7 : i32
    %449 = arith.subi %c7_i32_148, %c4_i32 : i32
    %450 = arith.index_cast %449 : i32 to index
    %c0_149 = arith.constant 0 : index
    %c32_150 = arith.constant 32 : index
    %451 = vector.load %arg4[%450, %c0_149, %c32_150] : memref<8x8x64xbf16, #tpu.memory_space<vmem>>, vector<1x8x32xbf16>
    %452 = vector.shape_cast %451 : vector<1x8x32xbf16> to vector<8x32xbf16>
    %453 = vector.shape_cast %448 : vector<8x32xbf16> to vector<1x8x32xbf16>
    tpu.vector_store %arg4[%450, %c0_149, %c32_150], %453 {strides = array<i32>} : memref<8x8x64xbf16, #tpu.memory_space<vmem>>, vector<1x8x32xbf16>,
    %c5_i32 = arith.constant 5 : i32
    %c8_i32_151 = arith.constant 8 : i32
    %454 = arith.muli %c5_i32, %c8_i32_151 : i32
    %455 = tpu.assume_multiple %454, 8 : i32
    %456 = arith.index_cast %455 : i32 to index
    %c0_152 = arith.constant 0 : index
    %457 = vector.load %arg5[%456, %c0_152] : memref<64x256xf32, #tpu.memory_space<vmem>>, vector<8x128xf32>
    %c7_i32_153 = arith.constant 7 : i32
    %458 = arith.subi %c7_i32_153, %c5_i32 : i32
    %c8_i32_154 = arith.constant 8 : i32
    %459 = arith.muli %458, %c8_i32_154 : i32
    %460 = tpu.assume_multiple %459, 8 : i32
    %461 = arith.index_cast %460 : i32 to index
    %c128_155 = arith.constant 128 : index
    %462 = vector.load %arg5[%461, %c128_155] : memref<64x256xf32, #tpu.memory_space<vmem>>, vector<8x128xf32>
    %463 = tpu.concatenate %409, %442 in 1 : vector<8x32xf32>, vector<8x32xf32> -> vector<8x64xf32>
    %464 = arith.truncf %463 : vector<8x64xf32> to vector<8x64xbf16>
    %cst_156 = arith.constant dense<0.000000e+00> : vector<8x256xf32>
    %465 = tpu.matmul %464, %7, %cst_156 {dimension_numbers = #tpu.dot_dimension_numbers<[1], [0], [0], [1], [0, 0, 1, 1], [], []>} : vector<8x64xbf16>, vector<64x256xbf16>, vector<8x256xf32> -> vector<8x256xf32>
    %466 = vector.extract_strided_slice %465 {offsets = [0, 0], sizes = [8, 128], strides = [1, 1]} : vector<8x256xf32> to vector<8x128xf32>
    %467 = arith.addf %457, %466 : vector<8x128xf32>
    %468 = vector.extract_strided_slice %467 {offsets = [0, 0], sizes = [8, 32], strides = [1, 1]} : vector<8x128xf32> to vector<8x32xf32>
    %cst_157 = arith.constant 5.000000e-01 : f32
    %469 = vector.broadcast %cst_157 : f32 to vector<8x32xf32>
    %470 = arith.mulf %469, %468 : vector<8x32xf32>
    %471 = math.tanh %470 : vector<8x32xf32>
    %cst_158 = arith.constant 1.000000e+00 : f32
    %472 = vector.broadcast %cst_158 : f32 to vector<8x32xf32>
    %473 = arith.addf %471, %472 : vector<8x32xf32>
    %cst_159 = arith.constant 5.000000e-01 : f32
    %474 = vector.broadcast %cst_159 : f32 to vector<8x32xf32>
    %475 = arith.mulf %474, %473 : vector<8x32xf32>
    %476 = vector.extract_strided_slice %467 {offsets = [0, 32], sizes = [8, 32], strides = [1, 1]} : vector<8x128xf32> to vector<8x32xf32>
    %cst_160 = arith.constant 5.000000e-01 : f32
    %477 = vector.broadcast %cst_160 : f32 to vector<8x32xf32>
    %478 = arith.mulf %477, %476 : vector<8x32xf32>
    %479 = math.tanh %478 : vector<8x32xf32>
    %cst_161 = arith.constant 1.000000e+00 : f32
    %480 = vector.broadcast %cst_161 : f32 to vector<8x32xf32>
    %481 = arith.addf %479, %480 : vector<8x32xf32>
    %cst_162 = arith.constant 5.000000e-01 : f32
    %482 = vector.broadcast %cst_162 : f32 to vector<8x32xf32>
    %483 = arith.mulf %482, %481 : vector<8x32xf32>
    %484 = vector.extract_strided_slice %467 {offsets = [0, 64], sizes = [8, 32], strides = [1, 1]} : vector<8x128xf32> to vector<8x32xf32>
    %485 = math.tanh %484 : vector<8x32xf32>
    %486 = vector.extract_strided_slice %467 {offsets = [0, 96], sizes = [8, 32], strides = [1, 1]} : vector<8x128xf32> to vector<8x32xf32>
    %cst_163 = arith.constant 5.000000e-01 : f32
    %487 = vector.broadcast %cst_163 : f32 to vector<8x32xf32>
    %488 = arith.mulf %487, %486 : vector<8x32xf32>
    %489 = math.tanh %488 : vector<8x32xf32>
    %cst_164 = arith.constant 1.000000e+00 : f32
    %490 = vector.broadcast %cst_164 : f32 to vector<8x32xf32>
    %491 = arith.addf %489, %490 : vector<8x32xf32>
    %cst_165 = arith.constant 5.000000e-01 : f32
    %492 = vector.broadcast %cst_165 : f32 to vector<8x32xf32>
    %493 = arith.mulf %492, %491 : vector<8x32xf32>
    %494 = arith.mulf %483, %407 : vector<8x32xf32>
    %495 = arith.mulf %475, %485 : vector<8x32xf32>
    %496 = arith.addf %494, %495 : vector<8x32xf32>
    %497 = math.tanh %496 : vector<8x32xf32>
    %498 = arith.mulf %493, %497 : vector<8x32xf32>
    %499 = vector.extract_strided_slice %465 {offsets = [0, 128], sizes = [8, 128], strides = [1, 1]} : vector<8x256xf32> to vector<8x128xf32>
    %500 = arith.addf %462, %499 : vector<8x128xf32>
    %501 = vector.extract_strided_slice %500 {offsets = [0, 0], sizes = [8, 32], strides = [1, 1]} : vector<8x128xf32> to vector<8x32xf32>
    %cst_166 = arith.constant 5.000000e-01 : f32
    %502 = vector.broadcast %cst_166 : f32 to vector<8x32xf32>
    %503 = arith.mulf %502, %501 : vector<8x32xf32>
    %504 = math.tanh %503 : vector<8x32xf32>
    %cst_167 = arith.constant 1.000000e+00 : f32
    %505 = vector.broadcast %cst_167 : f32 to vector<8x32xf32>
    %506 = arith.addf %504, %505 : vector<8x32xf32>
    %cst_168 = arith.constant 5.000000e-01 : f32
    %507 = vector.broadcast %cst_168 : f32 to vector<8x32xf32>
    %508 = arith.mulf %507, %506 : vector<8x32xf32>
    %509 = vector.extract_strided_slice %500 {offsets = [0, 32], sizes = [8, 32], strides = [1, 1]} : vector<8x128xf32> to vector<8x32xf32>
    %cst_169 = arith.constant 5.000000e-01 : f32
    %510 = vector.broadcast %cst_169 : f32 to vector<8x32xf32>
    %511 = arith.mulf %510, %509 : vector<8x32xf32>
    %512 = math.tanh %511 : vector<8x32xf32>
    %cst_170 = arith.constant 1.000000e+00 : f32
    %513 = vector.broadcast %cst_170 : f32 to vector<8x32xf32>
    %514 = arith.addf %512, %513 : vector<8x32xf32>
    %cst_171 = arith.constant 5.000000e-01 : f32
    %515 = vector.broadcast %cst_171 : f32 to vector<8x32xf32>
    %516 = arith.mulf %515, %514 : vector<8x32xf32>
    %517 = vector.extract_strided_slice %500 {offsets = [0, 64], sizes = [8, 32], strides = [1, 1]} : vector<8x128xf32> to vector<8x32xf32>
    %518 = math.tanh %517 : vector<8x32xf32>
    %519 = vector.extract_strided_slice %500 {offsets = [0, 96], sizes = [8, 32], strides = [1, 1]} : vector<8x128xf32> to vector<8x32xf32>
    %cst_172 = arith.constant 5.000000e-01 : f32
    %520 = vector.broadcast %cst_172 : f32 to vector<8x32xf32>
    %521 = arith.mulf %520, %519 : vector<8x32xf32>
    %522 = math.tanh %521 : vector<8x32xf32>
    %cst_173 = arith.constant 1.000000e+00 : f32
    %523 = vector.broadcast %cst_173 : f32 to vector<8x32xf32>
    %524 = arith.addf %522, %523 : vector<8x32xf32>
    %cst_174 = arith.constant 5.000000e-01 : f32
    %525 = vector.broadcast %cst_174 : f32 to vector<8x32xf32>
    %526 = arith.mulf %525, %524 : vector<8x32xf32>
    %527 = arith.mulf %516, %440 : vector<8x32xf32>
    %528 = arith.mulf %508, %518 : vector<8x32xf32>
    %529 = arith.addf %527, %528 : vector<8x32xf32>
    %530 = math.tanh %529 : vector<8x32xf32>
    %531 = arith.mulf %526, %530 : vector<8x32xf32>
    %532 = arith.truncf %498 : vector<8x32xf32> to vector<8x32xbf16>
    %533 = arith.index_cast %c5_i32 : i32 to index
    %c0_175 = arith.constant 0 : index
    %c0_176 = arith.constant 0 : index
    %534 = vector.load %arg4[%533, %c0_175, %c0_176] : memref<8x8x64xbf16, #tpu.memory_space<vmem>>, vector<1x8x32xbf16>
    %535 = vector.shape_cast %534 : vector<1x8x32xbf16> to vector<8x32xbf16>
    %536 = vector.shape_cast %532 : vector<8x32xbf16> to vector<1x8x32xbf16>
    tpu.vector_store %arg4[%533, %c0_175, %c0_176], %536 {strides = array<i32>} : memref<8x8x64xbf16, #tpu.memory_space<vmem>>, vector<1x8x32xbf16>,
    %537 = arith.truncf %531 : vector<8x32xf32> to vector<8x32xbf16>
    %c7_i32_177 = arith.constant 7 : i32
    %538 = arith.subi %c7_i32_177, %c5_i32 : i32
    %539 = arith.index_cast %538 : i32 to index
    %c0_178 = arith.constant 0 : index
    %c32_179 = arith.constant 32 : index
    %540 = vector.load %arg4[%539, %c0_178, %c32_179] : memref<8x8x64xbf16, #tpu.memory_space<vmem>>, vector<1x8x32xbf16>
    %541 = vector.shape_cast %540 : vector<1x8x32xbf16> to vector<8x32xbf16>
    %542 = vector.shape_cast %537 : vector<8x32xbf16> to vector<1x8x32xbf16>
    tpu.vector_store %arg4[%539, %c0_178, %c32_179], %542 {strides = array<i32>} : memref<8x8x64xbf16, #tpu.memory_space<vmem>>, vector<1x8x32xbf16>,
    %c6_i32 = arith.constant 6 : i32
    %c8_i32_180 = arith.constant 8 : i32
    %543 = arith.muli %c6_i32, %c8_i32_180 : i32
    %544 = tpu.assume_multiple %543, 8 : i32
    %545 = arith.index_cast %544 : i32 to index
    %c0_181 = arith.constant 0 : index
    %546 = vector.load %arg5[%545, %c0_181] : memref<64x256xf32, #tpu.memory_space<vmem>>, vector<8x128xf32>
    %c7_i32_182 = arith.constant 7 : i32
    %547 = arith.subi %c7_i32_182, %c6_i32 : i32
    %c8_i32_183 = arith.constant 8 : i32
    %548 = arith.muli %547, %c8_i32_183 : i32
    %549 = tpu.assume_multiple %548, 8 : i32
    %550 = arith.index_cast %549 : i32 to index
    %c128_184 = arith.constant 128 : index
    %551 = vector.load %arg5[%550, %c128_184] : memref<64x256xf32, #tpu.memory_space<vmem>>, vector<8x128xf32>
    %552 = tpu.concatenate %498, %531 in 1 : vector<8x32xf32>, vector<8x32xf32> -> vector<8x64xf32>
    %553 = arith.truncf %552 : vector<8x64xf32> to vector<8x64xbf16>
    %cst_185 = arith.constant dense<0.000000e+00> : vector<8x256xf32>
    %554 = tpu.matmul %553, %7, %cst_185 {dimension_numbers = #tpu.dot_dimension_numbers<[1], [0], [0], [1], [0, 0, 1, 1], [], []>} : vector<8x64xbf16>, vector<64x256xbf16>, vector<8x256xf32> -> vector<8x256xf32>
    %555 = vector.extract_strided_slice %554 {offsets = [0, 0], sizes = [8, 128], strides = [1, 1]} : vector<8x256xf32> to vector<8x128xf32>
    %556 = arith.addf %546, %555 : vector<8x128xf32>
    %557 = vector.extract_strided_slice %556 {offsets = [0, 0], sizes = [8, 32], strides = [1, 1]} : vector<8x128xf32> to vector<8x32xf32>
    %cst_186 = arith.constant 5.000000e-01 : f32
    %558 = vector.broadcast %cst_186 : f32 to vector<8x32xf32>
    %559 = arith.mulf %558, %557 : vector<8x32xf32>
    %560 = math.tanh %559 : vector<8x32xf32>
    %cst_187 = arith.constant 1.000000e+00 : f32
    %561 = vector.broadcast %cst_187 : f32 to vector<8x32xf32>
    %562 = arith.addf %560, %561 : vector<8x32xf32>
    %cst_188 = arith.constant 5.000000e-01 : f32
    %563 = vector.broadcast %cst_188 : f32 to vector<8x32xf32>
    %564 = arith.mulf %563, %562 : vector<8x32xf32>
    %565 = vector.extract_strided_slice %556 {offsets = [0, 32], sizes = [8, 32], strides = [1, 1]} : vector<8x128xf32> to vector<8x32xf32>
    %cst_189 = arith.constant 5.000000e-01 : f32
    %566 = vector.broadcast %cst_189 : f32 to vector<8x32xf32>
    %567 = arith.mulf %566, %565 : vector<8x32xf32>
    %568 = math.tanh %567 : vector<8x32xf32>
    %cst_190 = arith.constant 1.000000e+00 : f32
    %569 = vector.broadcast %cst_190 : f32 to vector<8x32xf32>
    %570 = arith.addf %568, %569 : vector<8x32xf32>
    %cst_191 = arith.constant 5.000000e-01 : f32
    %571 = vector.broadcast %cst_191 : f32 to vector<8x32xf32>
    %572 = arith.mulf %571, %570 : vector<8x32xf32>
    %573 = vector.extract_strided_slice %556 {offsets = [0, 64], sizes = [8, 32], strides = [1, 1]} : vector<8x128xf32> to vector<8x32xf32>
    %574 = math.tanh %573 : vector<8x32xf32>
    %575 = vector.extract_strided_slice %556 {offsets = [0, 96], sizes = [8, 32], strides = [1, 1]} : vector<8x128xf32> to vector<8x32xf32>
    %cst_192 = arith.constant 5.000000e-01 : f32
    %576 = vector.broadcast %cst_192 : f32 to vector<8x32xf32>
    %577 = arith.mulf %576, %575 : vector<8x32xf32>
    %578 = math.tanh %577 : vector<8x32xf32>
    %cst_193 = arith.constant 1.000000e+00 : f32
    %579 = vector.broadcast %cst_193 : f32 to vector<8x32xf32>
    %580 = arith.addf %578, %579 : vector<8x32xf32>
    %cst_194 = arith.constant 5.000000e-01 : f32
    %581 = vector.broadcast %cst_194 : f32 to vector<8x32xf32>
    %582 = arith.mulf %581, %580 : vector<8x32xf32>
    %583 = arith.mulf %572, %496 : vector<8x32xf32>
    %584 = arith.mulf %564, %574 : vector<8x32xf32>
    %585 = arith.addf %583, %584 : vector<8x32xf32>
    %586 = math.tanh %585 : vector<8x32xf32>
    %587 = arith.mulf %582, %586 : vector<8x32xf32>
    %588 = vector.extract_strided_slice %554 {offsets = [0, 128], sizes = [8, 128], strides = [1, 1]} : vector<8x256xf32> to vector<8x128xf32>
    %589 = arith.addf %551, %588 : vector<8x128xf32>
    %590 = vector.extract_strided_slice %589 {offsets = [0, 0], sizes = [8, 32], strides = [1, 1]} : vector<8x128xf32> to vector<8x32xf32>
    %cst_195 = arith.constant 5.000000e-01 : f32
    %591 = vector.broadcast %cst_195 : f32 to vector<8x32xf32>
    %592 = arith.mulf %591, %590 : vector<8x32xf32>
    %593 = math.tanh %592 : vector<8x32xf32>
    %cst_196 = arith.constant 1.000000e+00 : f32
    %594 = vector.broadcast %cst_196 : f32 to vector<8x32xf32>
    %595 = arith.addf %593, %594 : vector<8x32xf32>
    %cst_197 = arith.constant 5.000000e-01 : f32
    %596 = vector.broadcast %cst_197 : f32 to vector<8x32xf32>
    %597 = arith.mulf %596, %595 : vector<8x32xf32>
    %598 = vector.extract_strided_slice %589 {offsets = [0, 32], sizes = [8, 32], strides = [1, 1]} : vector<8x128xf32> to vector<8x32xf32>
    %cst_198 = arith.constant 5.000000e-01 : f32
    %599 = vector.broadcast %cst_198 : f32 to vector<8x32xf32>
    %600 = arith.mulf %599, %598 : vector<8x32xf32>
    %601 = math.tanh %600 : vector<8x32xf32>
    %cst_199 = arith.constant 1.000000e+00 : f32
    %602 = vector.broadcast %cst_199 : f32 to vector<8x32xf32>
    %603 = arith.addf %601, %602 : vector<8x32xf32>
    %cst_200 = arith.constant 5.000000e-01 : f32
    %604 = vector.broadcast %cst_200 : f32 to vector<8x32xf32>
    %605 = arith.mulf %604, %603 : vector<8x32xf32>
    %606 = vector.extract_strided_slice %589 {offsets = [0, 64], sizes = [8, 32], strides = [1, 1]} : vector<8x128xf32> to vector<8x32xf32>
    %607 = math.tanh %606 : vector<8x32xf32>
    %608 = vector.extract_strided_slice %589 {offsets = [0, 96], sizes = [8, 32], strides = [1, 1]} : vector<8x128xf32> to vector<8x32xf32>
    %cst_201 = arith.constant 5.000000e-01 : f32
    %609 = vector.broadcast %cst_201 : f32 to vector<8x32xf32>
    %610 = arith.mulf %609, %608 : vector<8x32xf32>
    %611 = math.tanh %610 : vector<8x32xf32>
    %cst_202 = arith.constant 1.000000e+00 : f32
    %612 = vector.broadcast %cst_202 : f32 to vector<8x32xf32>
    %613 = arith.addf %611, %612 : vector<8x32xf32>
    %cst_203 = arith.constant 5.000000e-01 : f32
    %614 = vector.broadcast %cst_203 : f32 to vector<8x32xf32>
    %615 = arith.mulf %614, %613 : vector<8x32xf32>
    %616 = arith.mulf %605, %529 : vector<8x32xf32>
    %617 = arith.mulf %597, %607 : vector<8x32xf32>
    %618 = arith.addf %616, %617 : vector<8x32xf32>
    %619 = math.tanh %618 : vector<8x32xf32>
    %620 = arith.mulf %615, %619 : vector<8x32xf32>
    %621 = arith.truncf %587 : vector<8x32xf32> to vector<8x32xbf16>
    %622 = arith.index_cast %c6_i32 : i32 to index
    %c0_204 = arith.constant 0 : index
    %c0_205 = arith.constant 0 : index
    %623 = vector.load %arg4[%622, %c0_204, %c0_205] : memref<8x8x64xbf16, #tpu.memory_space<vmem>>, vector<1x8x32xbf16>
    %624 = vector.shape_cast %623 : vector<1x8x32xbf16> to vector<8x32xbf16>
    %625 = vector.shape_cast %621 : vector<8x32xbf16> to vector<1x8x32xbf16>
    tpu.vector_store %arg4[%622, %c0_204, %c0_205], %625 {strides = array<i32>} : memref<8x8x64xbf16, #tpu.memory_space<vmem>>, vector<1x8x32xbf16>,
    %626 = arith.truncf %620 : vector<8x32xf32> to vector<8x32xbf16>
    %c7_i32_206 = arith.constant 7 : i32
    %627 = arith.subi %c7_i32_206, %c6_i32 : i32
    %628 = arith.index_cast %627 : i32 to index
    %c0_207 = arith.constant 0 : index
    %c32_208 = arith.constant 32 : index
    %629 = vector.load %arg4[%628, %c0_207, %c32_208] : memref<8x8x64xbf16, #tpu.memory_space<vmem>>, vector<1x8x32xbf16>
    %630 = vector.shape_cast %629 : vector<1x8x32xbf16> to vector<8x32xbf16>
    %631 = vector.shape_cast %626 : vector<8x32xbf16> to vector<1x8x32xbf16>
    tpu.vector_store %arg4[%628, %c0_207, %c32_208], %631 {strides = array<i32>} : memref<8x8x64xbf16, #tpu.memory_space<vmem>>, vector<1x8x32xbf16>,
    %c7_i32_209 = arith.constant 7 : i32
    %c8_i32_210 = arith.constant 8 : i32
    %632 = arith.muli %c7_i32_209, %c8_i32_210 : i32
    %633 = tpu.assume_multiple %632, 8 : i32
    %634 = arith.index_cast %633 : i32 to index
    %c0_211 = arith.constant 0 : index
    %635 = vector.load %arg5[%634, %c0_211] : memref<64x256xf32, #tpu.memory_space<vmem>>, vector<8x128xf32>
    %c7_i32_212 = arith.constant 7 : i32
    %636 = arith.subi %c7_i32_212, %c7_i32_209 : i32
    %c8_i32_213 = arith.constant 8 : i32
    %637 = arith.muli %636, %c8_i32_213 : i32
    %638 = tpu.assume_multiple %637, 8 : i32
    %639 = arith.index_cast %638 : i32 to index
    %c128_214 = arith.constant 128 : index
    %640 = vector.load %arg5[%639, %c128_214] : memref<64x256xf32, #tpu.memory_space<vmem>>, vector<8x128xf32>
    %641 = tpu.concatenate %587, %620 in 1 : vector<8x32xf32>, vector<8x32xf32> -> vector<8x64xf32>
    %642 = arith.truncf %641 : vector<8x64xf32> to vector<8x64xbf16>
    %cst_215 = arith.constant dense<0.000000e+00> : vector<8x256xf32>
    %643 = tpu.matmul %642, %7, %cst_215 {dimension_numbers = #tpu.dot_dimension_numbers<[1], [0], [0], [1], [0, 0, 1, 1], [], []>} : vector<8x64xbf16>, vector<64x256xbf16>, vector<8x256xf32> -> vector<8x256xf32>
    %644 = vector.extract_strided_slice %643 {offsets = [0, 0], sizes = [8, 128], strides = [1, 1]} : vector<8x256xf32> to vector<8x128xf32>
    %645 = arith.addf %635, %644 : vector<8x128xf32>
    %646 = vector.extract_strided_slice %645 {offsets = [0, 0], sizes = [8, 32], strides = [1, 1]} : vector<8x128xf32> to vector<8x32xf32>
    %cst_216 = arith.constant 5.000000e-01 : f32
    %647 = vector.broadcast %cst_216 : f32 to vector<8x32xf32>
    %648 = arith.mulf %647, %646 : vector<8x32xf32>
    %649 = math.tanh %648 : vector<8x32xf32>
    %cst_217 = arith.constant 1.000000e+00 : f32
    %650 = vector.broadcast %cst_217 : f32 to vector<8x32xf32>
    %651 = arith.addf %649, %650 : vector<8x32xf32>
    %cst_218 = arith.constant 5.000000e-01 : f32
    %652 = vector.broadcast %cst_218 : f32 to vector<8x32xf32>
    %653 = arith.mulf %652, %651 : vector<8x32xf32>
    %654 = vector.extract_strided_slice %645 {offsets = [0, 32], sizes = [8, 32], strides = [1, 1]} : vector<8x128xf32> to vector<8x32xf32>
    %cst_219 = arith.constant 5.000000e-01 : f32
    %655 = vector.broadcast %cst_219 : f32 to vector<8x32xf32>
    %656 = arith.mulf %655, %654 : vector<8x32xf32>
    %657 = math.tanh %656 : vector<8x32xf32>
    %cst_220 = arith.constant 1.000000e+00 : f32
    %658 = vector.broadcast %cst_220 : f32 to vector<8x32xf32>
    %659 = arith.addf %657, %658 : vector<8x32xf32>
    %cst_221 = arith.constant 5.000000e-01 : f32
    %660 = vector.broadcast %cst_221 : f32 to vector<8x32xf32>
    %661 = arith.mulf %660, %659 : vector<8x32xf32>
    %662 = vector.extract_strided_slice %645 {offsets = [0, 64], sizes = [8, 32], strides = [1, 1]} : vector<8x128xf32> to vector<8x32xf32>
    %663 = math.tanh %662 : vector<8x32xf32>
    %664 = vector.extract_strided_slice %645 {offsets = [0, 96], sizes = [8, 32], strides = [1, 1]} : vector<8x128xf32> to vector<8x32xf32>
    %cst_222 = arith.constant 5.000000e-01 : f32
    %665 = vector.broadcast %cst_222 : f32 to vector<8x32xf32>
    %666 = arith.mulf %665, %664 : vector<8x32xf32>
    %667 = math.tanh %666 : vector<8x32xf32>
    %cst_223 = arith.constant 1.000000e+00 : f32
    %668 = vector.broadcast %cst_223 : f32 to vector<8x32xf32>
    %669 = arith.addf %667, %668 : vector<8x32xf32>
    %cst_224 = arith.constant 5.000000e-01 : f32
    %670 = vector.broadcast %cst_224 : f32 to vector<8x32xf32>
    %671 = arith.mulf %670, %669 : vector<8x32xf32>
    %672 = arith.mulf %661, %585 : vector<8x32xf32>
    %673 = arith.mulf %653, %663 : vector<8x32xf32>
    %674 = arith.addf %672, %673 : vector<8x32xf32>
    %675 = math.tanh %674 : vector<8x32xf32>
    %676 = arith.mulf %671, %675 : vector<8x32xf32>
    %677 = vector.extract_strided_slice %643 {offsets = [0, 128], sizes = [8, 128], strides = [1, 1]} : vector<8x256xf32> to vector<8x128xf32>
    %678 = arith.addf %640, %677 : vector<8x128xf32>
    %679 = vector.extract_strided_slice %678 {offsets = [0, 0], sizes = [8, 32], strides = [1, 1]} : vector<8x128xf32> to vector<8x32xf32>
    %cst_225 = arith.constant 5.000000e-01 : f32
    %680 = vector.broadcast %cst_225 : f32 to vector<8x32xf32>
    %681 = arith.mulf %680, %679 : vector<8x32xf32>
    %682 = math.tanh %681 : vector<8x32xf32>
    %cst_226 = arith.constant 1.000000e+00 : f32
    %683 = vector.broadcast %cst_226 : f32 to vector<8x32xf32>
    %684 = arith.addf %682, %683 : vector<8x32xf32>
    %cst_227 = arith.constant 5.000000e-01 : f32
    %685 = vector.broadcast %cst_227 : f32 to vector<8x32xf32>
    %686 = arith.mulf %685, %684 : vector<8x32xf32>
    %687 = vector.extract_strided_slice %678 {offsets = [0, 32], sizes = [8, 32], strides = [1, 1]} : vector<8x128xf32> to vector<8x32xf32>
    %cst_228 = arith.constant 5.000000e-01 : f32
    %688 = vector.broadcast %cst_228 : f32 to vector<8x32xf32>
    %689 = arith.mulf %688, %687 : vector<8x32xf32>
    %690 = math.tanh %689 : vector<8x32xf32>
    %cst_229 = arith.constant 1.000000e+00 : f32
    %691 = vector.broadcast %cst_229 : f32 to vector<8x32xf32>
    %692 = arith.addf %690, %691 : vector<8x32xf32>
    %cst_230 = arith.constant 5.000000e-01 : f32
    %693 = vector.broadcast %cst_230 : f32 to vector<8x32xf32>
    %694 = arith.mulf %693, %692 : vector<8x32xf32>
    %695 = vector.extract_strided_slice %678 {offsets = [0, 64], sizes = [8, 32], strides = [1, 1]} : vector<8x128xf32> to vector<8x32xf32>
    %696 = math.tanh %695 : vector<8x32xf32>
    %697 = vector.extract_strided_slice %678 {offsets = [0, 96], sizes = [8, 32], strides = [1, 1]} : vector<8x128xf32> to vector<8x32xf32>
    %cst_231 = arith.constant 5.000000e-01 : f32
    %698 = vector.broadcast %cst_231 : f32 to vector<8x32xf32>
    %699 = arith.mulf %698, %697 : vector<8x32xf32>
    %700 = math.tanh %699 : vector<8x32xf32>
    %cst_232 = arith.constant 1.000000e+00 : f32
    %701 = vector.broadcast %cst_232 : f32 to vector<8x32xf32>
    %702 = arith.addf %700, %701 : vector<8x32xf32>
    %cst_233 = arith.constant 5.000000e-01 : f32
    %703 = vector.broadcast %cst_233 : f32 to vector<8x32xf32>
    %704 = arith.mulf %703, %702 : vector<8x32xf32>
    %705 = arith.mulf %694, %618 : vector<8x32xf32>
    %706 = arith.mulf %686, %696 : vector<8x32xf32>
    %707 = arith.addf %705, %706 : vector<8x32xf32>
    %708 = math.tanh %707 : vector<8x32xf32>
    %709 = arith.mulf %704, %708 : vector<8x32xf32>
    %710 = arith.truncf %676 : vector<8x32xf32> to vector<8x32xbf16>
    %711 = arith.index_cast %c7_i32_209 : i32 to index
    %c0_234 = arith.constant 0 : index
    %c0_235 = arith.constant 0 : index
    %712 = vector.load %arg4[%711, %c0_234, %c0_235] : memref<8x8x64xbf16, #tpu.memory_space<vmem>>, vector<1x8x32xbf16>
    %713 = vector.shape_cast %712 : vector<1x8x32xbf16> to vector<8x32xbf16>
    %714 = vector.shape_cast %710 : vector<8x32xbf16> to vector<1x8x32xbf16>
    tpu.vector_store %arg4[%711, %c0_234, %c0_235], %714 {strides = array<i32>} : memref<8x8x64xbf16, #tpu.memory_space<vmem>>, vector<1x8x32xbf16>,
    %715 = arith.truncf %709 : vector<8x32xf32> to vector<8x32xbf16>
    %c7_i32_236 = arith.constant 7 : i32
    %716 = arith.subi %c7_i32_236, %c7_i32_209 : i32
    %717 = arith.index_cast %716 : i32 to index
    %c0_237 = arith.constant 0 : index
    %c32_238 = arith.constant 32 : index
    %718 = vector.load %arg4[%717, %c0_237, %c32_238] : memref<8x8x64xbf16, #tpu.memory_space<vmem>>, vector<1x8x32xbf16>
    %719 = vector.shape_cast %718 : vector<1x8x32xbf16> to vector<8x32xbf16>
    %720 = vector.shape_cast %715 : vector<8x32xbf16> to vector<1x8x32xbf16>
    tpu.vector_store %arg4[%717, %c0_237, %c32_238], %720 {strides = array<i32>} : memref<8x8x64xbf16, #tpu.memory_space<vmem>>, vector<1x8x32xbf16>,
    %c8_i32_239 = arith.constant 8 : i32
    return
  }
}

module attributes {stable_mosaic.version = 11 : i64} {
  func.func @_bilstm_head_kernel(%arg0: memref<64x64xbf16, #tpu.memory_space<vmem>>, %arg1: memref<64x256xbf16, #tpu.memory_space<vmem>>, %arg2: memref<1x256xf32, #tpu.memory_space<vmem>>, %arg3: memref<64x256xbf16, #tpu.memory_space<vmem>>, %arg4: memref<64x4xbf16, #tpu.memory_space<vmem>>, %arg5: memref<1x4xf32, #tpu.memory_space<vmem>>, %arg6: memref<8x8x64xf32, #tpu.memory_space<vmem>>, %arg7: memref<8x4xf32, #tpu.memory_space<vmem>>, %arg8: memref<64x256xf32, #tpu.memory_space<vmem>>) attributes {dimension_semantics = [], scalar_prefetch = 0 : i64, scratch_operands = 1 : i64, tpu.core_type = #tpu.core_type<tc>} {
    %c0 = arith.constant 0 : index
    %c0_0 = arith.constant 0 : index
    %0 = vector.load %arg0[%c0, %c0_0] : memref<64x64xbf16, #tpu.memory_space<vmem>>, vector<64x64xbf16>
    %c0_1 = arith.constant 0 : index
    %c0_2 = arith.constant 0 : index
    %1 = vector.load %arg1[%c0_1, %c0_2] : memref<64x256xbf16, #tpu.memory_space<vmem>>, vector<64x256xbf16>
    %cst = arith.constant dense<0.000000e+00> : vector<64x256xf32>
    %2 = tpu.matmul %0, %1, %cst {dimension_numbers = #tpu.dot_dimension_numbers<[1], [0], [0], [1], [0, 0, 1, 1], [], []>} : vector<64x64xbf16>, vector<64x256xbf16>, vector<64x256xf32> -> vector<64x256xf32>
    %c0_3 = arith.constant 0 : index
    %c0_4 = arith.constant 0 : index
    %3 = vector.load %arg2[%c0_3, %c0_4] : memref<1x256xf32, #tpu.memory_space<vmem>>, vector<1x256xf32>
    %4 = vector.broadcast %3 : vector<1x256xf32> to vector<64x256xf32>
    %5 = arith.addf %2, %4 : vector<64x256xf32>
    %c0_5 = arith.constant 0 : index
    %c0_6 = arith.constant 0 : index
    %6 = vector.load %arg8[%c0_5, %c0_6] : memref<64x256xf32, #tpu.memory_space<vmem>>, vector<64x256xf32>
    tpu.vector_store %arg8[%c0_5, %c0_6], %5 {strides = array<i32>} : memref<64x256xf32, #tpu.memory_space<vmem>>, vector<64x256xf32>,
    %c0_7 = arith.constant 0 : index
    %c0_8 = arith.constant 0 : index
    %7 = vector.load %arg3[%c0_7, %c0_8] : memref<64x256xbf16, #tpu.memory_space<vmem>>, vector<64x256xbf16>
    %cst_9 = arith.constant 0.000000e+00 : f32
    %8 = vector.broadcast %cst_9 : f32 to vector<8x32xf32>
    %c0_i32 = arith.constant 0 : i32
    %c8_i32 = arith.constant 8 : i32
    %9 = arith.muli %c0_i32, %c8_i32 : i32
    %10 = tpu.assume_multiple %9, 8 : i32
    %11 = arith.index_cast %10 : i32 to index
    %c0_10 = arith.constant 0 : index
    %12 = vector.load %arg8[%11, %c0_10] : memref<64x256xf32, #tpu.memory_space<vmem>>, vector<8x128xf32>
    %c7_i32 = arith.constant 7 : i32
    %13 = arith.subi %c7_i32, %c0_i32 : i32
    %c8_i32_11 = arith.constant 8 : i32
    %14 = arith.muli %13, %c8_i32_11 : i32
    %15 = tpu.assume_multiple %14, 8 : i32
    %16 = arith.index_cast %15 : i32 to index
    %c128 = arith.constant 128 : index
    %17 = vector.load %arg8[%16, %c128] : memref<64x256xf32, #tpu.memory_space<vmem>>, vector<8x128xf32>
    %18 = tpu.concatenate %8, %8 in 1 : vector<8x32xf32>, vector<8x32xf32> -> vector<8x64xf32>
    %19 = arith.truncf %18 : vector<8x64xf32> to vector<8x64xbf16>
    %cst_12 = arith.constant dense<0.000000e+00> : vector<8x256xf32>
    %20 = tpu.matmul %19, %7, %cst_12 {dimension_numbers = #tpu.dot_dimension_numbers<[1], [0], [0], [1], [0, 0, 1, 1], [], []>} : vector<8x64xbf16>, vector<64x256xbf16>, vector<8x256xf32> -> vector<8x256xf32>
    %21 = vector.extract_strided_slice %20 {offsets = [0, 0], sizes = [8, 128], strides = [1, 1]} : vector<8x256xf32> to vector<8x128xf32>
    %22 = arith.addf %12, %21 : vector<8x128xf32>
    %23 = vector.extract_strided_slice %22 {offsets = [0, 0], sizes = [8, 32], strides = [1, 1]} : vector<8x128xf32> to vector<8x32xf32>
    %cst_13 = arith.constant 5.000000e-01 : f32
    %24 = vector.broadcast %cst_13 : f32 to vector<8x32xf32>
    %25 = arith.mulf %24, %23 : vector<8x32xf32>
    %26 = math.tanh %25 : vector<8x32xf32>
    %cst_14 = arith.constant 1.000000e+00 : f32
    %27 = vector.broadcast %cst_14 : f32 to vector<8x32xf32>
    %28 = arith.addf %26, %27 : vector<8x32xf32>
    %cst_15 = arith.constant 5.000000e-01 : f32
    %29 = vector.broadcast %cst_15 : f32 to vector<8x32xf32>
    %30 = arith.mulf %29, %28 : vector<8x32xf32>
    %31 = vector.extract_strided_slice %22 {offsets = [0, 32], sizes = [8, 32], strides = [1, 1]} : vector<8x128xf32> to vector<8x32xf32>
    %cst_16 = arith.constant 5.000000e-01 : f32
    %32 = vector.broadcast %cst_16 : f32 to vector<8x32xf32>
    %33 = arith.mulf %32, %31 : vector<8x32xf32>
    %34 = math.tanh %33 : vector<8x32xf32>
    %cst_17 = arith.constant 1.000000e+00 : f32
    %35 = vector.broadcast %cst_17 : f32 to vector<8x32xf32>
    %36 = arith.addf %34, %35 : vector<8x32xf32>
    %cst_18 = arith.constant 5.000000e-01 : f32
    %37 = vector.broadcast %cst_18 : f32 to vector<8x32xf32>
    %38 = arith.mulf %37, %36 : vector<8x32xf32>
    %39 = vector.extract_strided_slice %22 {offsets = [0, 64], sizes = [8, 32], strides = [1, 1]} : vector<8x128xf32> to vector<8x32xf32>
    %40 = math.tanh %39 : vector<8x32xf32>
    %41 = vector.extract_strided_slice %22 {offsets = [0, 96], sizes = [8, 32], strides = [1, 1]} : vector<8x128xf32> to vector<8x32xf32>
    %cst_19 = arith.constant 5.000000e-01 : f32
    %42 = vector.broadcast %cst_19 : f32 to vector<8x32xf32>
    %43 = arith.mulf %42, %41 : vector<8x32xf32>
    %44 = math.tanh %43 : vector<8x32xf32>
    %cst_20 = arith.constant 1.000000e+00 : f32
    %45 = vector.broadcast %cst_20 : f32 to vector<8x32xf32>
    %46 = arith.addf %44, %45 : vector<8x32xf32>
    %cst_21 = arith.constant 5.000000e-01 : f32
    %47 = vector.broadcast %cst_21 : f32 to vector<8x32xf32>
    %48 = arith.mulf %47, %46 : vector<8x32xf32>
    %49 = arith.mulf %38, %8 : vector<8x32xf32>
    %50 = arith.mulf %30, %40 : vector<8x32xf32>
    %51 = arith.addf %49, %50 : vector<8x32xf32>
    %52 = math.tanh %51 : vector<8x32xf32>
    %53 = arith.mulf %48, %52 : vector<8x32xf32>
    %54 = vector.extract_strided_slice %20 {offsets = [0, 128], sizes = [8, 128], strides = [1, 1]} : vector<8x256xf32> to vector<8x128xf32>
    %55 = arith.addf %17, %54 : vector<8x128xf32>
    %56 = vector.extract_strided_slice %55 {offsets = [0, 0], sizes = [8, 32], strides = [1, 1]} : vector<8x128xf32> to vector<8x32xf32>
    %cst_22 = arith.constant 5.000000e-01 : f32
    %57 = vector.broadcast %cst_22 : f32 to vector<8x32xf32>
    %58 = arith.mulf %57, %56 : vector<8x32xf32>
    %59 = math.tanh %58 : vector<8x32xf32>
    %cst_23 = arith.constant 1.000000e+00 : f32
    %60 = vector.broadcast %cst_23 : f32 to vector<8x32xf32>
    %61 = arith.addf %59, %60 : vector<8x32xf32>
    %cst_24 = arith.constant 5.000000e-01 : f32
    %62 = vector.broadcast %cst_24 : f32 to vector<8x32xf32>
    %63 = arith.mulf %62, %61 : vector<8x32xf32>
    %64 = vector.extract_strided_slice %55 {offsets = [0, 32], sizes = [8, 32], strides = [1, 1]} : vector<8x128xf32> to vector<8x32xf32>
    %cst_25 = arith.constant 5.000000e-01 : f32
    %65 = vector.broadcast %cst_25 : f32 to vector<8x32xf32>
    %66 = arith.mulf %65, %64 : vector<8x32xf32>
    %67 = math.tanh %66 : vector<8x32xf32>
    %cst_26 = arith.constant 1.000000e+00 : f32
    %68 = vector.broadcast %cst_26 : f32 to vector<8x32xf32>
    %69 = arith.addf %67, %68 : vector<8x32xf32>
    %cst_27 = arith.constant 5.000000e-01 : f32
    %70 = vector.broadcast %cst_27 : f32 to vector<8x32xf32>
    %71 = arith.mulf %70, %69 : vector<8x32xf32>
    %72 = vector.extract_strided_slice %55 {offsets = [0, 64], sizes = [8, 32], strides = [1, 1]} : vector<8x128xf32> to vector<8x32xf32>
    %73 = math.tanh %72 : vector<8x32xf32>
    %74 = vector.extract_strided_slice %55 {offsets = [0, 96], sizes = [8, 32], strides = [1, 1]} : vector<8x128xf32> to vector<8x32xf32>
    %cst_28 = arith.constant 5.000000e-01 : f32
    %75 = vector.broadcast %cst_28 : f32 to vector<8x32xf32>
    %76 = arith.mulf %75, %74 : vector<8x32xf32>
    %77 = math.tanh %76 : vector<8x32xf32>
    %cst_29 = arith.constant 1.000000e+00 : f32
    %78 = vector.broadcast %cst_29 : f32 to vector<8x32xf32>
    %79 = arith.addf %77, %78 : vector<8x32xf32>
    %cst_30 = arith.constant 5.000000e-01 : f32
    %80 = vector.broadcast %cst_30 : f32 to vector<8x32xf32>
    %81 = arith.mulf %80, %79 : vector<8x32xf32>
    %82 = arith.mulf %71, %8 : vector<8x32xf32>
    %83 = arith.mulf %63, %73 : vector<8x32xf32>
    %84 = arith.addf %82, %83 : vector<8x32xf32>
    %85 = math.tanh %84 : vector<8x32xf32>
    %86 = arith.mulf %81, %85 : vector<8x32xf32>
    %87 = arith.index_cast %c0_i32 : i32 to index
    %c0_31 = arith.constant 0 : index
    %c0_32 = arith.constant 0 : index
    %88 = vector.load %arg6[%87, %c0_31, %c0_32] : memref<8x8x64xf32, #tpu.memory_space<vmem>>, vector<1x8x32xf32>
    %89 = vector.shape_cast %88 : vector<1x8x32xf32> to vector<8x32xf32>
    %90 = vector.shape_cast %53 : vector<8x32xf32> to vector<1x8x32xf32>
    tpu.vector_store %arg6[%87, %c0_31, %c0_32], %90 {strides = array<i32>} : memref<8x8x64xf32, #tpu.memory_space<vmem>>, vector<1x8x32xf32>,
    %c7_i32_33 = arith.constant 7 : i32
    %91 = arith.subi %c7_i32_33, %c0_i32 : i32
    %92 = arith.index_cast %91 : i32 to index
    %c0_34 = arith.constant 0 : index
    %c32 = arith.constant 32 : index
    %93 = vector.load %arg6[%92, %c0_34, %c32] : memref<8x8x64xf32, #tpu.memory_space<vmem>>, vector<1x8x32xf32>
    %94 = vector.shape_cast %93 : vector<1x8x32xf32> to vector<8x32xf32>
    %95 = vector.shape_cast %86 : vector<8x32xf32> to vector<1x8x32xf32>
    tpu.vector_store %arg6[%92, %c0_34, %c32], %95 {strides = array<i32>} : memref<8x8x64xf32, #tpu.memory_space<vmem>>, vector<1x8x32xf32>,
    %c1_i32 = arith.constant 1 : i32
    %c8_i32_35 = arith.constant 8 : i32
    %96 = arith.muli %c1_i32, %c8_i32_35 : i32
    %97 = tpu.assume_multiple %96, 8 : i32
    %98 = arith.index_cast %97 : i32 to index
    %c0_36 = arith.constant 0 : index
    %99 = vector.load %arg8[%98, %c0_36] : memref<64x256xf32, #tpu.memory_space<vmem>>, vector<8x128xf32>
    %c7_i32_37 = arith.constant 7 : i32
    %100 = arith.subi %c7_i32_37, %c1_i32 : i32
    %c8_i32_38 = arith.constant 8 : i32
    %101 = arith.muli %100, %c8_i32_38 : i32
    %102 = tpu.assume_multiple %101, 8 : i32
    %103 = arith.index_cast %102 : i32 to index
    %c128_39 = arith.constant 128 : index
    %104 = vector.load %arg8[%103, %c128_39] : memref<64x256xf32, #tpu.memory_space<vmem>>, vector<8x128xf32>
    %105 = tpu.concatenate %53, %86 in 1 : vector<8x32xf32>, vector<8x32xf32> -> vector<8x64xf32>
    %106 = arith.truncf %105 : vector<8x64xf32> to vector<8x64xbf16>
    %cst_40 = arith.constant dense<0.000000e+00> : vector<8x256xf32>
    %107 = tpu.matmul %106, %7, %cst_40 {dimension_numbers = #tpu.dot_dimension_numbers<[1], [0], [0], [1], [0, 0, 1, 1], [], []>} : vector<8x64xbf16>, vector<64x256xbf16>, vector<8x256xf32> -> vector<8x256xf32>
    %108 = vector.extract_strided_slice %107 {offsets = [0, 0], sizes = [8, 128], strides = [1, 1]} : vector<8x256xf32> to vector<8x128xf32>
    %109 = arith.addf %99, %108 : vector<8x128xf32>
    %110 = vector.extract_strided_slice %109 {offsets = [0, 0], sizes = [8, 32], strides = [1, 1]} : vector<8x128xf32> to vector<8x32xf32>
    %cst_41 = arith.constant 5.000000e-01 : f32
    %111 = vector.broadcast %cst_41 : f32 to vector<8x32xf32>
    %112 = arith.mulf %111, %110 : vector<8x32xf32>
    %113 = math.tanh %112 : vector<8x32xf32>
    %cst_42 = arith.constant 1.000000e+00 : f32
    %114 = vector.broadcast %cst_42 : f32 to vector<8x32xf32>
    %115 = arith.addf %113, %114 : vector<8x32xf32>
    %cst_43 = arith.constant 5.000000e-01 : f32
    %116 = vector.broadcast %cst_43 : f32 to vector<8x32xf32>
    %117 = arith.mulf %116, %115 : vector<8x32xf32>
    %118 = vector.extract_strided_slice %109 {offsets = [0, 32], sizes = [8, 32], strides = [1, 1]} : vector<8x128xf32> to vector<8x32xf32>
    %cst_44 = arith.constant 5.000000e-01 : f32
    %119 = vector.broadcast %cst_44 : f32 to vector<8x32xf32>
    %120 = arith.mulf %119, %118 : vector<8x32xf32>
    %121 = math.tanh %120 : vector<8x32xf32>
    %cst_45 = arith.constant 1.000000e+00 : f32
    %122 = vector.broadcast %cst_45 : f32 to vector<8x32xf32>
    %123 = arith.addf %121, %122 : vector<8x32xf32>
    %cst_46 = arith.constant 5.000000e-01 : f32
    %124 = vector.broadcast %cst_46 : f32 to vector<8x32xf32>
    %125 = arith.mulf %124, %123 : vector<8x32xf32>
    %126 = vector.extract_strided_slice %109 {offsets = [0, 64], sizes = [8, 32], strides = [1, 1]} : vector<8x128xf32> to vector<8x32xf32>
    %127 = math.tanh %126 : vector<8x32xf32>
    %128 = vector.extract_strided_slice %109 {offsets = [0, 96], sizes = [8, 32], strides = [1, 1]} : vector<8x128xf32> to vector<8x32xf32>
    %cst_47 = arith.constant 5.000000e-01 : f32
    %129 = vector.broadcast %cst_47 : f32 to vector<8x32xf32>
    %130 = arith.mulf %129, %128 : vector<8x32xf32>
    %131 = math.tanh %130 : vector<8x32xf32>
    %cst_48 = arith.constant 1.000000e+00 : f32
    %132 = vector.broadcast %cst_48 : f32 to vector<8x32xf32>
    %133 = arith.addf %131, %132 : vector<8x32xf32>
    %cst_49 = arith.constant 5.000000e-01 : f32
    %134 = vector.broadcast %cst_49 : f32 to vector<8x32xf32>
    %135 = arith.mulf %134, %133 : vector<8x32xf32>
    %136 = arith.mulf %125, %51 : vector<8x32xf32>
    %137 = arith.mulf %117, %127 : vector<8x32xf32>
    %138 = arith.addf %136, %137 : vector<8x32xf32>
    %139 = math.tanh %138 : vector<8x32xf32>
    %140 = arith.mulf %135, %139 : vector<8x32xf32>
    %141 = vector.extract_strided_slice %107 {offsets = [0, 128], sizes = [8, 128], strides = [1, 1]} : vector<8x256xf32> to vector<8x128xf32>
    %142 = arith.addf %104, %141 : vector<8x128xf32>
    %143 = vector.extract_strided_slice %142 {offsets = [0, 0], sizes = [8, 32], strides = [1, 1]} : vector<8x128xf32> to vector<8x32xf32>
    %cst_50 = arith.constant 5.000000e-01 : f32
    %144 = vector.broadcast %cst_50 : f32 to vector<8x32xf32>
    %145 = arith.mulf %144, %143 : vector<8x32xf32>
    %146 = math.tanh %145 : vector<8x32xf32>
    %cst_51 = arith.constant 1.000000e+00 : f32
    %147 = vector.broadcast %cst_51 : f32 to vector<8x32xf32>
    %148 = arith.addf %146, %147 : vector<8x32xf32>
    %cst_52 = arith.constant 5.000000e-01 : f32
    %149 = vector.broadcast %cst_52 : f32 to vector<8x32xf32>
    %150 = arith.mulf %149, %148 : vector<8x32xf32>
    %151 = vector.extract_strided_slice %142 {offsets = [0, 32], sizes = [8, 32], strides = [1, 1]} : vector<8x128xf32> to vector<8x32xf32>
    %cst_53 = arith.constant 5.000000e-01 : f32
    %152 = vector.broadcast %cst_53 : f32 to vector<8x32xf32>
    %153 = arith.mulf %152, %151 : vector<8x32xf32>
    %154 = math.tanh %153 : vector<8x32xf32>
    %cst_54 = arith.constant 1.000000e+00 : f32
    %155 = vector.broadcast %cst_54 : f32 to vector<8x32xf32>
    %156 = arith.addf %154, %155 : vector<8x32xf32>
    %cst_55 = arith.constant 5.000000e-01 : f32
    %157 = vector.broadcast %cst_55 : f32 to vector<8x32xf32>
    %158 = arith.mulf %157, %156 : vector<8x32xf32>
    %159 = vector.extract_strided_slice %142 {offsets = [0, 64], sizes = [8, 32], strides = [1, 1]} : vector<8x128xf32> to vector<8x32xf32>
    %160 = math.tanh %159 : vector<8x32xf32>
    %161 = vector.extract_strided_slice %142 {offsets = [0, 96], sizes = [8, 32], strides = [1, 1]} : vector<8x128xf32> to vector<8x32xf32>
    %cst_56 = arith.constant 5.000000e-01 : f32
    %162 = vector.broadcast %cst_56 : f32 to vector<8x32xf32>
    %163 = arith.mulf %162, %161 : vector<8x32xf32>
    %164 = math.tanh %163 : vector<8x32xf32>
    %cst_57 = arith.constant 1.000000e+00 : f32
    %165 = vector.broadcast %cst_57 : f32 to vector<8x32xf32>
    %166 = arith.addf %164, %165 : vector<8x32xf32>
    %cst_58 = arith.constant 5.000000e-01 : f32
    %167 = vector.broadcast %cst_58 : f32 to vector<8x32xf32>
    %168 = arith.mulf %167, %166 : vector<8x32xf32>
    %169 = arith.mulf %158, %84 : vector<8x32xf32>
    %170 = arith.mulf %150, %160 : vector<8x32xf32>
    %171 = arith.addf %169, %170 : vector<8x32xf32>
    %172 = math.tanh %171 : vector<8x32xf32>
    %173 = arith.mulf %168, %172 : vector<8x32xf32>
    %174 = arith.index_cast %c1_i32 : i32 to index
    %c0_59 = arith.constant 0 : index
    %c0_60 = arith.constant 0 : index
    %175 = vector.load %arg6[%174, %c0_59, %c0_60] : memref<8x8x64xf32, #tpu.memory_space<vmem>>, vector<1x8x32xf32>
    %176 = vector.shape_cast %175 : vector<1x8x32xf32> to vector<8x32xf32>
    %177 = vector.shape_cast %140 : vector<8x32xf32> to vector<1x8x32xf32>
    tpu.vector_store %arg6[%174, %c0_59, %c0_60], %177 {strides = array<i32>} : memref<8x8x64xf32, #tpu.memory_space<vmem>>, vector<1x8x32xf32>,
    %c7_i32_61 = arith.constant 7 : i32
    %178 = arith.subi %c7_i32_61, %c1_i32 : i32
    %179 = arith.index_cast %178 : i32 to index
    %c0_62 = arith.constant 0 : index
    %c32_63 = arith.constant 32 : index
    %180 = vector.load %arg6[%179, %c0_62, %c32_63] : memref<8x8x64xf32, #tpu.memory_space<vmem>>, vector<1x8x32xf32>
    %181 = vector.shape_cast %180 : vector<1x8x32xf32> to vector<8x32xf32>
    %182 = vector.shape_cast %173 : vector<8x32xf32> to vector<1x8x32xf32>
    tpu.vector_store %arg6[%179, %c0_62, %c32_63], %182 {strides = array<i32>} : memref<8x8x64xf32, #tpu.memory_space<vmem>>, vector<1x8x32xf32>,
    %c2_i32 = arith.constant 2 : i32
    %c8_i32_64 = arith.constant 8 : i32
    %183 = arith.muli %c2_i32, %c8_i32_64 : i32
    %184 = tpu.assume_multiple %183, 8 : i32
    %185 = arith.index_cast %184 : i32 to index
    %c0_65 = arith.constant 0 : index
    %186 = vector.load %arg8[%185, %c0_65] : memref<64x256xf32, #tpu.memory_space<vmem>>, vector<8x128xf32>
    %c7_i32_66 = arith.constant 7 : i32
    %187 = arith.subi %c7_i32_66, %c2_i32 : i32
    %c8_i32_67 = arith.constant 8 : i32
    %188 = arith.muli %187, %c8_i32_67 : i32
    %189 = tpu.assume_multiple %188, 8 : i32
    %190 = arith.index_cast %189 : i32 to index
    %c128_68 = arith.constant 128 : index
    %191 = vector.load %arg8[%190, %c128_68] : memref<64x256xf32, #tpu.memory_space<vmem>>, vector<8x128xf32>
    %192 = tpu.concatenate %140, %173 in 1 : vector<8x32xf32>, vector<8x32xf32> -> vector<8x64xf32>
    %193 = arith.truncf %192 : vector<8x64xf32> to vector<8x64xbf16>
    %cst_69 = arith.constant dense<0.000000e+00> : vector<8x256xf32>
    %194 = tpu.matmul %193, %7, %cst_69 {dimension_numbers = #tpu.dot_dimension_numbers<[1], [0], [0], [1], [0, 0, 1, 1], [], []>} : vector<8x64xbf16>, vector<64x256xbf16>, vector<8x256xf32> -> vector<8x256xf32>
    %195 = vector.extract_strided_slice %194 {offsets = [0, 0], sizes = [8, 128], strides = [1, 1]} : vector<8x256xf32> to vector<8x128xf32>
    %196 = arith.addf %186, %195 : vector<8x128xf32>
    %197 = vector.extract_strided_slice %196 {offsets = [0, 0], sizes = [8, 32], strides = [1, 1]} : vector<8x128xf32> to vector<8x32xf32>
    %cst_70 = arith.constant 5.000000e-01 : f32
    %198 = vector.broadcast %cst_70 : f32 to vector<8x32xf32>
    %199 = arith.mulf %198, %197 : vector<8x32xf32>
    %200 = math.tanh %199 : vector<8x32xf32>
    %cst_71 = arith.constant 1.000000e+00 : f32
    %201 = vector.broadcast %cst_71 : f32 to vector<8x32xf32>
    %202 = arith.addf %200, %201 : vector<8x32xf32>
    %cst_72 = arith.constant 5.000000e-01 : f32
    %203 = vector.broadcast %cst_72 : f32 to vector<8x32xf32>
    %204 = arith.mulf %203, %202 : vector<8x32xf32>
    %205 = vector.extract_strided_slice %196 {offsets = [0, 32], sizes = [8, 32], strides = [1, 1]} : vector<8x128xf32> to vector<8x32xf32>
    %cst_73 = arith.constant 5.000000e-01 : f32
    %206 = vector.broadcast %cst_73 : f32 to vector<8x32xf32>
    %207 = arith.mulf %206, %205 : vector<8x32xf32>
    %208 = math.tanh %207 : vector<8x32xf32>
    %cst_74 = arith.constant 1.000000e+00 : f32
    %209 = vector.broadcast %cst_74 : f32 to vector<8x32xf32>
    %210 = arith.addf %208, %209 : vector<8x32xf32>
    %cst_75 = arith.constant 5.000000e-01 : f32
    %211 = vector.broadcast %cst_75 : f32 to vector<8x32xf32>
    %212 = arith.mulf %211, %210 : vector<8x32xf32>
    %213 = vector.extract_strided_slice %196 {offsets = [0, 64], sizes = [8, 32], strides = [1, 1]} : vector<8x128xf32> to vector<8x32xf32>
    %214 = math.tanh %213 : vector<8x32xf32>
    %215 = vector.extract_strided_slice %196 {offsets = [0, 96], sizes = [8, 32], strides = [1, 1]} : vector<8x128xf32> to vector<8x32xf32>
    %cst_76 = arith.constant 5.000000e-01 : f32
    %216 = vector.broadcast %cst_76 : f32 to vector<8x32xf32>
    %217 = arith.mulf %216, %215 : vector<8x32xf32>
    %218 = math.tanh %217 : vector<8x32xf32>
    %cst_77 = arith.constant 1.000000e+00 : f32
    %219 = vector.broadcast %cst_77 : f32 to vector<8x32xf32>
    %220 = arith.addf %218, %219 : vector<8x32xf32>
    %cst_78 = arith.constant 5.000000e-01 : f32
    %221 = vector.broadcast %cst_78 : f32 to vector<8x32xf32>
    %222 = arith.mulf %221, %220 : vector<8x32xf32>
    %223 = arith.mulf %212, %138 : vector<8x32xf32>
    %224 = arith.mulf %204, %214 : vector<8x32xf32>
    %225 = arith.addf %223, %224 : vector<8x32xf32>
    %226 = math.tanh %225 : vector<8x32xf32>
    %227 = arith.mulf %222, %226 : vector<8x32xf32>
    %228 = vector.extract_strided_slice %194 {offsets = [0, 128], sizes = [8, 128], strides = [1, 1]} : vector<8x256xf32> to vector<8x128xf32>
    %229 = arith.addf %191, %228 : vector<8x128xf32>
    %230 = vector.extract_strided_slice %229 {offsets = [0, 0], sizes = [8, 32], strides = [1, 1]} : vector<8x128xf32> to vector<8x32xf32>
    %cst_79 = arith.constant 5.000000e-01 : f32
    %231 = vector.broadcast %cst_79 : f32 to vector<8x32xf32>
    %232 = arith.mulf %231, %230 : vector<8x32xf32>
    %233 = math.tanh %232 : vector<8x32xf32>
    %cst_80 = arith.constant 1.000000e+00 : f32
    %234 = vector.broadcast %cst_80 : f32 to vector<8x32xf32>
    %235 = arith.addf %233, %234 : vector<8x32xf32>
    %cst_81 = arith.constant 5.000000e-01 : f32
    %236 = vector.broadcast %cst_81 : f32 to vector<8x32xf32>
    %237 = arith.mulf %236, %235 : vector<8x32xf32>
    %238 = vector.extract_strided_slice %229 {offsets = [0, 32], sizes = [8, 32], strides = [1, 1]} : vector<8x128xf32> to vector<8x32xf32>
    %cst_82 = arith.constant 5.000000e-01 : f32
    %239 = vector.broadcast %cst_82 : f32 to vector<8x32xf32>
    %240 = arith.mulf %239, %238 : vector<8x32xf32>
    %241 = math.tanh %240 : vector<8x32xf32>
    %cst_83 = arith.constant 1.000000e+00 : f32
    %242 = vector.broadcast %cst_83 : f32 to vector<8x32xf32>
    %243 = arith.addf %241, %242 : vector<8x32xf32>
    %cst_84 = arith.constant 5.000000e-01 : f32
    %244 = vector.broadcast %cst_84 : f32 to vector<8x32xf32>
    %245 = arith.mulf %244, %243 : vector<8x32xf32>
    %246 = vector.extract_strided_slice %229 {offsets = [0, 64], sizes = [8, 32], strides = [1, 1]} : vector<8x128xf32> to vector<8x32xf32>
    %247 = math.tanh %246 : vector<8x32xf32>
    %248 = vector.extract_strided_slice %229 {offsets = [0, 96], sizes = [8, 32], strides = [1, 1]} : vector<8x128xf32> to vector<8x32xf32>
    %cst_85 = arith.constant 5.000000e-01 : f32
    %249 = vector.broadcast %cst_85 : f32 to vector<8x32xf32>
    %250 = arith.mulf %249, %248 : vector<8x32xf32>
    %251 = math.tanh %250 : vector<8x32xf32>
    %cst_86 = arith.constant 1.000000e+00 : f32
    %252 = vector.broadcast %cst_86 : f32 to vector<8x32xf32>
    %253 = arith.addf %251, %252 : vector<8x32xf32>
    %cst_87 = arith.constant 5.000000e-01 : f32
    %254 = vector.broadcast %cst_87 : f32 to vector<8x32xf32>
    %255 = arith.mulf %254, %253 : vector<8x32xf32>
    %256 = arith.mulf %245, %171 : vector<8x32xf32>
    %257 = arith.mulf %237, %247 : vector<8x32xf32>
    %258 = arith.addf %256, %257 : vector<8x32xf32>
    %259 = math.tanh %258 : vector<8x32xf32>
    %260 = arith.mulf %255, %259 : vector<8x32xf32>
    %261 = arith.index_cast %c2_i32 : i32 to index
    %c0_88 = arith.constant 0 : index
    %c0_89 = arith.constant 0 : index
    %262 = vector.load %arg6[%261, %c0_88, %c0_89] : memref<8x8x64xf32, #tpu.memory_space<vmem>>, vector<1x8x32xf32>
    %263 = vector.shape_cast %262 : vector<1x8x32xf32> to vector<8x32xf32>
    %264 = vector.shape_cast %227 : vector<8x32xf32> to vector<1x8x32xf32>
    tpu.vector_store %arg6[%261, %c0_88, %c0_89], %264 {strides = array<i32>} : memref<8x8x64xf32, #tpu.memory_space<vmem>>, vector<1x8x32xf32>,
    %c7_i32_90 = arith.constant 7 : i32
    %265 = arith.subi %c7_i32_90, %c2_i32 : i32
    %266 = arith.index_cast %265 : i32 to index
    %c0_91 = arith.constant 0 : index
    %c32_92 = arith.constant 32 : index
    %267 = vector.load %arg6[%266, %c0_91, %c32_92] : memref<8x8x64xf32, #tpu.memory_space<vmem>>, vector<1x8x32xf32>
    %268 = vector.shape_cast %267 : vector<1x8x32xf32> to vector<8x32xf32>
    %269 = vector.shape_cast %260 : vector<8x32xf32> to vector<1x8x32xf32>
    tpu.vector_store %arg6[%266, %c0_91, %c32_92], %269 {strides = array<i32>} : memref<8x8x64xf32, #tpu.memory_space<vmem>>, vector<1x8x32xf32>,
    %c3_i32 = arith.constant 3 : i32
    %c8_i32_93 = arith.constant 8 : i32
    %270 = arith.muli %c3_i32, %c8_i32_93 : i32
    %271 = tpu.assume_multiple %270, 8 : i32
    %272 = arith.index_cast %271 : i32 to index
    %c0_94 = arith.constant 0 : index
    %273 = vector.load %arg8[%272, %c0_94] : memref<64x256xf32, #tpu.memory_space<vmem>>, vector<8x128xf32>
    %c7_i32_95 = arith.constant 7 : i32
    %274 = arith.subi %c7_i32_95, %c3_i32 : i32
    %c8_i32_96 = arith.constant 8 : i32
    %275 = arith.muli %274, %c8_i32_96 : i32
    %276 = tpu.assume_multiple %275, 8 : i32
    %277 = arith.index_cast %276 : i32 to index
    %c128_97 = arith.constant 128 : index
    %278 = vector.load %arg8[%277, %c128_97] : memref<64x256xf32, #tpu.memory_space<vmem>>, vector<8x128xf32>
    %279 = tpu.concatenate %227, %260 in 1 : vector<8x32xf32>, vector<8x32xf32> -> vector<8x64xf32>
    %280 = arith.truncf %279 : vector<8x64xf32> to vector<8x64xbf16>
    %cst_98 = arith.constant dense<0.000000e+00> : vector<8x256xf32>
    %281 = tpu.matmul %280, %7, %cst_98 {dimension_numbers = #tpu.dot_dimension_numbers<[1], [0], [0], [1], [0, 0, 1, 1], [], []>} : vector<8x64xbf16>, vector<64x256xbf16>, vector<8x256xf32> -> vector<8x256xf32>
    %282 = vector.extract_strided_slice %281 {offsets = [0, 0], sizes = [8, 128], strides = [1, 1]} : vector<8x256xf32> to vector<8x128xf32>
    %283 = arith.addf %273, %282 : vector<8x128xf32>
    %284 = vector.extract_strided_slice %283 {offsets = [0, 0], sizes = [8, 32], strides = [1, 1]} : vector<8x128xf32> to vector<8x32xf32>
    %cst_99 = arith.constant 5.000000e-01 : f32
    %285 = vector.broadcast %cst_99 : f32 to vector<8x32xf32>
    %286 = arith.mulf %285, %284 : vector<8x32xf32>
    %287 = math.tanh %286 : vector<8x32xf32>
    %cst_100 = arith.constant 1.000000e+00 : f32
    %288 = vector.broadcast %cst_100 : f32 to vector<8x32xf32>
    %289 = arith.addf %287, %288 : vector<8x32xf32>
    %cst_101 = arith.constant 5.000000e-01 : f32
    %290 = vector.broadcast %cst_101 : f32 to vector<8x32xf32>
    %291 = arith.mulf %290, %289 : vector<8x32xf32>
    %292 = vector.extract_strided_slice %283 {offsets = [0, 32], sizes = [8, 32], strides = [1, 1]} : vector<8x128xf32> to vector<8x32xf32>
    %cst_102 = arith.constant 5.000000e-01 : f32
    %293 = vector.broadcast %cst_102 : f32 to vector<8x32xf32>
    %294 = arith.mulf %293, %292 : vector<8x32xf32>
    %295 = math.tanh %294 : vector<8x32xf32>
    %cst_103 = arith.constant 1.000000e+00 : f32
    %296 = vector.broadcast %cst_103 : f32 to vector<8x32xf32>
    %297 = arith.addf %295, %296 : vector<8x32xf32>
    %cst_104 = arith.constant 5.000000e-01 : f32
    %298 = vector.broadcast %cst_104 : f32 to vector<8x32xf32>
    %299 = arith.mulf %298, %297 : vector<8x32xf32>
    %300 = vector.extract_strided_slice %283 {offsets = [0, 64], sizes = [8, 32], strides = [1, 1]} : vector<8x128xf32> to vector<8x32xf32>
    %301 = math.tanh %300 : vector<8x32xf32>
    %302 = vector.extract_strided_slice %283 {offsets = [0, 96], sizes = [8, 32], strides = [1, 1]} : vector<8x128xf32> to vector<8x32xf32>
    %cst_105 = arith.constant 5.000000e-01 : f32
    %303 = vector.broadcast %cst_105 : f32 to vector<8x32xf32>
    %304 = arith.mulf %303, %302 : vector<8x32xf32>
    %305 = math.tanh %304 : vector<8x32xf32>
    %cst_106 = arith.constant 1.000000e+00 : f32
    %306 = vector.broadcast %cst_106 : f32 to vector<8x32xf32>
    %307 = arith.addf %305, %306 : vector<8x32xf32>
    %cst_107 = arith.constant 5.000000e-01 : f32
    %308 = vector.broadcast %cst_107 : f32 to vector<8x32xf32>
    %309 = arith.mulf %308, %307 : vector<8x32xf32>
    %310 = arith.mulf %299, %225 : vector<8x32xf32>
    %311 = arith.mulf %291, %301 : vector<8x32xf32>
    %312 = arith.addf %310, %311 : vector<8x32xf32>
    %313 = math.tanh %312 : vector<8x32xf32>
    %314 = arith.mulf %309, %313 : vector<8x32xf32>
    %315 = vector.extract_strided_slice %281 {offsets = [0, 128], sizes = [8, 128], strides = [1, 1]} : vector<8x256xf32> to vector<8x128xf32>
    %316 = arith.addf %278, %315 : vector<8x128xf32>
    %317 = vector.extract_strided_slice %316 {offsets = [0, 0], sizes = [8, 32], strides = [1, 1]} : vector<8x128xf32> to vector<8x32xf32>
    %cst_108 = arith.constant 5.000000e-01 : f32
    %318 = vector.broadcast %cst_108 : f32 to vector<8x32xf32>
    %319 = arith.mulf %318, %317 : vector<8x32xf32>
    %320 = math.tanh %319 : vector<8x32xf32>
    %cst_109 = arith.constant 1.000000e+00 : f32
    %321 = vector.broadcast %cst_109 : f32 to vector<8x32xf32>
    %322 = arith.addf %320, %321 : vector<8x32xf32>
    %cst_110 = arith.constant 5.000000e-01 : f32
    %323 = vector.broadcast %cst_110 : f32 to vector<8x32xf32>
    %324 = arith.mulf %323, %322 : vector<8x32xf32>
    %325 = vector.extract_strided_slice %316 {offsets = [0, 32], sizes = [8, 32], strides = [1, 1]} : vector<8x128xf32> to vector<8x32xf32>
    %cst_111 = arith.constant 5.000000e-01 : f32
    %326 = vector.broadcast %cst_111 : f32 to vector<8x32xf32>
    %327 = arith.mulf %326, %325 : vector<8x32xf32>
    %328 = math.tanh %327 : vector<8x32xf32>
    %cst_112 = arith.constant 1.000000e+00 : f32
    %329 = vector.broadcast %cst_112 : f32 to vector<8x32xf32>
    %330 = arith.addf %328, %329 : vector<8x32xf32>
    %cst_113 = arith.constant 5.000000e-01 : f32
    %331 = vector.broadcast %cst_113 : f32 to vector<8x32xf32>
    %332 = arith.mulf %331, %330 : vector<8x32xf32>
    %333 = vector.extract_strided_slice %316 {offsets = [0, 64], sizes = [8, 32], strides = [1, 1]} : vector<8x128xf32> to vector<8x32xf32>
    %334 = math.tanh %333 : vector<8x32xf32>
    %335 = vector.extract_strided_slice %316 {offsets = [0, 96], sizes = [8, 32], strides = [1, 1]} : vector<8x128xf32> to vector<8x32xf32>
    %cst_114 = arith.constant 5.000000e-01 : f32
    %336 = vector.broadcast %cst_114 : f32 to vector<8x32xf32>
    %337 = arith.mulf %336, %335 : vector<8x32xf32>
    %338 = math.tanh %337 : vector<8x32xf32>
    %cst_115 = arith.constant 1.000000e+00 : f32
    %339 = vector.broadcast %cst_115 : f32 to vector<8x32xf32>
    %340 = arith.addf %338, %339 : vector<8x32xf32>
    %cst_116 = arith.constant 5.000000e-01 : f32
    %341 = vector.broadcast %cst_116 : f32 to vector<8x32xf32>
    %342 = arith.mulf %341, %340 : vector<8x32xf32>
    %343 = arith.mulf %332, %258 : vector<8x32xf32>
    %344 = arith.mulf %324, %334 : vector<8x32xf32>
    %345 = arith.addf %343, %344 : vector<8x32xf32>
    %346 = math.tanh %345 : vector<8x32xf32>
    %347 = arith.mulf %342, %346 : vector<8x32xf32>
    %348 = arith.index_cast %c3_i32 : i32 to index
    %c0_117 = arith.constant 0 : index
    %c0_118 = arith.constant 0 : index
    %349 = vector.load %arg6[%348, %c0_117, %c0_118] : memref<8x8x64xf32, #tpu.memory_space<vmem>>, vector<1x8x32xf32>
    %350 = vector.shape_cast %349 : vector<1x8x32xf32> to vector<8x32xf32>
    %351 = vector.shape_cast %314 : vector<8x32xf32> to vector<1x8x32xf32>
    tpu.vector_store %arg6[%348, %c0_117, %c0_118], %351 {strides = array<i32>} : memref<8x8x64xf32, #tpu.memory_space<vmem>>, vector<1x8x32xf32>,
    %c7_i32_119 = arith.constant 7 : i32
    %352 = arith.subi %c7_i32_119, %c3_i32 : i32
    %353 = arith.index_cast %352 : i32 to index
    %c0_120 = arith.constant 0 : index
    %c32_121 = arith.constant 32 : index
    %354 = vector.load %arg6[%353, %c0_120, %c32_121] : memref<8x8x64xf32, #tpu.memory_space<vmem>>, vector<1x8x32xf32>
    %355 = vector.shape_cast %354 : vector<1x8x32xf32> to vector<8x32xf32>
    %356 = vector.shape_cast %347 : vector<8x32xf32> to vector<1x8x32xf32>
    tpu.vector_store %arg6[%353, %c0_120, %c32_121], %356 {strides = array<i32>} : memref<8x8x64xf32, #tpu.memory_space<vmem>>, vector<1x8x32xf32>,
    %c4_i32 = arith.constant 4 : i32
    %c8_i32_122 = arith.constant 8 : i32
    %357 = arith.muli %c4_i32, %c8_i32_122 : i32
    %358 = tpu.assume_multiple %357, 8 : i32
    %359 = arith.index_cast %358 : i32 to index
    %c0_123 = arith.constant 0 : index
    %360 = vector.load %arg8[%359, %c0_123] : memref<64x256xf32, #tpu.memory_space<vmem>>, vector<8x128xf32>
    %c7_i32_124 = arith.constant 7 : i32
    %361 = arith.subi %c7_i32_124, %c4_i32 : i32
    %c8_i32_125 = arith.constant 8 : i32
    %362 = arith.muli %361, %c8_i32_125 : i32
    %363 = tpu.assume_multiple %362, 8 : i32
    %364 = arith.index_cast %363 : i32 to index
    %c128_126 = arith.constant 128 : index
    %365 = vector.load %arg8[%364, %c128_126] : memref<64x256xf32, #tpu.memory_space<vmem>>, vector<8x128xf32>
    %366 = tpu.concatenate %314, %347 in 1 : vector<8x32xf32>, vector<8x32xf32> -> vector<8x64xf32>
    %367 = arith.truncf %366 : vector<8x64xf32> to vector<8x64xbf16>
    %cst_127 = arith.constant dense<0.000000e+00> : vector<8x256xf32>
    %368 = tpu.matmul %367, %7, %cst_127 {dimension_numbers = #tpu.dot_dimension_numbers<[1], [0], [0], [1], [0, 0, 1, 1], [], []>} : vector<8x64xbf16>, vector<64x256xbf16>, vector<8x256xf32> -> vector<8x256xf32>
    %369 = vector.extract_strided_slice %368 {offsets = [0, 0], sizes = [8, 128], strides = [1, 1]} : vector<8x256xf32> to vector<8x128xf32>
    %370 = arith.addf %360, %369 : vector<8x128xf32>
    %371 = vector.extract_strided_slice %370 {offsets = [0, 0], sizes = [8, 32], strides = [1, 1]} : vector<8x128xf32> to vector<8x32xf32>
    %cst_128 = arith.constant 5.000000e-01 : f32
    %372 = vector.broadcast %cst_128 : f32 to vector<8x32xf32>
    %373 = arith.mulf %372, %371 : vector<8x32xf32>
    %374 = math.tanh %373 : vector<8x32xf32>
    %cst_129 = arith.constant 1.000000e+00 : f32
    %375 = vector.broadcast %cst_129 : f32 to vector<8x32xf32>
    %376 = arith.addf %374, %375 : vector<8x32xf32>
    %cst_130 = arith.constant 5.000000e-01 : f32
    %377 = vector.broadcast %cst_130 : f32 to vector<8x32xf32>
    %378 = arith.mulf %377, %376 : vector<8x32xf32>
    %379 = vector.extract_strided_slice %370 {offsets = [0, 32], sizes = [8, 32], strides = [1, 1]} : vector<8x128xf32> to vector<8x32xf32>
    %cst_131 = arith.constant 5.000000e-01 : f32
    %380 = vector.broadcast %cst_131 : f32 to vector<8x32xf32>
    %381 = arith.mulf %380, %379 : vector<8x32xf32>
    %382 = math.tanh %381 : vector<8x32xf32>
    %cst_132 = arith.constant 1.000000e+00 : f32
    %383 = vector.broadcast %cst_132 : f32 to vector<8x32xf32>
    %384 = arith.addf %382, %383 : vector<8x32xf32>
    %cst_133 = arith.constant 5.000000e-01 : f32
    %385 = vector.broadcast %cst_133 : f32 to vector<8x32xf32>
    %386 = arith.mulf %385, %384 : vector<8x32xf32>
    %387 = vector.extract_strided_slice %370 {offsets = [0, 64], sizes = [8, 32], strides = [1, 1]} : vector<8x128xf32> to vector<8x32xf32>
    %388 = math.tanh %387 : vector<8x32xf32>
    %389 = vector.extract_strided_slice %370 {offsets = [0, 96], sizes = [8, 32], strides = [1, 1]} : vector<8x128xf32> to vector<8x32xf32>
    %cst_134 = arith.constant 5.000000e-01 : f32
    %390 = vector.broadcast %cst_134 : f32 to vector<8x32xf32>
    %391 = arith.mulf %390, %389 : vector<8x32xf32>
    %392 = math.tanh %391 : vector<8x32xf32>
    %cst_135 = arith.constant 1.000000e+00 : f32
    %393 = vector.broadcast %cst_135 : f32 to vector<8x32xf32>
    %394 = arith.addf %392, %393 : vector<8x32xf32>
    %cst_136 = arith.constant 5.000000e-01 : f32
    %395 = vector.broadcast %cst_136 : f32 to vector<8x32xf32>
    %396 = arith.mulf %395, %394 : vector<8x32xf32>
    %397 = arith.mulf %386, %312 : vector<8x32xf32>
    %398 = arith.mulf %378, %388 : vector<8x32xf32>
    %399 = arith.addf %397, %398 : vector<8x32xf32>
    %400 = math.tanh %399 : vector<8x32xf32>
    %401 = arith.mulf %396, %400 : vector<8x32xf32>
    %402 = vector.extract_strided_slice %368 {offsets = [0, 128], sizes = [8, 128], strides = [1, 1]} : vector<8x256xf32> to vector<8x128xf32>
    %403 = arith.addf %365, %402 : vector<8x128xf32>
    %404 = vector.extract_strided_slice %403 {offsets = [0, 0], sizes = [8, 32], strides = [1, 1]} : vector<8x128xf32> to vector<8x32xf32>
    %cst_137 = arith.constant 5.000000e-01 : f32
    %405 = vector.broadcast %cst_137 : f32 to vector<8x32xf32>
    %406 = arith.mulf %405, %404 : vector<8x32xf32>
    %407 = math.tanh %406 : vector<8x32xf32>
    %cst_138 = arith.constant 1.000000e+00 : f32
    %408 = vector.broadcast %cst_138 : f32 to vector<8x32xf32>
    %409 = arith.addf %407, %408 : vector<8x32xf32>
    %cst_139 = arith.constant 5.000000e-01 : f32
    %410 = vector.broadcast %cst_139 : f32 to vector<8x32xf32>
    %411 = arith.mulf %410, %409 : vector<8x32xf32>
    %412 = vector.extract_strided_slice %403 {offsets = [0, 32], sizes = [8, 32], strides = [1, 1]} : vector<8x128xf32> to vector<8x32xf32>
    %cst_140 = arith.constant 5.000000e-01 : f32
    %413 = vector.broadcast %cst_140 : f32 to vector<8x32xf32>
    %414 = arith.mulf %413, %412 : vector<8x32xf32>
    %415 = math.tanh %414 : vector<8x32xf32>
    %cst_141 = arith.constant 1.000000e+00 : f32
    %416 = vector.broadcast %cst_141 : f32 to vector<8x32xf32>
    %417 = arith.addf %415, %416 : vector<8x32xf32>
    %cst_142 = arith.constant 5.000000e-01 : f32
    %418 = vector.broadcast %cst_142 : f32 to vector<8x32xf32>
    %419 = arith.mulf %418, %417 : vector<8x32xf32>
    %420 = vector.extract_strided_slice %403 {offsets = [0, 64], sizes = [8, 32], strides = [1, 1]} : vector<8x128xf32> to vector<8x32xf32>
    %421 = math.tanh %420 : vector<8x32xf32>
    %422 = vector.extract_strided_slice %403 {offsets = [0, 96], sizes = [8, 32], strides = [1, 1]} : vector<8x128xf32> to vector<8x32xf32>
    %cst_143 = arith.constant 5.000000e-01 : f32
    %423 = vector.broadcast %cst_143 : f32 to vector<8x32xf32>
    %424 = arith.mulf %423, %422 : vector<8x32xf32>
    %425 = math.tanh %424 : vector<8x32xf32>
    %cst_144 = arith.constant 1.000000e+00 : f32
    %426 = vector.broadcast %cst_144 : f32 to vector<8x32xf32>
    %427 = arith.addf %425, %426 : vector<8x32xf32>
    %cst_145 = arith.constant 5.000000e-01 : f32
    %428 = vector.broadcast %cst_145 : f32 to vector<8x32xf32>
    %429 = arith.mulf %428, %427 : vector<8x32xf32>
    %430 = arith.mulf %419, %345 : vector<8x32xf32>
    %431 = arith.mulf %411, %421 : vector<8x32xf32>
    %432 = arith.addf %430, %431 : vector<8x32xf32>
    %433 = math.tanh %432 : vector<8x32xf32>
    %434 = arith.mulf %429, %433 : vector<8x32xf32>
    %435 = arith.index_cast %c4_i32 : i32 to index
    %c0_146 = arith.constant 0 : index
    %c0_147 = arith.constant 0 : index
    %436 = vector.load %arg6[%435, %c0_146, %c0_147] : memref<8x8x64xf32, #tpu.memory_space<vmem>>, vector<1x8x32xf32>
    %437 = vector.shape_cast %436 : vector<1x8x32xf32> to vector<8x32xf32>
    %438 = vector.shape_cast %401 : vector<8x32xf32> to vector<1x8x32xf32>
    tpu.vector_store %arg6[%435, %c0_146, %c0_147], %438 {strides = array<i32>} : memref<8x8x64xf32, #tpu.memory_space<vmem>>, vector<1x8x32xf32>,
    %c7_i32_148 = arith.constant 7 : i32
    %439 = arith.subi %c7_i32_148, %c4_i32 : i32
    %440 = arith.index_cast %439 : i32 to index
    %c0_149 = arith.constant 0 : index
    %c32_150 = arith.constant 32 : index
    %441 = vector.load %arg6[%440, %c0_149, %c32_150] : memref<8x8x64xf32, #tpu.memory_space<vmem>>, vector<1x8x32xf32>
    %442 = vector.shape_cast %441 : vector<1x8x32xf32> to vector<8x32xf32>
    %443 = vector.shape_cast %434 : vector<8x32xf32> to vector<1x8x32xf32>
    tpu.vector_store %arg6[%440, %c0_149, %c32_150], %443 {strides = array<i32>} : memref<8x8x64xf32, #tpu.memory_space<vmem>>, vector<1x8x32xf32>,
    %c5_i32 = arith.constant 5 : i32
    %c8_i32_151 = arith.constant 8 : i32
    %444 = arith.muli %c5_i32, %c8_i32_151 : i32
    %445 = tpu.assume_multiple %444, 8 : i32
    %446 = arith.index_cast %445 : i32 to index
    %c0_152 = arith.constant 0 : index
    %447 = vector.load %arg8[%446, %c0_152] : memref<64x256xf32, #tpu.memory_space<vmem>>, vector<8x128xf32>
    %c7_i32_153 = arith.constant 7 : i32
    %448 = arith.subi %c7_i32_153, %c5_i32 : i32
    %c8_i32_154 = arith.constant 8 : i32
    %449 = arith.muli %448, %c8_i32_154 : i32
    %450 = tpu.assume_multiple %449, 8 : i32
    %451 = arith.index_cast %450 : i32 to index
    %c128_155 = arith.constant 128 : index
    %452 = vector.load %arg8[%451, %c128_155] : memref<64x256xf32, #tpu.memory_space<vmem>>, vector<8x128xf32>
    %453 = tpu.concatenate %401, %434 in 1 : vector<8x32xf32>, vector<8x32xf32> -> vector<8x64xf32>
    %454 = arith.truncf %453 : vector<8x64xf32> to vector<8x64xbf16>
    %cst_156 = arith.constant dense<0.000000e+00> : vector<8x256xf32>
    %455 = tpu.matmul %454, %7, %cst_156 {dimension_numbers = #tpu.dot_dimension_numbers<[1], [0], [0], [1], [0, 0, 1, 1], [], []>} : vector<8x64xbf16>, vector<64x256xbf16>, vector<8x256xf32> -> vector<8x256xf32>
    %456 = vector.extract_strided_slice %455 {offsets = [0, 0], sizes = [8, 128], strides = [1, 1]} : vector<8x256xf32> to vector<8x128xf32>
    %457 = arith.addf %447, %456 : vector<8x128xf32>
    %458 = vector.extract_strided_slice %457 {offsets = [0, 0], sizes = [8, 32], strides = [1, 1]} : vector<8x128xf32> to vector<8x32xf32>
    %cst_157 = arith.constant 5.000000e-01 : f32
    %459 = vector.broadcast %cst_157 : f32 to vector<8x32xf32>
    %460 = arith.mulf %459, %458 : vector<8x32xf32>
    %461 = math.tanh %460 : vector<8x32xf32>
    %cst_158 = arith.constant 1.000000e+00 : f32
    %462 = vector.broadcast %cst_158 : f32 to vector<8x32xf32>
    %463 = arith.addf %461, %462 : vector<8x32xf32>
    %cst_159 = arith.constant 5.000000e-01 : f32
    %464 = vector.broadcast %cst_159 : f32 to vector<8x32xf32>
    %465 = arith.mulf %464, %463 : vector<8x32xf32>
    %466 = vector.extract_strided_slice %457 {offsets = [0, 32], sizes = [8, 32], strides = [1, 1]} : vector<8x128xf32> to vector<8x32xf32>
    %cst_160 = arith.constant 5.000000e-01 : f32
    %467 = vector.broadcast %cst_160 : f32 to vector<8x32xf32>
    %468 = arith.mulf %467, %466 : vector<8x32xf32>
    %469 = math.tanh %468 : vector<8x32xf32>
    %cst_161 = arith.constant 1.000000e+00 : f32
    %470 = vector.broadcast %cst_161 : f32 to vector<8x32xf32>
    %471 = arith.addf %469, %470 : vector<8x32xf32>
    %cst_162 = arith.constant 5.000000e-01 : f32
    %472 = vector.broadcast %cst_162 : f32 to vector<8x32xf32>
    %473 = arith.mulf %472, %471 : vector<8x32xf32>
    %474 = vector.extract_strided_slice %457 {offsets = [0, 64], sizes = [8, 32], strides = [1, 1]} : vector<8x128xf32> to vector<8x32xf32>
    %475 = math.tanh %474 : vector<8x32xf32>
    %476 = vector.extract_strided_slice %457 {offsets = [0, 96], sizes = [8, 32], strides = [1, 1]} : vector<8x128xf32> to vector<8x32xf32>
    %cst_163 = arith.constant 5.000000e-01 : f32
    %477 = vector.broadcast %cst_163 : f32 to vector<8x32xf32>
    %478 = arith.mulf %477, %476 : vector<8x32xf32>
    %479 = math.tanh %478 : vector<8x32xf32>
    %cst_164 = arith.constant 1.000000e+00 : f32
    %480 = vector.broadcast %cst_164 : f32 to vector<8x32xf32>
    %481 = arith.addf %479, %480 : vector<8x32xf32>
    %cst_165 = arith.constant 5.000000e-01 : f32
    %482 = vector.broadcast %cst_165 : f32 to vector<8x32xf32>
    %483 = arith.mulf %482, %481 : vector<8x32xf32>
    %484 = arith.mulf %473, %399 : vector<8x32xf32>
    %485 = arith.mulf %465, %475 : vector<8x32xf32>
    %486 = arith.addf %484, %485 : vector<8x32xf32>
    %487 = math.tanh %486 : vector<8x32xf32>
    %488 = arith.mulf %483, %487 : vector<8x32xf32>
    %489 = vector.extract_strided_slice %455 {offsets = [0, 128], sizes = [8, 128], strides = [1, 1]} : vector<8x256xf32> to vector<8x128xf32>
    %490 = arith.addf %452, %489 : vector<8x128xf32>
    %491 = vector.extract_strided_slice %490 {offsets = [0, 0], sizes = [8, 32], strides = [1, 1]} : vector<8x128xf32> to vector<8x32xf32>
    %cst_166 = arith.constant 5.000000e-01 : f32
    %492 = vector.broadcast %cst_166 : f32 to vector<8x32xf32>
    %493 = arith.mulf %492, %491 : vector<8x32xf32>
    %494 = math.tanh %493 : vector<8x32xf32>
    %cst_167 = arith.constant 1.000000e+00 : f32
    %495 = vector.broadcast %cst_167 : f32 to vector<8x32xf32>
    %496 = arith.addf %494, %495 : vector<8x32xf32>
    %cst_168 = arith.constant 5.000000e-01 : f32
    %497 = vector.broadcast %cst_168 : f32 to vector<8x32xf32>
    %498 = arith.mulf %497, %496 : vector<8x32xf32>
    %499 = vector.extract_strided_slice %490 {offsets = [0, 32], sizes = [8, 32], strides = [1, 1]} : vector<8x128xf32> to vector<8x32xf32>
    %cst_169 = arith.constant 5.000000e-01 : f32
    %500 = vector.broadcast %cst_169 : f32 to vector<8x32xf32>
    %501 = arith.mulf %500, %499 : vector<8x32xf32>
    %502 = math.tanh %501 : vector<8x32xf32>
    %cst_170 = arith.constant 1.000000e+00 : f32
    %503 = vector.broadcast %cst_170 : f32 to vector<8x32xf32>
    %504 = arith.addf %502, %503 : vector<8x32xf32>
    %cst_171 = arith.constant 5.000000e-01 : f32
    %505 = vector.broadcast %cst_171 : f32 to vector<8x32xf32>
    %506 = arith.mulf %505, %504 : vector<8x32xf32>
    %507 = vector.extract_strided_slice %490 {offsets = [0, 64], sizes = [8, 32], strides = [1, 1]} : vector<8x128xf32> to vector<8x32xf32>
    %508 = math.tanh %507 : vector<8x32xf32>
    %509 = vector.extract_strided_slice %490 {offsets = [0, 96], sizes = [8, 32], strides = [1, 1]} : vector<8x128xf32> to vector<8x32xf32>
    %cst_172 = arith.constant 5.000000e-01 : f32
    %510 = vector.broadcast %cst_172 : f32 to vector<8x32xf32>
    %511 = arith.mulf %510, %509 : vector<8x32xf32>
    %512 = math.tanh %511 : vector<8x32xf32>
    %cst_173 = arith.constant 1.000000e+00 : f32
    %513 = vector.broadcast %cst_173 : f32 to vector<8x32xf32>
    %514 = arith.addf %512, %513 : vector<8x32xf32>
    %cst_174 = arith.constant 5.000000e-01 : f32
    %515 = vector.broadcast %cst_174 : f32 to vector<8x32xf32>
    %516 = arith.mulf %515, %514 : vector<8x32xf32>
    %517 = arith.mulf %506, %432 : vector<8x32xf32>
    %518 = arith.mulf %498, %508 : vector<8x32xf32>
    %519 = arith.addf %517, %518 : vector<8x32xf32>
    %520 = math.tanh %519 : vector<8x32xf32>
    %521 = arith.mulf %516, %520 : vector<8x32xf32>
    %522 = arith.index_cast %c5_i32 : i32 to index
    %c0_175 = arith.constant 0 : index
    %c0_176 = arith.constant 0 : index
    %523 = vector.load %arg6[%522, %c0_175, %c0_176] : memref<8x8x64xf32, #tpu.memory_space<vmem>>, vector<1x8x32xf32>
    %524 = vector.shape_cast %523 : vector<1x8x32xf32> to vector<8x32xf32>
    %525 = vector.shape_cast %488 : vector<8x32xf32> to vector<1x8x32xf32>
    tpu.vector_store %arg6[%522, %c0_175, %c0_176], %525 {strides = array<i32>} : memref<8x8x64xf32, #tpu.memory_space<vmem>>, vector<1x8x32xf32>,
    %c7_i32_177 = arith.constant 7 : i32
    %526 = arith.subi %c7_i32_177, %c5_i32 : i32
    %527 = arith.index_cast %526 : i32 to index
    %c0_178 = arith.constant 0 : index
    %c32_179 = arith.constant 32 : index
    %528 = vector.load %arg6[%527, %c0_178, %c32_179] : memref<8x8x64xf32, #tpu.memory_space<vmem>>, vector<1x8x32xf32>
    %529 = vector.shape_cast %528 : vector<1x8x32xf32> to vector<8x32xf32>
    %530 = vector.shape_cast %521 : vector<8x32xf32> to vector<1x8x32xf32>
    tpu.vector_store %arg6[%527, %c0_178, %c32_179], %530 {strides = array<i32>} : memref<8x8x64xf32, #tpu.memory_space<vmem>>, vector<1x8x32xf32>,
    %c6_i32 = arith.constant 6 : i32
    %c8_i32_180 = arith.constant 8 : i32
    %531 = arith.muli %c6_i32, %c8_i32_180 : i32
    %532 = tpu.assume_multiple %531, 8 : i32
    %533 = arith.index_cast %532 : i32 to index
    %c0_181 = arith.constant 0 : index
    %534 = vector.load %arg8[%533, %c0_181] : memref<64x256xf32, #tpu.memory_space<vmem>>, vector<8x128xf32>
    %c7_i32_182 = arith.constant 7 : i32
    %535 = arith.subi %c7_i32_182, %c6_i32 : i32
    %c8_i32_183 = arith.constant 8 : i32
    %536 = arith.muli %535, %c8_i32_183 : i32
    %537 = tpu.assume_multiple %536, 8 : i32
    %538 = arith.index_cast %537 : i32 to index
    %c128_184 = arith.constant 128 : index
    %539 = vector.load %arg8[%538, %c128_184] : memref<64x256xf32, #tpu.memory_space<vmem>>, vector<8x128xf32>
    %540 = tpu.concatenate %488, %521 in 1 : vector<8x32xf32>, vector<8x32xf32> -> vector<8x64xf32>
    %541 = arith.truncf %540 : vector<8x64xf32> to vector<8x64xbf16>
    %cst_185 = arith.constant dense<0.000000e+00> : vector<8x256xf32>
    %542 = tpu.matmul %541, %7, %cst_185 {dimension_numbers = #tpu.dot_dimension_numbers<[1], [0], [0], [1], [0, 0, 1, 1], [], []>} : vector<8x64xbf16>, vector<64x256xbf16>, vector<8x256xf32> -> vector<8x256xf32>
    %543 = vector.extract_strided_slice %542 {offsets = [0, 0], sizes = [8, 128], strides = [1, 1]} : vector<8x256xf32> to vector<8x128xf32>
    %544 = arith.addf %534, %543 : vector<8x128xf32>
    %545 = vector.extract_strided_slice %544 {offsets = [0, 0], sizes = [8, 32], strides = [1, 1]} : vector<8x128xf32> to vector<8x32xf32>
    %cst_186 = arith.constant 5.000000e-01 : f32
    %546 = vector.broadcast %cst_186 : f32 to vector<8x32xf32>
    %547 = arith.mulf %546, %545 : vector<8x32xf32>
    %548 = math.tanh %547 : vector<8x32xf32>
    %cst_187 = arith.constant 1.000000e+00 : f32
    %549 = vector.broadcast %cst_187 : f32 to vector<8x32xf32>
    %550 = arith.addf %548, %549 : vector<8x32xf32>
    %cst_188 = arith.constant 5.000000e-01 : f32
    %551 = vector.broadcast %cst_188 : f32 to vector<8x32xf32>
    %552 = arith.mulf %551, %550 : vector<8x32xf32>
    %553 = vector.extract_strided_slice %544 {offsets = [0, 32], sizes = [8, 32], strides = [1, 1]} : vector<8x128xf32> to vector<8x32xf32>
    %cst_189 = arith.constant 5.000000e-01 : f32
    %554 = vector.broadcast %cst_189 : f32 to vector<8x32xf32>
    %555 = arith.mulf %554, %553 : vector<8x32xf32>
    %556 = math.tanh %555 : vector<8x32xf32>
    %cst_190 = arith.constant 1.000000e+00 : f32
    %557 = vector.broadcast %cst_190 : f32 to vector<8x32xf32>
    %558 = arith.addf %556, %557 : vector<8x32xf32>
    %cst_191 = arith.constant 5.000000e-01 : f32
    %559 = vector.broadcast %cst_191 : f32 to vector<8x32xf32>
    %560 = arith.mulf %559, %558 : vector<8x32xf32>
    %561 = vector.extract_strided_slice %544 {offsets = [0, 64], sizes = [8, 32], strides = [1, 1]} : vector<8x128xf32> to vector<8x32xf32>
    %562 = math.tanh %561 : vector<8x32xf32>
    %563 = vector.extract_strided_slice %544 {offsets = [0, 96], sizes = [8, 32], strides = [1, 1]} : vector<8x128xf32> to vector<8x32xf32>
    %cst_192 = arith.constant 5.000000e-01 : f32
    %564 = vector.broadcast %cst_192 : f32 to vector<8x32xf32>
    %565 = arith.mulf %564, %563 : vector<8x32xf32>
    %566 = math.tanh %565 : vector<8x32xf32>
    %cst_193 = arith.constant 1.000000e+00 : f32
    %567 = vector.broadcast %cst_193 : f32 to vector<8x32xf32>
    %568 = arith.addf %566, %567 : vector<8x32xf32>
    %cst_194 = arith.constant 5.000000e-01 : f32
    %569 = vector.broadcast %cst_194 : f32 to vector<8x32xf32>
    %570 = arith.mulf %569, %568 : vector<8x32xf32>
    %571 = arith.mulf %560, %486 : vector<8x32xf32>
    %572 = arith.mulf %552, %562 : vector<8x32xf32>
    %573 = arith.addf %571, %572 : vector<8x32xf32>
    %574 = math.tanh %573 : vector<8x32xf32>
    %575 = arith.mulf %570, %574 : vector<8x32xf32>
    %576 = vector.extract_strided_slice %542 {offsets = [0, 128], sizes = [8, 128], strides = [1, 1]} : vector<8x256xf32> to vector<8x128xf32>
    %577 = arith.addf %539, %576 : vector<8x128xf32>
    %578 = vector.extract_strided_slice %577 {offsets = [0, 0], sizes = [8, 32], strides = [1, 1]} : vector<8x128xf32> to vector<8x32xf32>
    %cst_195 = arith.constant 5.000000e-01 : f32
    %579 = vector.broadcast %cst_195 : f32 to vector<8x32xf32>
    %580 = arith.mulf %579, %578 : vector<8x32xf32>
    %581 = math.tanh %580 : vector<8x32xf32>
    %cst_196 = arith.constant 1.000000e+00 : f32
    %582 = vector.broadcast %cst_196 : f32 to vector<8x32xf32>
    %583 = arith.addf %581, %582 : vector<8x32xf32>
    %cst_197 = arith.constant 5.000000e-01 : f32
    %584 = vector.broadcast %cst_197 : f32 to vector<8x32xf32>
    %585 = arith.mulf %584, %583 : vector<8x32xf32>
    %586 = vector.extract_strided_slice %577 {offsets = [0, 32], sizes = [8, 32], strides = [1, 1]} : vector<8x128xf32> to vector<8x32xf32>
    %cst_198 = arith.constant 5.000000e-01 : f32
    %587 = vector.broadcast %cst_198 : f32 to vector<8x32xf32>
    %588 = arith.mulf %587, %586 : vector<8x32xf32>
    %589 = math.tanh %588 : vector<8x32xf32>
    %cst_199 = arith.constant 1.000000e+00 : f32
    %590 = vector.broadcast %cst_199 : f32 to vector<8x32xf32>
    %591 = arith.addf %589, %590 : vector<8x32xf32>
    %cst_200 = arith.constant 5.000000e-01 : f32
    %592 = vector.broadcast %cst_200 : f32 to vector<8x32xf32>
    %593 = arith.mulf %592, %591 : vector<8x32xf32>
    %594 = vector.extract_strided_slice %577 {offsets = [0, 64], sizes = [8, 32], strides = [1, 1]} : vector<8x128xf32> to vector<8x32xf32>
    %595 = math.tanh %594 : vector<8x32xf32>
    %596 = vector.extract_strided_slice %577 {offsets = [0, 96], sizes = [8, 32], strides = [1, 1]} : vector<8x128xf32> to vector<8x32xf32>
    %cst_201 = arith.constant 5.000000e-01 : f32
    %597 = vector.broadcast %cst_201 : f32 to vector<8x32xf32>
    %598 = arith.mulf %597, %596 : vector<8x32xf32>
    %599 = math.tanh %598 : vector<8x32xf32>
    %cst_202 = arith.constant 1.000000e+00 : f32
    %600 = vector.broadcast %cst_202 : f32 to vector<8x32xf32>
    %601 = arith.addf %599, %600 : vector<8x32xf32>
    %cst_203 = arith.constant 5.000000e-01 : f32
    %602 = vector.broadcast %cst_203 : f32 to vector<8x32xf32>
    %603 = arith.mulf %602, %601 : vector<8x32xf32>
    %604 = arith.mulf %593, %519 : vector<8x32xf32>
    %605 = arith.mulf %585, %595 : vector<8x32xf32>
    %606 = arith.addf %604, %605 : vector<8x32xf32>
    %607 = math.tanh %606 : vector<8x32xf32>
    %608 = arith.mulf %603, %607 : vector<8x32xf32>
    %609 = arith.index_cast %c6_i32 : i32 to index
    %c0_204 = arith.constant 0 : index
    %c0_205 = arith.constant 0 : index
    %610 = vector.load %arg6[%609, %c0_204, %c0_205] : memref<8x8x64xf32, #tpu.memory_space<vmem>>, vector<1x8x32xf32>
    %611 = vector.shape_cast %610 : vector<1x8x32xf32> to vector<8x32xf32>
    %612 = vector.shape_cast %575 : vector<8x32xf32> to vector<1x8x32xf32>
    tpu.vector_store %arg6[%609, %c0_204, %c0_205], %612 {strides = array<i32>} : memref<8x8x64xf32, #tpu.memory_space<vmem>>, vector<1x8x32xf32>,
    %c7_i32_206 = arith.constant 7 : i32
    %613 = arith.subi %c7_i32_206, %c6_i32 : i32
    %614 = arith.index_cast %613 : i32 to index
    %c0_207 = arith.constant 0 : index
    %c32_208 = arith.constant 32 : index
    %615 = vector.load %arg6[%614, %c0_207, %c32_208] : memref<8x8x64xf32, #tpu.memory_space<vmem>>, vector<1x8x32xf32>
    %616 = vector.shape_cast %615 : vector<1x8x32xf32> to vector<8x32xf32>
    %617 = vector.shape_cast %608 : vector<8x32xf32> to vector<1x8x32xf32>
    tpu.vector_store %arg6[%614, %c0_207, %c32_208], %617 {strides = array<i32>} : memref<8x8x64xf32, #tpu.memory_space<vmem>>, vector<1x8x32xf32>,
    %c7_i32_209 = arith.constant 7 : i32
    %c8_i32_210 = arith.constant 8 : i32
    %618 = arith.muli %c7_i32_209, %c8_i32_210 : i32
    %619 = tpu.assume_multiple %618, 8 : i32
    %620 = arith.index_cast %619 : i32 to index
    %c0_211 = arith.constant 0 : index
    %621 = vector.load %arg8[%620, %c0_211] : memref<64x256xf32, #tpu.memory_space<vmem>>, vector<8x128xf32>
    %c7_i32_212 = arith.constant 7 : i32
    %622 = arith.subi %c7_i32_212, %c7_i32_209 : i32
    %c8_i32_213 = arith.constant 8 : i32
    %623 = arith.muli %622, %c8_i32_213 : i32
    %624 = tpu.assume_multiple %623, 8 : i32
    %625 = arith.index_cast %624 : i32 to index
    %c128_214 = arith.constant 128 : index
    %626 = vector.load %arg8[%625, %c128_214] : memref<64x256xf32, #tpu.memory_space<vmem>>, vector<8x128xf32>
    %627 = tpu.concatenate %575, %608 in 1 : vector<8x32xf32>, vector<8x32xf32> -> vector<8x64xf32>
    %628 = arith.truncf %627 : vector<8x64xf32> to vector<8x64xbf16>
    %cst_215 = arith.constant dense<0.000000e+00> : vector<8x256xf32>
    %629 = tpu.matmul %628, %7, %cst_215 {dimension_numbers = #tpu.dot_dimension_numbers<[1], [0], [0], [1], [0, 0, 1, 1], [], []>} : vector<8x64xbf16>, vector<64x256xbf16>, vector<8x256xf32> -> vector<8x256xf32>
    %630 = vector.extract_strided_slice %629 {offsets = [0, 0], sizes = [8, 128], strides = [1, 1]} : vector<8x256xf32> to vector<8x128xf32>
    %631 = arith.addf %621, %630 : vector<8x128xf32>
    %632 = vector.extract_strided_slice %631 {offsets = [0, 0], sizes = [8, 32], strides = [1, 1]} : vector<8x128xf32> to vector<8x32xf32>
    %cst_216 = arith.constant 5.000000e-01 : f32
    %633 = vector.broadcast %cst_216 : f32 to vector<8x32xf32>
    %634 = arith.mulf %633, %632 : vector<8x32xf32>
    %635 = math.tanh %634 : vector<8x32xf32>
    %cst_217 = arith.constant 1.000000e+00 : f32
    %636 = vector.broadcast %cst_217 : f32 to vector<8x32xf32>
    %637 = arith.addf %635, %636 : vector<8x32xf32>
    %cst_218 = arith.constant 5.000000e-01 : f32
    %638 = vector.broadcast %cst_218 : f32 to vector<8x32xf32>
    %639 = arith.mulf %638, %637 : vector<8x32xf32>
    %640 = vector.extract_strided_slice %631 {offsets = [0, 32], sizes = [8, 32], strides = [1, 1]} : vector<8x128xf32> to vector<8x32xf32>
    %cst_219 = arith.constant 5.000000e-01 : f32
    %641 = vector.broadcast %cst_219 : f32 to vector<8x32xf32>
    %642 = arith.mulf %641, %640 : vector<8x32xf32>
    %643 = math.tanh %642 : vector<8x32xf32>
    %cst_220 = arith.constant 1.000000e+00 : f32
    %644 = vector.broadcast %cst_220 : f32 to vector<8x32xf32>
    %645 = arith.addf %643, %644 : vector<8x32xf32>
    %cst_221 = arith.constant 5.000000e-01 : f32
    %646 = vector.broadcast %cst_221 : f32 to vector<8x32xf32>
    %647 = arith.mulf %646, %645 : vector<8x32xf32>
    %648 = vector.extract_strided_slice %631 {offsets = [0, 64], sizes = [8, 32], strides = [1, 1]} : vector<8x128xf32> to vector<8x32xf32>
    %649 = math.tanh %648 : vector<8x32xf32>
    %650 = vector.extract_strided_slice %631 {offsets = [0, 96], sizes = [8, 32], strides = [1, 1]} : vector<8x128xf32> to vector<8x32xf32>
    %cst_222 = arith.constant 5.000000e-01 : f32
    %651 = vector.broadcast %cst_222 : f32 to vector<8x32xf32>
    %652 = arith.mulf %651, %650 : vector<8x32xf32>
    %653 = math.tanh %652 : vector<8x32xf32>
    %cst_223 = arith.constant 1.000000e+00 : f32
    %654 = vector.broadcast %cst_223 : f32 to vector<8x32xf32>
    %655 = arith.addf %653, %654 : vector<8x32xf32>
    %cst_224 = arith.constant 5.000000e-01 : f32
    %656 = vector.broadcast %cst_224 : f32 to vector<8x32xf32>
    %657 = arith.mulf %656, %655 : vector<8x32xf32>
    %658 = arith.mulf %647, %573 : vector<8x32xf32>
    %659 = arith.mulf %639, %649 : vector<8x32xf32>
    %660 = arith.addf %658, %659 : vector<8x32xf32>
    %661 = math.tanh %660 : vector<8x32xf32>
    %662 = arith.mulf %657, %661 : vector<8x32xf32>
    %663 = vector.extract_strided_slice %629 {offsets = [0, 128], sizes = [8, 128], strides = [1, 1]} : vector<8x256xf32> to vector<8x128xf32>
    %664 = arith.addf %626, %663 : vector<8x128xf32>
    %665 = vector.extract_strided_slice %664 {offsets = [0, 0], sizes = [8, 32], strides = [1, 1]} : vector<8x128xf32> to vector<8x32xf32>
    %cst_225 = arith.constant 5.000000e-01 : f32
    %666 = vector.broadcast %cst_225 : f32 to vector<8x32xf32>
    %667 = arith.mulf %666, %665 : vector<8x32xf32>
    %668 = math.tanh %667 : vector<8x32xf32>
    %cst_226 = arith.constant 1.000000e+00 : f32
    %669 = vector.broadcast %cst_226 : f32 to vector<8x32xf32>
    %670 = arith.addf %668, %669 : vector<8x32xf32>
    %cst_227 = arith.constant 5.000000e-01 : f32
    %671 = vector.broadcast %cst_227 : f32 to vector<8x32xf32>
    %672 = arith.mulf %671, %670 : vector<8x32xf32>
    %673 = vector.extract_strided_slice %664 {offsets = [0, 32], sizes = [8, 32], strides = [1, 1]} : vector<8x128xf32> to vector<8x32xf32>
    %cst_228 = arith.constant 5.000000e-01 : f32
    %674 = vector.broadcast %cst_228 : f32 to vector<8x32xf32>
    %675 = arith.mulf %674, %673 : vector<8x32xf32>
    %676 = math.tanh %675 : vector<8x32xf32>
    %cst_229 = arith.constant 1.000000e+00 : f32
    %677 = vector.broadcast %cst_229 : f32 to vector<8x32xf32>
    %678 = arith.addf %676, %677 : vector<8x32xf32>
    %cst_230 = arith.constant 5.000000e-01 : f32
    %679 = vector.broadcast %cst_230 : f32 to vector<8x32xf32>
    %680 = arith.mulf %679, %678 : vector<8x32xf32>
    %681 = vector.extract_strided_slice %664 {offsets = [0, 64], sizes = [8, 32], strides = [1, 1]} : vector<8x128xf32> to vector<8x32xf32>
    %682 = math.tanh %681 : vector<8x32xf32>
    %683 = vector.extract_strided_slice %664 {offsets = [0, 96], sizes = [8, 32], strides = [1, 1]} : vector<8x128xf32> to vector<8x32xf32>
    %cst_231 = arith.constant 5.000000e-01 : f32
    %684 = vector.broadcast %cst_231 : f32 to vector<8x32xf32>
    %685 = arith.mulf %684, %683 : vector<8x32xf32>
    %686 = math.tanh %685 : vector<8x32xf32>
    %cst_232 = arith.constant 1.000000e+00 : f32
    %687 = vector.broadcast %cst_232 : f32 to vector<8x32xf32>
    %688 = arith.addf %686, %687 : vector<8x32xf32>
    %cst_233 = arith.constant 5.000000e-01 : f32
    %689 = vector.broadcast %cst_233 : f32 to vector<8x32xf32>
    %690 = arith.mulf %689, %688 : vector<8x32xf32>
    %691 = arith.mulf %680, %606 : vector<8x32xf32>
    %692 = arith.mulf %672, %682 : vector<8x32xf32>
    %693 = arith.addf %691, %692 : vector<8x32xf32>
    %694 = math.tanh %693 : vector<8x32xf32>
    %695 = arith.mulf %690, %694 : vector<8x32xf32>
    %696 = arith.index_cast %c7_i32_209 : i32 to index
    %c0_234 = arith.constant 0 : index
    %c0_235 = arith.constant 0 : index
    %697 = vector.load %arg6[%696, %c0_234, %c0_235] : memref<8x8x64xf32, #tpu.memory_space<vmem>>, vector<1x8x32xf32>
    %698 = vector.shape_cast %697 : vector<1x8x32xf32> to vector<8x32xf32>
    %699 = vector.shape_cast %662 : vector<8x32xf32> to vector<1x8x32xf32>
    tpu.vector_store %arg6[%696, %c0_234, %c0_235], %699 {strides = array<i32>} : memref<8x8x64xf32, #tpu.memory_space<vmem>>, vector<1x8x32xf32>,
    %c7_i32_236 = arith.constant 7 : i32
    %700 = arith.subi %c7_i32_236, %c7_i32_209 : i32
    %701 = arith.index_cast %700 : i32 to index
    %c0_237 = arith.constant 0 : index
    %c32_238 = arith.constant 32 : index
    %702 = vector.load %arg6[%701, %c0_237, %c32_238] : memref<8x8x64xf32, #tpu.memory_space<vmem>>, vector<1x8x32xf32>
    %703 = vector.shape_cast %702 : vector<1x8x32xf32> to vector<8x32xf32>
    %704 = vector.shape_cast %695 : vector<8x32xf32> to vector<1x8x32xf32>
    tpu.vector_store %arg6[%701, %c0_237, %c32_238], %704 {strides = array<i32>} : memref<8x8x64xf32, #tpu.memory_space<vmem>>, vector<1x8x32xf32>,
    %c8_i32_239 = arith.constant 8 : i32
    %c7 = arith.constant 7 : index
    %c0_240 = arith.constant 0 : index
    %c0_241 = arith.constant 0 : index
    %705 = vector.load %arg6[%c7, %c0_240, %c0_241] : memref<8x8x64xf32, #tpu.memory_space<vmem>>, vector<1x8x64xf32>
    %706 = vector.shape_cast %705 : vector<1x8x64xf32> to vector<8x64xf32>
    %707 = arith.truncf %706 : vector<8x64xf32> to vector<8x64xbf16>
    %c0_242 = arith.constant 0 : index
    %c0_243 = arith.constant 0 : index
    %708 = vector.load %arg4[%c0_242, %c0_243] : memref<64x4xbf16, #tpu.memory_space<vmem>>, vector<64x4xbf16>
    %cst_244 = arith.constant dense<0.000000e+00> : vector<8x4xf32>
    %709 = tpu.matmul %707, %708, %cst_244 {dimension_numbers = #tpu.dot_dimension_numbers<[1], [0], [0], [1], [0, 0, 1, 1], [], []>} : vector<8x64xbf16>, vector<64x4xbf16>, vector<8x4xf32> -> vector<8x4xf32>
    %c0_245 = arith.constant 0 : index
    %c0_246 = arith.constant 0 : index
    %710 = vector.load %arg5[%c0_245, %c0_246] : memref<1x4xf32, #tpu.memory_space<vmem>>, vector<1x4xf32>
    %711 = vector.broadcast %710 : vector<1x4xf32> to vector<8x4xf32>
    %712 = arith.addf %709, %711 : vector<8x4xf32>
    %c0_247 = arith.constant 0 : index
    %c0_248 = arith.constant 0 : index
    %713 = vector.load %arg7[%c0_247, %c0_248] : memref<8x4xf32, #tpu.memory_space<vmem>>, vector<8x4xf32>
    tpu.vector_store %arg7[%c0_247, %c0_248], %712 {strides = array<i32>} : memref<8x4xf32, #tpu.memory_space<vmem>>, vector<8x4xf32>,
    return
  }
}

</mosaic_0001>

<llo_original>
// kernel: target_model_forward.2
$region0: #{target_model_forward.2}
  #allocation0 [shape = 'u32[]', space=smem, size = 0x4, offset = 0x4, fixed_abs, tag = 'smem constant byte address 0x4 - core index']
  #allocation1 [shape = 'u32[144,128]{1,0:T(1,128)}', space=vmem, size = 0x12000, scoped, tag = 'internal scratch']
  #allocation2 [shape = 'f32[64,256]{1,0:T(8,128)}', space=vmem, size = 0x10000, scoped, tag = 'scratch operand']
  %s0 = inlined_call_operand.vmem [shape: bf16[64,32], index: 0, kind: input, shape index: {}]
  %s1 = inlined_call_operand.vmem [shape: bf16[32,256], index: 1, kind: input, shape index: {}]
  %s2 = inlined_call_operand.vmem [shape: f32[1,256], index: 2, kind: input, shape index: {}]
  %s3 = inlined_call_operand.vmem [shape: bf16[64,256], index: 3, kind: input, shape index: {}]
  %s4 = inlined_call_operand.vmem [shape: bf16[8,8,64], index: 4, kind: output, shape index: {}]
  %s5 = sld [smem:[#allocation0]]
  $region26: #{target_model_forward.2} parent=0
    _
  %s7 = ssub.s32 1, %s5
  %s8 = scalar_select 0, %s7, %s5
  // Predicated region
  $region2: #{target_model_forward.2} parent=0 // pred_check
    _
  $region3: #{target_model_forward.2} parent=0 // pred_check_branch
    %10 = sbr.rel (0) target = $region5
  $region4: #{target_model_forward.2} parent=0 // pred_region
    _
  $region5: #{target_model_forward.2} parent=0 // pred_fallthru
    _
  // Predicated region
  $region6: #{target_model_forward.2} parent=0 // pred_check
    _
  $region7: #{target_model_forward.2} parent=0 // pred_check_branch
    %12 = sbr.rel (0) target = $region9
  $region8: #{target_model_forward.2} parent=0 // pred_region
    _
  $region9: #{target_model_forward.2} parent=0 // pred_fallthru
    _
  // Predicated region
  $region10: #{target_model_forward.2} parent=0 // pred_check
    _
  $region11: #{target_model_forward.2} parent=0 // pred_check_branch
    %14 = sbr.rel (0) target = $region13
  $region12: #{target_model_forward.2} parent=0 // pred_region
    _
  $region13: #{target_model_forward.2} parent=0 // pred_fallthru
    _
  // Predicated region
  $region14: #{target_model_forward.2} parent=0 // pred_check
    _
  $region15: #{target_model_forward.2} parent=0 // pred_check_branch
    %16 = sbr.rel (0) target = $region17
  $region16: #{target_model_forward.2} parent=0 // pred_region
    _
  $region17: #{target_model_forward.2} parent=0 // pred_fallthru
    _
  %v18 = vld [vmem:[%s0] sm:$0xf]
  %v19 = vld [vmem:[%s0 + $0x4] sm:$0xf]
  %v20 = vld [vmem:[%s0 + $0x8] sm:$0xf]
  %v21 = vld [vmem:[%s0 + $0xc] sm:$0xf]
  %v22 = vld [vmem:[%s0 + $0x10] sm:$0xf]
  %v23 = vld [vmem:[%s0 + $0x14] sm:$0xf]
  %v24 = vld [vmem:[%s0 + $0x18] sm:$0xf]
  %v25 = vld [vmem:[%s0 + $0x1c] sm:$0xf]
  %v26 = vld [vmem:[%s1] sm:$0xff]
  %v27 = vld [vmem:[%s1 + $0x8] sm:$0xff]
  %v28 = vld [vmem:[%s1 + $0x10] sm:$0xff]
  %v29 = vld [vmem:[%s1 + $0x18] sm:$0xff]
  %v30 = vld [vmem:[%s2] sm:$0x3]
  %v32 = vlaneseq
  %v33 = vshrl.u32 %v32, 7
  %v34 = vsub.s32 0, %v33
  %v35 = vrot.slane %v30, %v34
  %v36 = vlaneseq
  %v37 = vshrl.u32 %v36, 7
  %v38 = vsub.s32 1, %v37
  %v39 = vrot.slane %v30, %v38
  %v50 = vunpack.c.l.b16 %v18
  %v51 = vunpack.c.l.b16 %v19
  %v52 = vunpack.c.l.b16 %v20
  %v53 = vunpack.c.l.b16 %v21
  %v54 = vunpack.c.l.b16 %v22
  %v55 = vunpack.c.l.b16 %v23
  %v56 = vunpack.c.l.b16 %v24
  %v57 = vunpack.c.l.b16 %v25
  %v58 = vpack.c.b16 %v51, %v50
  %v59 = vpack.c.b16 %v53, %v52
  %v60 = vpack.c.b16 %v55, %v54
  %v61 = vpack.c.b16 %v57, %v56
  %v66 = vunpack.c.l.b16 %v26
  %v67 = vunpack.c.h.b16 %v26
  %v68 = vunpack.c.l.b16 %v27
  %v69 = vunpack.c.h.b16 %v27
  %v70 = vunpack.c.l.b16 %v28
  %v71 = vunpack.c.h.b16 %v28
  %v72 = vunpack.c.l.b16 %v29
  %v73 = vunpack.c.h.b16 %v29
  %v74 = vpack.c.b16 %v68, %v66
  %v75 = vpack.c.b16 %v69, %v67
  %v76 = vpack.c.b16 %v72, %v70
  %v77 = vpack.c.b16 %v73, %v71
  %vm82 = vcmask 261120
  %v84 = vsel %vm82, %v58, 0
  %v87 = vsel %vm82, %v59, 0
  %v90 = vsel %vm82, %v60, 0
  %v93 = vsel %vm82, %v61, 0
  %95 = vmatprep.subr.bf16.mxu0 %v75
  %96 = vmatpush1.bf16.msra.mxu0 %v74
  %97 = vmatprep.subr.bf16.mxu0 %v77
  %98 = vmatpush1.bf16.msra.mxu0 %v76
  %99 = vmatprep.subr.bf16.mxu0 0
  %100 = vmatpush1.bf16.msra.mxu0 0
  %101 = vmatprep.subr.bf16.mxu0 0
  %102 = vmatpush1.bf16.msra.mxu0 0
  %103 = vmatprep.subr.bf16.mxu0 0
  %104 = vmatpush1.bf16.msra.mxu0 0
  %105 = vmatprep.subr.bf16.mxu0 0
  %106 = vmatpush1.bf16.msra.mxu0 0
  %107 = vmatprep.subr.bf16.mxu0 0
  %108 = vmatpush1.bf16.msra.mxu0 0
  %109 = vmatprep.subr.bf16.mxu0 0
  %110 = vmatpush1.bf16.msra.mxu0 0
  %111 = vmatprep.subr.bf16.mxu0 0
  %112 = vmatpush1.bf16.msra.mxu0 0
  %113 = vmatprep.subr.bf16.mxu0 0
  %114 = vmatpush1.bf16.msra.mxu0 0
  %115 = vmatprep.subr.bf16.mxu0 0
  %116 = vmatpush1.bf16.msra.mxu0 0
  %117 = vmatprep.subr.bf16.mxu0 0
  %118 = vmatpush1.bf16.msra.mxu0 0
  %119 = vmatprep.subr.bf16.mxu0 0
  %120 = vmatpush1.bf16.msra.mxu0 0
  %121 = vmatprep.subr.bf16.mxu0 0
  %122 = vmatpush1.bf16.msra.mxu0 0
  %123 = vmatprep.subr.bf16.mxu0 0
  %124 = vmatpush1.bf16.msra.mxu0 0
  %125 = vmatprep.subr.bf16.mxu0 0
  %126 = vmatpush1.bf16.msra.mxu0 0
  %127 = vmatprep.mubr.bf16.mxu0 0
  %128 = vmatmul.mubr.bf16.gmra.mrb[0].mxu0 %v84
  %v129 = vpop.f32.mrb[0].mxu0
  %v130 = vadd.f32 %v35, %v129
  %v131 = vpop.f32.mrb[0].mxu0
  %v132 = vadd.f32 %v39, %v131
  %v133 = vpop.f32.mrb[0].mxu0
  %v134 = vadd.f32 %v35, %v133
  %v135 = vpop.f32.mrb[0].mxu0
  %v136 = vadd.f32 %v39, %v135
  %137 = vmatprep.mubr.bf16.mxu0 0
  %138 = vmatmul.mubr.bf16.gmra.mrb[0].mxu0 %v87
  %v139 = vpop.f32.mrb[0].mxu0
  %v140 = vadd.f32 %v35, %v139
  %v141 = vpop.f32.mrb[0].mxu0
  %v142 = vadd.f32 %v39, %v141
  %v143 = vpop.f32.mrb[0].mxu0
  %v144 = vadd.f32 %v35, %v143
  %v145 = vpop.f32.mrb[0].mxu0
  %v146 = vadd.f32 %v39, %v145
  %147 = vmatprep.mubr.bf16.mxu0 0
  %148 = vmatmul.mubr.bf16.gmra.mrb[0].mxu0 %v90
  %v149 = vpop.f32.mrb[0].mxu0
  %v150 = vadd.f32 %v35, %v149
  %v151 = vpop.f32.mrb[0].mxu0
  %v152 = vadd.f32 %v39, %v151
  %v153 = vpop.f32.mrb[0].mxu0
  %v154 = vadd.f32 %v35, %v153
  %v155 = vpop.f32.mrb[0].mxu0
  %v156 = vadd.f32 %v39, %v155
  %157 = vmatprep.mubr.bf16.mxu0 0
  %158 = vmatmul.mubr.bf16.gmra.mrb[0].mxu0 %v93
  %v159 = vpop.f32.mrb[0].mxu0
  %v160 = vadd.f32 %v35, %v159
  %v161 = vpop.f32.mrb[0].mxu0
  %v162 = vadd.f32 %v39, %v161
  %v163 = vpop.f32.mrb[0].mxu0
  %v164 = vadd.f32 %v35, %v163
  %v165 = vpop.f32.mrb[0].mxu0
  %v166 = vadd.f32 %v39, %v165
  %167 = vdwg.mxu0
  %168 = vst [vmem:[#allocation2] sm:$0xff] %v130
  %169 = vst [vmem:[#allocation2 + $0x8] sm:$0xff] %v132
  %170 = vst [vmem:[#allocation2 + $0x10] sm:$0xff] %v134
  %171 = vst [vmem:[#allocation2 + $0x18] sm:$0xff] %v136
  %172 = vst [vmem:[#allocation2 + $0x20] sm:$0xff] %v140
  %173 = vst [vmem:[#allocation2 + $0x28] sm:$0xff] %v142
  %174 = vst [vmem:[#allocation2 + $0x30] sm:$0xff] %v144
  %175 = vst [vmem:[#allocation2 + $0x38] sm:$0xff] %v146
  %176 = vst [vmem:[#allocation2 + $0x40] sm:$0xff] %v150
  %177 = vst [vmem:[#allocation2 + $0x48] sm:$0xff] %v152
  %178 = vst [vmem:[#allocation2 + $0x50] sm:$0xff] %v154
  %179 = vst [vmem:[#allocation2 + $0x58] sm:$0xff] %v156
  %180 = vst [vmem:[#allocation2 + $0x60] sm:$0xff] %v160
  %181 = vst [vmem:[#allocation2 + $0x68] sm:$0xff] %v162
  %182 = vst [vmem:[#allocation2 + $0x70] sm:$0xff] %v164
  %183 = vst [vmem:[#allocation2 + $0x78] sm:$0xff] %v166
  %v184 = vld [vmem:[%s3] sm:$0xff]
  %v185 = vld [vmem:[%s3 + $0x8] sm:$0xff]
  %v186 = vld [vmem:[%s3 + $0x10] sm:$0xff]
  %v187 = vld [vmem:[%s3 + $0x18] sm:$0xff]
  %v188 = vld [vmem:[%s3 + $0x20] sm:$0xff]
  %v189 = vld [vmem:[%s3 + $0x28] sm:$0xff]
  %v190 = vld [vmem:[%s3 + $0x30] sm:$0xff]
  %v191 = vld [vmem:[%s3 + $0x38] sm:$0xff]
  %s192 = smul.u32 0, 2
  %s193 = smul.addr %s192, 8
  %s194 = scalar_lea.vmem [#allocation2], %s193
  %v195 = vld [vmem:[%s194] sm:$0xff]
  %s196 = smul.u32 7, 2
  %s197 = smul.addr %s196, 8
  %s198 = scalar_lea.vmem [#allocation2], %s197
  %v199 = vld [vmem:[%s198 + $0x8] sm:$0xff]
  %v200 = vpack.c.bf16 0.0, 0.0
  %v209 = vunpack.c.l.b16 %v184
  %v210 = vunpack.c.h.b16 %v184
  %v211 = vunpack.c.l.b16 %v185
  %v212 = vunpack.c.h.b16 %v185
  %v213 = vunpack.c.l.b16 %v186
  %v214 = vunpack.c.h.b16 %v186
  %v215 = vunpack.c.l.b16 %v187
  %v216 = vunpack.c.h.b16 %v187
  %v217 = vunpack.c.l.b16 %v188
  %v218 = vunpack.c.h.b16 %v188
  %v219 = vunpack.c.l.b16 %v189
  %v220 = vunpack.c.h.b16 %v189
  %v221 = vunpack.c.l.b16 %v190
  %v222 = vunpack.c.h.b16 %v190
  %v223 = vunpack.c.l.b16 %v191
  %v224 = vunpack.c.h.b16 %v191
  %v225 = vpack.c.b16 %v211, %v209
  %v226 = vpack.c.b16 %v212, %v210
  %v227 = vpack.c.b16 %v215, %v213
  %v228 = vpack.c.b16 %v216, %v214
  %v229 = vpack.c.b16 %v219, %v217
  %v230 = vpack.c.b16 %v220, %v218
  %v231 = vpack.c.b16 %v223, %v221
  %v232 = vpack.c.b16 %v224, %v222
  %vm241 = vcmask 523264
  %v243 = vsel %vm241, %v200, 0
  %245 = vmatprep.subr.bf16.mxu0 %v226
  %246 = vmatpush1.bf16.msra.mxu0 %v225
  %247 = vmatprep.subr.bf16.mxu0 %v228
  %248 = vmatpush1.bf16.msra.mxu0 %v227
  %249 = vmatprep.subr.bf16.mxu0 %v230
  %250 = vmatpush1.bf16.msra.mxu0 %v229
  %251 = vmatprep.subr.bf16.mxu0 %v232
  %252 = vmatpush1.bf16.msra.mxu0 %v231
  %253 = vmatprep.subr.bf16.mxu0 0
  %254 = vmatpush1.bf16.msra.mxu0 0
  %255 = vmatprep.subr.bf16.mxu0 0
  %256 = vmatpush1.bf16.msra.mxu0 0
  %257 = vmatprep.subr.bf16.mxu0 0
  %258 = vmatpush1.bf16.msra.mxu0 0
  %259 = vmatprep.subr.bf16.mxu0 0
  %260 = vmatpush1.bf16.msra.mxu0 0
  %261 = vmatprep.subr.bf16.mxu0 0
  %262 = vmatpush1.bf16.msra.mxu0 0
  %263 = vmatprep.subr.bf16.mxu0 0
  %264 = vmatpush1.bf16.msra.mxu0 0
  %265 = vmatprep.subr.bf16.mxu0 0
  %266 = vmatpush1.bf16.msra.mxu0 0
  %267 = vmatprep.subr.bf16.mxu0 0
  %268 = vmatpush1.bf16.msra.mxu0 0
  %269 = vmatprep.subr.bf16.mxu0 0
  %270 = vmatpush1.bf16.msra.mxu0 0
  %271 = vmatprep.subr.bf16.mxu0 0
  %272 = vmatpush1.bf16.msra.mxu0 0
  %273 = vmatprep.subr.bf16.mxu0 0
  %274 = vmatpush1.bf16.msra.mxu0 0
  %275 = vmatprep.subr.bf16.mxu0 0
  %276 = vmatpush1.bf16.msra.mxu0 0
  %277 = vmatprep.mubr.bf16.mxu0 0
  %278 = vmatmul.mubr.bf16.gmra.mrb[0].mxu0 %v243
  %v279 = vpop.f32.mrb[0].mxu0
  %v280 = vadd.f32 0.0, %v279
  %v281 = vpop.f32.mrb[0].mxu0
  %v282 = vadd.f32 0.0, %v281
  %v283 = vpop.f32.mrb[0].mxu0
  %v284 = vpop.f32.mrb[0].mxu0
  %285 = vdwg.mxu0
  %v286 = vadd.f32 %v195, %v280
  %v287 = vmul.f32 %v286, 0.5
  %v288 = vtanh.pop %v287
  %v289 = vadd.f32 %v288, 1.0
  %v290 = vmul.f32 %v289, 0.5
  %v291 = vtanh.pop %v286
  %v292 = vmul.f32 %v290, 0.0
  %294 = vrot.lane.b32.xlu0 %v291, 64
  %v295 = vpop.permute.xlu0 %294
  %v297 = vmul.f32 %v290, %v295
  %299 = vrot.lane.b32.xlu0 %v297, 32
  %v300 = vpop.permute.xlu0 %299
  %v302 = vadd.f32 %v292, %v300
  %v303 = vtanh.pop %v302
  %305 = vrot.lane.b32.xlu0 %v303, 64
  %v306 = vpop.permute.xlu0 %305
  %v308 = vmul.f32 %v290, %v306
  %v309 = vadd.f32 %v199, %v282
  %v310 = vmul.f32 %v309, 0.5
  %v311 = vtanh.pop %v310
  %v312 = vadd.f32 %v311, 1.0
  %v313 = vmul.f32 %v312, 0.5
  %v314 = vtanh.pop %v309
  %v315 = vmul.f32 %v313, 0.0
  %317 = vrot.lane.b32.xlu0 %v314, 64
  %v318 = vpop.permute.xlu0 %317
  %v320 = vmul.f32 %v313, %v318
  %322 = vrot.lane.b32.xlu0 %v320, 32
  %v323 = vpop.permute.xlu0 %322
  %v325 = vadd.f32 %v315, %v323
  %v326 = vtanh.pop %v325
  %328 = vrot.lane.b32.xlu0 %v326, 64
  %v329 = vpop.permute.xlu0 %328
  %v331 = vmul.f32 %v313, %v329
  %v332 = vpack.c.bf16 %v308, %v308
  %v334 = vunpack.c.l.b16 %v332
  %v335 = vpack.c.b16 %v334, %v334
  %336 = vrot.lane.b32.xlu0 %v335, 32
  %v337 = vpop.permute.xlu0 %336
  %vm339 = vcmask 257024
  %340 = vst.msk [vmem:[%s4] sm:$0xf] %vm339, %v337
  %v341 = vpack.c.bf16 %v331, %v331
  %v343 = vunpack.c.l.b16 %v341
  %v344 = vpack.c.b16 %v343, %v343
  %345 = vrot.lane.b32.xlu0 %v344, 64
  %v346 = vpop.permute.xlu0 %345
  %s348 = scalar_lea.vmem %s4, 28
  %vm349 = vcmask 519424
  %350 = vst.msk [vmem:[%s348] sm:$0xf] %vm349, %v346
  %s351 = smul.u32 1, 2
  %s352 = smul.addr %s351, 8
  %s353 = scalar_lea.vmem [#allocation2], %s352
  %v354 = vld [vmem:[%s353] sm:$0xff]
  %s355 = smul.u32 6, 2
  %s356 = smul.addr %s355, 8
  %s357 = scalar_lea.vmem [#allocation2], %s356
  %v358 = vld [vmem:[%s357 + $0x8] sm:$0xff]
  %360 = vrot.lane.b32.xlu0 %v308, 32
  %v361 = vpop.permute.xlu0 %360
  %364 = vrot.lane.b32.xlu0 %v331, 64
  %v365 = vpop.permute.xlu0 %364
  %v367 = vsel %vm82, %v361, %v365
  %v368 = vpack.c.bf16 %v367, %v367
  %v370 = vsel %vm241, %v368, 0
  %372 = vmatprep.subr.bf16.mxu0 %v226
  %373 = vmatpush1.bf16.msra.mxu0 %v225
  %374 = vmatprep.subr.bf16.mxu0 %v228
  %375 = vmatpush1.bf16.msra.mxu0 %v227
  %376 = vmatprep.subr.bf16.mxu0 %v230
  %377 = vmatpush1.bf16.msra.mxu0 %v229
  %378 = vmatprep.subr.bf16.mxu0 %v232
  %379 = vmatpush1.bf16.msra.mxu0 %v231
  %380 = vmatprep.subr.bf16.mxu0 0
  %381 = vmatpush1.bf16.msra.mxu0 0
  %382 = vmatprep.subr.bf16.mxu0 0
  %383 = vmatpush1.bf16.msra.mxu0 0
  %384 = vmatprep.subr.bf16.mxu0 0
  %385 = vmatpush1.bf16.msra.mxu0 0
  %386 = vmatprep.subr.bf16.mxu0 0
  %387 = vmatpush1.bf16.msra.mxu0 0
  %388 = vmatprep.subr.bf16.mxu0 0
  %389 = vmatpush1.bf16.msra.mxu0 0
  %390 = vmatprep.subr.bf16.mxu0 0
  %391 = vmatpush1.bf16.msra.mxu0 0
  %392 = vmatprep.subr.bf16.mxu0 0
  %393 = vmatpush1.bf16.msra.mxu0 0
  %394 = vmatprep.subr.bf16.mxu0 0
  %395 = vmatpush1.bf16.msra.mxu0 0
  %396 = vmatprep.subr.bf16.mxu0 0
  %397 = vmatpush1.bf16.msra.mxu0 0
  %398 = vmatprep.subr.bf16.mxu0 0
  %399 = vmatpush1.bf16.msra.mxu0 0
  %400 = vmatprep.subr.bf16.mxu0 0
  %401 = vmatpush1.bf16.msra.mxu0 0
  %402 = vmatprep.subr.bf16.mxu0 0
  %403 = vmatpush1.bf16.msra.mxu0 0
  %404 = vmatprep.mubr.bf16.mxu0 0
  %405 = vmatmul.mubr.bf16.gmra.mrb[0].mxu0 %v370
  %v406 = vpop.f32.mrb[0].mxu0
  %v407 = vadd.f32 0.0, %v406
  %v408 = vpop.f32.mrb[0].mxu0
  %v409 = vadd.f32 0.0, %v408
  %v410 = vpop.f32.mrb[0].mxu0
  %v411 = vpop.f32.mrb[0].mxu0
  %412 = vdwg.mxu0
  %v413 = vadd.f32 %v354, %v407
  %v414 = vmul.f32 %v413, 0.5
  %v415 = vtanh.pop %v414
  %v416 = vadd.f32 %v415, 1.0
  %v417 = vmul.f32 %v416, 0.5
  %v418 = vtanh.pop %v413
  %v419 = vmul.f32 %v417, %v302
  %421 = vrot.lane.b32.xlu0 %v418, 64
  %v422 = vpop.permute.xlu0 %421
  %v424 = vmul.f32 %v417, %v422
  %426 = vrot.lane.b32.xlu0 %v424, 32
  %v427 = vpop.permute.xlu0 %426
  %v429 = vadd.f32 %v419, %v427
  %v430 = vtanh.pop %v429
  %432 = vrot.lane.b32.xlu0 %v430, 64
  %v433 = vpop.permute.xlu0 %432
  %v435 = vmul.f32 %v417, %v433
  %v436 = vadd.f32 %v358, %v409
  %v437 = vmul.f32 %v436, 0.5
  %v438 = vtanh.pop %v437
  %v439 = vadd.f32 %v438, 1.0
  %v440 = vmul.f32 %v439, 0.5
  %v441 = vtanh.pop %v436
  %v442 = vmul.f32 %v440, %v325
  %444 = vrot.lane.b32.xlu0 %v441, 64
  %v445 = vpop.permute.xlu0 %444
  %v447 = vmul.f32 %v440, %v445
  %449 = vrot.lane.b32.xlu0 %v447, 32
  %v450 = vpop.permute.xlu0 %449
  %v452 = vadd.f32 %v442, %v450
  %v453 = vtanh.pop %v452
  %455 = vrot.lane.b32.xlu0 %v453, 64
  %v456 = vpop.permute.xlu0 %455
  %v458 = vmul.f32 %v440, %v456
  %v459 = vpack.c.bf16 %v435, %v435
  %v461 = vunpack.c.l.b16 %v459
  %v462 = vpack.c.b16 %v461, %v461
  %463 = vrot.lane.b32.xlu0 %v462, 32
  %v464 = vpop.permute.xlu0 %463
  %s466 = scalar_lea.vmem %s4, 4
  %467 = vst.msk [vmem:[%s466] sm:$0xf] %vm339, %v464
  %v468 = vpack.c.bf16 %v458, %v458
  %v470 = vunpack.c.l.b16 %v468
  %v471 = vpack.c.b16 %v470, %v470
  %472 = vrot.lane.b32.xlu0 %v471, 64
  %v473 = vpop.permute.xlu0 %472
  %s475 = scalar_lea.vmem %s4, 24
  %476 = vst.msk [vmem:[%s475] sm:$0xf] %vm349, %v473
  %s477 = smul.u32 2, 2
  %s478 = smul.addr %s477, 8
  %s479 = scalar_lea.vmem [#allocation2], %s478
  %v480 = vld [vmem:[%s479] sm:$0xff]
  %s481 = smul.u32 5, 2
  %s482 = smul.addr %s481, 8
  %s483 = scalar_lea.vmem [#allocation2], %s482
  %v484 = vld [vmem:[%s483 + $0x8] sm:$0xff]
  %486 = vrot.lane.b32.xlu0 %v435, 32
  %v487 = vpop.permute.xlu0 %486
  %490 = vrot.lane.b32.xlu0 %v458, 64
  %v491 = vpop.permute.xlu0 %490
  %v493 = vsel %vm82, %v487, %v491
  %v494 = vpack.c.bf16 %v493, %v493
  %v496 = vsel %vm241, %v494, 0
  %498 = vmatprep.subr.bf16.mxu0 %v226
  %499 = vmatpush1.bf16.msra.mxu0 %v225
  %500 = vmatprep.subr.bf16.mxu0 %v228
  %501 = vmatpush1.bf16.msra.mxu0 %v227
  %502 = vmatprep.subr.bf16.mxu0 %v230
  %503 = vmatpush1.bf16.msra.mxu0 %v229
  %504 = vmatprep.subr.bf16.mxu0 %v232
  %505 = vmatpush1.bf16.msra.mxu0 %v231
  %506 = vmatprep.subr.bf16.mxu0 0
  %507 = vmatpush1.bf16.msra.mxu0 0
  %508 = vmatprep.subr.bf16.mxu0 0
  %509 = vmatpush1.bf16.msra.mxu0 0
  %510 = vmatprep.subr.bf16.mxu0 0
  %511 = vmatpush1.bf16.msra.mxu0 0
  %512 = vmatprep.subr.bf16.mxu0 0
  %513 = vmatpush1.bf16.msra.mxu0 0
  %514 = vmatprep.subr.bf16.mxu0 0
  %515 = vmatpush1.bf16.msra.mxu0 0
  %516 = vmatprep.subr.bf16.mxu0 0
  %517 = vmatpush1.bf16.msra.mxu0 0
  %518 = vmatprep.subr.bf16.mxu0 0
  %519 = vmatpush1.bf16.msra.mxu0 0
  %520 = vmatprep.subr.bf16.mxu0 0
  %521 = vmatpush1.bf16.msra.mxu0 0
  %522 = vmatprep.subr.bf16.mxu0 0
  %523 = vmatpush1.bf16.msra.mxu0 0
  %524 = vmatprep.subr.bf16.mxu0 0
  %525 = vmatpush1.bf16.msra.mxu0 0
  %526 = vmatprep.subr.bf16.mxu0 0
  %527 = vmatpush1.bf16.msra.mxu0 0
  %528 = vmatprep.subr.bf16.mxu0 0
  %529 = vmatpush1.bf16.msra.mxu0 0
  %530 = vmatprep.mubr.bf16.mxu0 0
  %531 = vmatmul.mubr.bf16.gmra.mrb[0].mxu0 %v496
  %v532 = vpop.f32.mrb[0].mxu0
  %v533 = vadd.f32 0.0, %v532
  %v534 = vpop.f32.mrb[0].mxu0
  %v535 = vadd.f32 0.0, %v534
  %v536 = vpop.f32.mrb[0].mxu0
  %v537 = vpop.f32.mrb[0].mxu0
  %538 = vdwg.mxu0
  %v539 = vadd.f32 %v480, %v533
  %v540 = vmul.f32 %v539, 0.5
  %v541 = vtanh.pop %v540
  %v542 = vadd.f32 %v541, 1.0
  %v543 = vmul.f32 %v542, 0.5
  %v544 = vtanh.pop %v539
  %v545 = vmul.f32 %v543, %v429
  %547 = vrot.lane.b32.xlu0 %v544, 64
  %v548 = vpop.permute.xlu0 %547
  %v550 = vmul.f32 %v543, %v548
  %552 = vrot.lane.b32.xlu0 %v550, 32
  %v553 = vpop.permute.xlu0 %552
  %v555 = vadd.f32 %v545, %v553
  %v556 = vtanh.pop %v555
  %558 = vrot.lane.b32.xlu0 %v556, 64
  %v559 = vpop.permute.xlu0 %558
  %v561 = vmul.f32 %v543, %v559
  %v562 = vadd.f32 %v484, %v535
  %v563 = vmul.f32 %v562, 0.5
  %v564 = vtanh.pop %v563
  %v565 = vadd.f32 %v564, 1.0
  %v566 = vmul.f32 %v565, 0.5
  %v567 = vtanh.pop %v562
  %v568 = vmul.f32 %v566, %v452
  %570 = vrot.lane.b32.xlu0 %v567, 64
  %v571 = vpop.permute.xlu0 %570
  %v573 = vmul.f32 %v566, %v571
  %575 = vrot.lane.b32.xlu0 %v573, 32
  %v576 = vpop.permute.xlu0 %575
  %v578 = vadd.f32 %v568, %v576
  %v579 = vtanh.pop %v578
  %581 = vrot.lane.b32.xlu0 %v579, 64
  %v582 = vpop.permute.xlu0 %581
  %v584 = vmul.f32 %v566, %v582
  %v585 = vpack.c.bf16 %v561, %v561
  %v587 = vunpack.c.l.b16 %v585
  %v588 = vpack.c.b16 %v587, %v587
  %589 = vrot.lane.b32.xlu0 %v588, 32
  %v590 = vpop.permute.xlu0 %589
  %s592 = scalar_lea.vmem %s4, 8
  %593 = vst.msk [vmem:[%s592] sm:$0xf] %vm339, %v590
  %v594 = vpack.c.bf16 %v584, %v584
  %v596 = vunpack.c.l.b16 %v594
  %v597 = vpack.c.b16 %v596, %v596
  %598 = vrot.lane.b32.xlu0 %v597, 64
  %v599 = vpop.permute.xlu0 %598
  %s601 = scalar_lea.vmem %s4, 20
  %602 = vst.msk [vmem:[%s601] sm:$0xf] %vm349, %v599
  %s603 = smul.u32 3, 2
  %s604 = smul.addr %s603, 8
  %s605 = scalar_lea.vmem [#allocation2], %s604
  %v606 = vld [vmem:[%s605] sm:$0xff]
  %s607 = smul.u32 4, 2
  %s608 = smul.addr %s607, 8
  %s609 = scalar_lea.vmem [#allocation2], %s608
  %v610 = vld [vmem:[%s609 + $0x8] sm:$0xff]
  %612 = vrot.lane.b32.xlu0 %v561, 32
  %v613 = vpop.permute.xlu0 %612
  %616 = vrot.lane.b32.xlu0 %v584, 64
  %v617 = vpop.permute.xlu0 %616
  %v619 = vsel %vm82, %v613, %v617
  %v620 = vpack.c.bf16 %v619, %v619
  %v622 = vsel %vm241, %v620, 0
  %624 = vmatprep.subr.bf16.mxu0 %v226
  %625 = vmatpush1.bf16.msra.mxu0 %v225
  %626 = vmatprep.subr.bf16.mxu0 %v228
  %627 = vmatpush1.bf16.msra.mxu0 %v227
  %628 = vmatprep.subr.bf16.mxu0 %v230
  %629 = vmatpush1.bf16.msra.mxu0 %v229
  %630 = vmatprep.subr.bf16.mxu0 %v232
  %631 = vmatpush1.bf16.msra.mxu0 %v231
  %632 = vmatprep.subr.bf16.mxu0 0
  %633 = vmatpush1.bf16.msra.mxu0 0
  %634 = vmatprep.subr.bf16.mxu0 0
  %635 = vmatpush1.bf16.msra.mxu0 0
  %636 = vmatprep.subr.bf16.mxu0 0
  %637 = vmatpush1.bf16.msra.mxu0 0
  %638 = vmatprep.subr.bf16.mxu0 0
  %639 = vmatpush1.bf16.msra.mxu0 0
  %640 = vmatprep.subr.bf16.mxu0 0
  %641 = vmatpush1.bf16.msra.mxu0 0
  %642 = vmatprep.subr.bf16.mxu0 0
  %643 = vmatpush1.bf16.msra.mxu0 0
  %644 = vmatprep.subr.bf16.mxu0 0
  %645 = vmatpush1.bf16.msra.mxu0 0
  %646 = vmatprep.subr.bf16.mxu0 0
  %647 = vmatpush1.bf16.msra.mxu0 0
  %648 = vmatprep.subr.bf16.mxu0 0
  %649 = vmatpush1.bf16.msra.mxu0 0
  %650 = vmatprep.subr.bf16.mxu0 0
  %651 = vmatpush1.bf16.msra.mxu0 0
  %652 = vmatprep.subr.bf16.mxu0 0
  %653 = vmatpush1.bf16.msra.mxu0 0
  %654 = vmatprep.subr.bf16.mxu0 0
  %655 = vmatpush1.bf16.msra.mxu0 0
  %656 = vmatprep.mubr.bf16.mxu0 0
  %657 = vmatmul.mubr.bf16.gmra.mrb[0].mxu0 %v622
  %v658 = vpop.f32.mrb[0].mxu0
  %v659 = vadd.f32 0.0, %v658
  %v660 = vpop.f32.mrb[0].mxu0
  %v661 = vadd.f32 0.0, %v660
  %v662 = vpop.f32.mrb[0].mxu0
  %v663 = vpop.f32.mrb[0].mxu0
  %664 = vdwg.mxu0
  %v665 = vadd.f32 %v606, %v659
  %v666 = vmul.f32 %v665, 0.5
  %v667 = vtanh.pop %v666
  %v668 = vadd.f32 %v667, 1.0
  %v669 = vmul.f32 %v668, 0.5
  %v670 = vtanh.pop %v665
  %v671 = vmul.f32 %v669, %v555
  %673 = vrot.lane.b32.xlu0 %v670, 64
  %v674 = vpop.permute.xlu0 %673
  %v676 = vmul.f32 %v669, %v674
  %678 = vrot.lane.b32.xlu0 %v676, 32
  %v679 = vpop.permute.xlu0 %678
  %v681 = vadd.f32 %v671, %v679
  %v682 = vtanh.pop %v681
  %684 = vrot.lane.b32.xlu0 %v682, 64
  %v685 = vpop.permute.xlu0 %684
  %v687 = vmul.f32 %v669, %v685
  %v688 = vadd.f32 %v610, %v661
  %v689 = vmul.f32 %v688, 0.5
  %v690 = vtanh.pop %v689
  %v691 = vadd.f32 %v690, 1.0
  %v692 = vmul.f32 %v691, 0.5
  %v693 = vtanh.pop %v688
  %v694 = vmul.f32 %v692, %v578
  %696 = vrot.lane.b32.xlu0 %v693, 64
  %v697 = vpop.permute.xlu0 %696
  %v699 = vmul.f32 %v692, %v697
  %701 = vrot.lane.b32.xlu0 %v699, 32
  %v702 = vpop.permute.xlu0 %701
  %v704 = vadd.f32 %v694, %v702
  %v705 = vtanh.pop %v704
  %707 = vrot.lane.b32.xlu0 %v705, 64
  %v708 = vpop.permute.xlu0 %707
  %v710 = vmul.f32 %v692, %v708
  %v711 = vpack.c.bf16 %v687, %v687
  %v713 = vunpack.c.l.b16 %v711
  %v714 = vpack.c.b16 %v713, %v713
  %715 = vrot.lane.b32.xlu0 %v714, 32
  %v716 = vpop.permute.xlu0 %715
  %s718 = scalar_lea.vmem %s4, 12
  %719 = vst.msk [vmem:[%s718] sm:$0xf] %vm339, %v716
  %v720 = vpack.c.bf16 %v710, %v710
  %v722 = vunpack.c.l.b16 %v720
  %v723 = vpack.c.b16 %v722, %v722
  %724 = vrot.lane.b32.xlu0 %v723, 64
  %v725 = vpop.permute.xlu0 %724
  %s727 = scalar_lea.vmem %s4, 16
  %728 = vst.msk [vmem:[%s727] sm:$0xf] %vm349, %v725
  %v729 = vld [vmem:[%s609] sm:$0xff]
  %v730 = vld [vmem:[%s605 + $0x8] sm:$0xff]
  %732 = vrot.lane.b32.xlu0 %v687, 32
  %v733 = vpop.permute.xlu0 %732
  %736 = vrot.lane.b32.xlu0 %v710, 64
  %v737 = vpop.permute.xlu0 %736
  %v739 = vsel %vm82, %v733, %v737
  %v740 = vpack.c.bf16 %v739, %v739
  %v742 = vsel %vm241, %v740, 0
  %744 = vmatprep.subr.bf16.mxu0 %v226
  %745 = vmatpush1.bf16.msra.mxu0 %v225
  %746 = vmatprep.subr.bf16.mxu0 %v228
  %747 = vmatpush1.bf16.msra.mxu0 %v227
  %748 = vmatprep.subr.bf16.mxu0 %v230
  %749 = vmatpush1.bf16.msra.mxu0 %v229
  %750 = vmatprep.subr.bf16.mxu0 %v232
  %751 = vmatpush1.bf16.msra.mxu0 %v231
  %752 = vmatprep.subr.bf16.mxu0 0
  %753 = vmatpush1.bf16.msra.mxu0 0
  %754 = vmatprep.subr.bf16.mxu0 0
  %755 = vmatpush1.bf16.msra.mxu0 0
  %756 = vmatprep.subr.bf16.mxu0 0
  %757 = vmatpush1.bf16.msra.mxu0 0
  %758 = vmatprep.subr.bf16.mxu0 0
  %759 = vmatpush1.bf16.msra.mxu0 0
  %760 = vmatprep.subr.bf16.mxu0 0
  %761 = vmatpush1.bf16.msra.mxu0 0
  %762 = vmatprep.subr.bf16.mxu0 0
  %763 = vmatpush1.bf16.msra.mxu0 0
  %764 = vmatprep.subr.bf16.mxu0 0
  %765 = vmatpush1.bf16.msra.mxu0 0
  %766 = vmatprep.subr.bf16.mxu0 0
  %767 = vmatpush1.bf16.msra.mxu0 0
  %768 = vmatprep.subr.bf16.mxu0 0
  %769 = vmatpush1.bf16.msra.mxu0 0
  %770 = vmatprep.subr.bf16.mxu0 0
  %771 = vmatpush1.bf16.msra.mxu0 0
  %772 = vmatprep.subr.bf16.mxu0 0
  %773 = vmatpush1.bf16.msra.mxu0 0
  %774 = vmatprep.subr.bf16.mxu0 0
  %775 = vmatpush1.bf16.msra.mxu0 0
  %776 = vmatprep.mubr.bf16.mxu0 0
  %777 = vmatmul.mubr.bf16.gmra.mrb[0].mxu0 %v742
  %v778 = vpop.f32.mrb[0].mxu0
  %v779 = vadd.f32 0.0, %v778
  %v780 = vpop.f32.mrb[0].mxu0
  %v781 = vadd.f32 0.0, %v780
  %v782 = vpop.f32.mrb[0].mxu0
  %v783 = vpop.f32.mrb[0].mxu0
  %784 = vdwg.mxu0
  %v785 = vadd.f32 %v729, %v779
  %v786 = vmul.f32 %v785, 0.5
  %v787 = vtanh.pop %v786
  %v788 = vadd.f32 %v787, 1.0
  %v789 = vmul.f32 %v788, 0.5
  %v790 = vtanh.pop %v785
  %v791 = vmul.f32 %v789, %v681
  %793 = vrot.lane.b32.xlu0 %v790, 64
  %v794 = vpop.permute.xlu0 %793
  %v796 = vmul.f32 %v789, %v794
  %798 = vrot.lane.b32.xlu0 %v796, 32
  %v799 = vpop.permute.xlu0 %798
  %v801 = vadd.f32 %v791, %v799
  %v802 = vtanh.pop %v801
  %804 = vrot.lane.b32.xlu0 %v802, 64
  %v805 = vpop.permute.xlu0 %804
  %v807 = vmul.f32 %v789, %v805
  %v808 = vadd.f32 %v730, %v781
  %v809 = vmul.f32 %v808, 0.5
  %v810 = vtanh.pop %v809
  %v811 = vadd.f32 %v810, 1.0
  %v812 = vmul.f32 %v811, 0.5
  %v813 = vtanh.pop %v808
  %v814 = vmul.f32 %v812, %v704
  %816 = vrot.lane.b32.xlu0 %v813, 64
  %v817 = vpop.permute.xlu0 %816
  %v819 = vmul.f32 %v812, %v817
  %821 = vrot.lane.b32.xlu0 %v819, 32
  %v822 = vpop.permute.xlu0 %821
  %v824 = vadd.f32 %v814, %v822
  %v825 = vtanh.pop %v824
  %827 = vrot.lane.b32.xlu0 %v825, 64
  %v828 = vpop.permute.xlu0 %827
  %v830 = vmul.f32 %v812, %v828
  %v831 = vpack.c.bf16 %v807, %v807
  %v833 = vunpack.c.l.b16 %v831
  %v834 = vpack.c.b16 %v833, %v833
  %835 = vrot.lane.b32.xlu0 %v834, 32
  %v836 = vpop.permute.xlu0 %835
  %838 = vst.msk [vmem:[%s727] sm:$0xf] %vm339, %v836
  %v839 = vpack.c.bf16 %v830, %v830
  %v841 = vunpack.c.l.b16 %v839
  %v842 = vpack.c.b16 %v841, %v841
  %843 = vrot.lane.b32.xlu0 %v842, 64
  %v844 = vpop.permute.xlu0 %843
  %846 = vst.msk [vmem:[%s718] sm:$0xf] %vm349, %v844
  %v847 = vld [vmem:[%s483] sm:$0xff]
  %v848 = vld [vmem:[%s479 + $0x8] sm:$0xff]
  %850 = vrot.lane.b32.xlu0 %v807, 32
  %v851 = vpop.permute.xlu0 %850
  %854 = vrot.lane.b32.xlu0 %v830, 64
  %v855 = vpop.permute.xlu0 %854
  %v857 = vsel %vm82, %v851, %v855
  %v858 = vpack.c.bf16 %v857, %v857
  %v860 = vsel %vm241, %v858, 0
  %862 = vmatprep.subr.bf16.mxu0 %v226
  %863 = vmatpush1.bf16.msra.mxu0 %v225
  %864 = vmatprep.subr.bf16.mxu0 %v228
  %865 = vmatpush1.bf16.msra.mxu0 %v227
  %866 = vmatprep.subr.bf16.mxu0 %v230
  %867 = vmatpush1.bf16.msra.mxu0 %v229
  %868 = vmatprep.subr.bf16.mxu0 %v232
  %869 = vmatpush1.bf16.msra.mxu0 %v231
  %870 = vmatprep.subr.bf16.mxu0 0
  %871 = vmatpush1.bf16.msra.mxu0 0
  %872 = vmatprep.subr.bf16.mxu0 0
  %873 = vmatpush1.bf16.msra.mxu0 0
  %874 = vmatprep.subr.bf16.mxu0 0
  %875 = vmatpush1.bf16.msra.mxu0 0
  %876 = vmatprep.subr.bf16.mxu0 0
  %877 = vmatpush1.bf16.msra.mxu0 0
  %878 = vmatprep.subr.bf16.mxu0 0
  %879 = vmatpush1.bf16.msra.mxu0 0
  %880 = vmatprep.subr.bf16.mxu0 0
  %881 = vmatpush1.bf16.msra.mxu0 0
  %882 = vmatprep.subr.bf16.mxu0 0
  %883 = vmatpush1.bf16.msra.mxu0 0
  %884 = vmatprep.subr.bf16.mxu0 0
  %885 = vmatpush1.bf16.msra.mxu0 0
  %886 = vmatprep.subr.bf16.mxu0 0
  %887 = vmatpush1.bf16.msra.mxu0 0
  %888 = vmatprep.subr.bf16.mxu0 0
  %889 = vmatpush1.bf16.msra.mxu0 0
  %890 = vmatprep.subr.bf16.mxu0 0
  %891 = vmatpush1.bf16.msra.mxu0 0
  %892 = vmatprep.subr.bf16.mxu0 0
  %893 = vmatpush1.bf16.msra.mxu0 0
  %894 = vmatprep.mubr.bf16.mxu0 0
  %895 = vmatmul.mubr.bf16.gmra.mrb[0].mxu0 %v860
  %v896 = vpop.f32.mrb[0].mxu0
  %v897 = vadd.f32 0.0, %v896
  %v898 = vpop.f32.mrb[0].mxu0
  %v899 = vadd.f32 0.0, %v898
  %v900 = vpop.f32.mrb[0].mxu0
  %v901 = vpop.f32.mrb[0].mxu0
  %902 = vdwg.mxu0
  %v903 = vadd.f32 %v847, %v897
  %v904 = vmul.f32 %v903, 0.5
  %v905 = vtanh.pop %v904
  %v906 = vadd.f32 %v905, 1.0
  %v907 = vmul.f32 %v906, 0.5
  %v908 = vtanh.pop %v903
  %v909 = vmul.f32 %v907, %v801
  %911 = vrot.lane.b32.xlu0 %v908, 64
  %v912 = vpop.permute.xlu0 %911
  %v914 = vmul.f32 %v907, %v912
  %916 = vrot.lane.b32.xlu0 %v914, 32
  %v917 = vpop.permute.xlu0 %916
  %v919 = vadd.f32 %v909, %v917
  %v920 = vtanh.pop %v919
  %922 = vrot.lane.b32.xlu0 %v920, 64
  %v923 = vpop.permute.xlu0 %922
  %v925 = vmul.f32 %v907, %v923
  %v926 = vadd.f32 %v848, %v899
  %v927 = vmul.f32 %v926, 0.5
  %v928 = vtanh.pop %v927
  %v929 = vadd.f32 %v928, 1.0
  %v930 = vmul.f32 %v929, 0.5
  %v931 = vtanh.pop %v926
  %v932 = vmul.f32 %v930, %v824
  %934 = vrot.lane.b32.xlu0 %v931, 64
  %v935 = vpop.permute.xlu0 %934
  %v937 = vmul.f32 %v930, %v935
  %939 = vrot.lane.b32.xlu0 %v937, 32
  %v940 = vpop.permute.xlu0 %939
  %v942 = vadd.f32 %v932, %v940
  %v943 = vtanh.pop %v942
  %945 = vrot.lane.b32.xlu0 %v943, 64
  %v946 = vpop.permute.xlu0 %945
  %v948 = vmul.f32 %v930, %v946
  %v949 = vpack.c.bf16 %v925, %v925
  %v951 = vunpack.c.l.b16 %v949
  %v952 = vpack.c.b16 %v951, %v951
  %953 = vrot.lane.b32.xlu0 %v952, 32
  %v954 = vpop.permute.xlu0 %953
  %956 = vst.msk [vmem:[%s601] sm:$0xf] %vm339, %v954
  %v957 = vpack.c.bf16 %v948, %v948
  %v959 = vunpack.c.l.b16 %v957
  %v960 = vpack.c.b16 %v959, %v959
  %961 = vrot.lane.b32.xlu0 %v960, 64
  %v962 = vpop.permute.xlu0 %961
  %964 = vst.msk [vmem:[%s592] sm:$0xf] %vm349, %v962
  %v965 = vld [vmem:[%s357] sm:$0xff]
  %v966 = vld [vmem:[%s353 + $0x8] sm:$0xff]
  %968 = vrot.lane.b32.xlu0 %v925, 32
  %v969 = vpop.permute.xlu0 %968
  %972 = vrot.lane.b32.xlu0 %v948, 64
  %v973 = vpop.permute.xlu0 %972
  %v975 = vsel %vm82, %v969, %v973
  %v976 = vpack.c.bf16 %v975, %v975
  %v978 = vsel %vm241, %v976, 0
  %980 = vmatprep.subr.bf16.mxu0 %v226
  %981 = vmatpush1.bf16.msra.mxu0 %v225
  %982 = vmatprep.subr.bf16.mxu0 %v228
  %983 = vmatpush1.bf16.msra.mxu0 %v227
  %984 = vmatprep.subr.bf16.mxu0 %v230
  %985 = vmatpush1.bf16.msra.mxu0 %v229
  %986 = vmatprep.subr.bf16.mxu0 %v232
  %987 = vmatpush1.bf16.msra.mxu0 %v231
  %988 = vmatprep.subr.bf16.mxu0 0
  %989 = vmatpush1.bf16.msra.mxu0 0
  %990 = vmatprep.subr.bf16.mxu0 0
  %991 = vmatpush1.bf16.msra.mxu0 0
  %992 = vmatprep.subr.bf16.mxu0 0
  %993 = vmatpush1.bf16.msra.mxu0 0
  %994 = vmatprep.subr.bf16.mxu0 0
  %995 = vmatpush1.bf16.msra.mxu0 0
  %996 = vmatprep.subr.bf16.mxu0 0
  %997 = vmatpush1.bf16.msra.mxu0 0
  %998 = vmatprep.subr.bf16.mxu0 0
  %999 = vmatpush1.bf16.msra.mxu0 0
  %1000 = vmatprep.subr.bf16.mxu0 0
  %1001 = vmatpush1.bf16.msra.mxu0 0
  %1002 = vmatprep.subr.bf16.mxu0 0
  %1003 = vmatpush1.bf16.msra.mxu0 0
  %1004 = vmatprep.subr.bf16.mxu0 0
  %1005 = vmatpush1.bf16.msra.mxu0 0
  %1006 = vmatprep.subr.bf16.mxu0 0
  %1007 = vmatpush1.bf16.msra.mxu0 0
  %1008 = vmatprep.subr.bf16.mxu0 0
  %1009 = vmatpush1.bf16.msra.mxu0 0
  %1010 = vmatprep.subr.bf16.mxu0 0
  %1011 = vmatpush1.bf16.msra.mxu0 0
  %1012 = vmatprep.mubr.bf16.mxu0 0
  %1013 = vmatmul.mubr.bf16.gmra.mrb[0].mxu0 %v978
  %v1014 = vpop.f32.mrb[0].mxu0
  %v1015 = vadd.f32 0.0, %v1014
  %v1016 = vpop.f32.mrb[0].mxu0
  %v1017 = vadd.f32 0.0, %v1016
  %v1018 = vpop.f32.mrb[0].mxu0
  %v1019 = vpop.f32.mrb[0].mxu0
  %1020 = vdwg.mxu0
  %v1021 = vadd.f32 %v965, %v1015
  %v1022 = vmul.f32 %v1021, 0.5
  %v1023 = vtanh.pop %v1022
  %v1024 = vadd.f32 %v1023, 1.0
  %v1025 = vmul.f32 %v1024, 0.5
  %v1026 = vtanh.pop %v1021
  %v1027 = vmul.f32 %v1025, %v919
  %1029 = vrot.lane.b32.xlu0 %v1026, 64
  %v1030 = vpop.permute.xlu0 %1029
  %v1032 = vmul.f32 %v1025, %v1030
  %1034 = vrot.lane.b32.xlu0 %v1032, 32
  %v1035 = vpop.permute.xlu0 %1034
  %v1037 = vadd.f32 %v1027, %v1035
  %v1038 = vtanh.pop %v1037
  %1040 = vrot.lane.b32.xlu0 %v1038, 64
  %v1041 = vpop.permute.xlu0 %1040
  %v1043 = vmul.f32 %v1025, %v1041
  %v1044 = vadd.f32 %v966, %v1017
  %v1045 = vmul.f32 %v1044, 0.5
  %v1046 = vtanh.pop %v1045
  %v1047 = vadd.f32 %v1046, 1.0
  %v1048 = vmul.f32 %v1047, 0.5
  %v1049 = vtanh.pop %v1044
  %v1050 = vmul.f32 %v1048, %v942
  %1052 = vrot.lane.b32.xlu0 %v1049, 64
  %v1053 = vpop.permute.xlu0 %1052
  %v1055 = vmul.f32 %v1048, %v1053
  %1057 = vrot.lane.b32.xlu0 %v1055, 32
  %v1058 = vpop.permute.xlu0 %1057
  %v1060 = vadd.f32 %v1050, %v1058
  %v1061 = vtanh.pop %v1060
  %1063 = vrot.lane.b32.xlu0 %v1061, 64
  %v1064 = vpop.permute.xlu0 %1063
  %v1066 = vmul.f32 %v1048, %v1064
  %v1067 = vpack.c.bf16 %v1043, %v1043
  %v1069 = vunpack.c.l.b16 %v1067
  %v1070 = vpack.c.b16 %v1069, %v1069
  %1071 = vrot.lane.b32.xlu0 %v1070, 32
  %v1072 = vpop.permute.xlu0 %1071
  %1074 = vst.msk [vmem:[%s475] sm:$0xf] %vm339, %v1072
  %v1075 = vpack.c.bf16 %v1066, %v1066
  %v1077 = vunpack.c.l.b16 %v1075
  %v1078 = vpack.c.b16 %v1077, %v1077
  %1079 = vrot.lane.b32.xlu0 %v1078, 64
  %v1080 = vpop.permute.xlu0 %1079
  %1082 = vst.msk [vmem:[%s466] sm:$0xf] %vm349, %v1080
  %v1083 = vld [vmem:[%s198] sm:$0xff]
  %v1084 = vld [vmem:[%s194 + $0x8] sm:$0xff]
  %1086 = vrot.lane.b32.xlu0 %v1043, 32
  %v1087 = vpop.permute.xlu0 %1086
  %1090 = vrot.lane.b32.xlu0 %v1066, 64
  %v1091 = vpop.permute.xlu0 %1090
  %v1093 = vsel %vm82, %v1087, %v1091
  %v1094 = vpack.c.bf16 %v1093, %v1093
  %v1096 = vsel %vm241, %v1094, 0
  %1098 = vmatprep.subr.bf16.mxu0 %v226
  %1099 = vmatpush1.bf16.msra.mxu0 %v225
  %1100 = vmatprep.subr.bf16.mxu0 %v228
  %1101 = vmatpush1.bf16.msra.mxu0 %v227
  %1102 = vmatprep.subr.bf16.mxu0 %v230
  %1103 = vmatpush1.bf16.msra.mxu0 %v229
  %1104 = vmatprep.subr.bf16.mxu0 %v232
  %1105 = vmatpush1.bf16.msra.mxu0 %v231
  %1106 = vmatprep.subr.bf16.mxu0 0
  %1107 = vmatpush1.bf16.msra.mxu0 0
  %1108 = vmatprep.subr.bf16.mxu0 0
  %1109 = vmatpush1.bf16.msra.mxu0 0
  %1110 = vmatprep.subr.bf16.mxu0 0
  %1111 = vmatpush1.bf16.msra.mxu0 0
  %1112 = vmatprep.subr.bf16.mxu0 0
  %1113 = vmatpush1.bf16.msra.mxu0 0
  %1114 = vmatprep.subr.bf16.mxu0 0
  %1115 = vmatpush1.bf16.msra.mxu0 0
  %1116 = vmatprep.subr.bf16.mxu0 0
  %1117 = vmatpush1.bf16.msra.mxu0 0
  %1118 = vmatprep.subr.bf16.mxu0 0
  %1119 = vmatpush1.bf16.msra.mxu0 0
  %1120 = vmatprep.subr.bf16.mxu0 0
  %1121 = vmatpush1.bf16.msra.mxu0 0
  %1122 = vmatprep.subr.bf16.mxu0 0
  %1123 = vmatpush1.bf16.msra.mxu0 0
  %1124 = vmatprep.subr.bf16.mxu0 0
  %1125 = vmatpush1.bf16.msra.mxu0 0
  %1126 = vmatprep.subr.bf16.mxu0 0
  %1127 = vmatpush1.bf16.msra.mxu0 0
  %1128 = vmatprep.subr.bf16.mxu0 0
  %1129 = vmatpush1.bf16.msra.mxu0 0
  %1130 = vmatprep.mubr.bf16.mxu0 0
  %1131 = vmatmul.mubr.bf16.gmra.mrb[0].mxu0 %v1096
  %v1132 = vpop.f32.mrb[0].mxu0
  %v1133 = vadd.f32 0.0, %v1132
  %v1134 = vpop.f32.mrb[0].mxu0
  %v1135 = vadd.f32 0.0, %v1134
  %v1136 = vpop.f32.mrb[0].mxu0
  %v1137 = vpop.f32.mrb[0].mxu0
  %1138 = vdwg.mxu0
  %v1139 = vadd.f32 %v1083, %v1133
  %v1140 = vmul.f32 %v1139, 0.5
  %v1141 = vtanh.pop %v1140
  %v1142 = vadd.f32 %v1141, 1.0
  %v1143 = vmul.f32 %v1142, 0.5
  %v1144 = vtanh.pop %v1139
  %v1145 = vmul.f32 %v1143, %v1037
  %1147 = vrot.lane.b32.xlu0 %v1144, 64
  %v1148 = vpop.permute.xlu0 %1147
  %v1150 = vmul.f32 %v1143, %v1148
  %1152 = vrot.lane.b32.xlu0 %v1150, 32
  %v1153 = vpop.permute.xlu0 %1152
  %v1155 = vadd.f32 %v1145, %v1153
  %v1156 = vtanh.pop %v1155
  %1158 = vrot.lane.b32.xlu0 %v1156, 64
  %v1159 = vpop.permute.xlu0 %1158
  %v1161 = vmul.f32 %v1143, %v1159
  %v1162 = vadd.f32 %v1084, %v1135
  %v1163 = vmul.f32 %v1162, 0.5
  %v1164 = vtanh.pop %v1163
  %v1165 = vadd.f32 %v1164, 1.0
  %v1166 = vmul.f32 %v1165, 0.5
  %v1167 = vtanh.pop %v1162
  %v1168 = vmul.f32 %v1166, %v1060
  %1170 = vrot.lane.b32.xlu0 %v1167, 64
  %v1171 = vpop.permute.xlu0 %1170
  %v1173 = vmul.f32 %v1166, %v1171
  %1175 = vrot.lane.b32.xlu0 %v1173, 32
  %v1176 = vpop.permute.xlu0 %1175
  %v1178 = vadd.f32 %v1168, %v1176
  %v1179 = vtanh.pop %v1178
  %1181 = vrot.lane.b32.xlu0 %v1179, 64
  %v1182 = vpop.permute.xlu0 %1181
  %v1184 = vmul.f32 %v1166, %v1182
  %v1185 = vpack.c.bf16 %v1161, %v1161
  %v1187 = vunpack.c.l.b16 %v1185
  %v1188 = vpack.c.b16 %v1187, %v1187
  %1189 = vrot.lane.b32.xlu0 %v1188, 32
  %v1190 = vpop.permute.xlu0 %1189
  %1192 = vst.msk [vmem:[%s348] sm:$0xf] %vm339, %v1190
  %v1193 = vpack.c.bf16 %v1184, %v1184
  %v1195 = vunpack.c.l.b16 %v1193
  %v1196 = vpack.c.b16 %v1195, %v1195
  %1197 = vrot.lane.b32.xlu0 %v1196, 64
  %v1198 = vpop.permute.xlu0 %1197
  %1200 = vst.msk [vmem:[%s4] sm:$0xf] %vm349, %v1198
  // Predicated region
  $region18: #{target_model_forward.2} parent=0 // pred_check
    _
  $region19: #{target_model_forward.2} parent=0 // pred_check_branch
    %1202 = sbr.rel (0) target = $region21
  $region20: #{target_model_forward.2} parent=0 // pred_region
    _
  $region21: #{target_model_forward.2} parent=0 // pred_fallthru
    _
  // Predicated region
  $region22: #{target_model_forward.2} parent=0 // pred_check
    _
  $region23: #{target_model_forward.2} parent=0 // pred_check_branch
    %1204 = sbr.rel (0) target = $region25
  $region24: #{target_model_forward.2} parent=0 // pred_region
    _
  $region25: #{target_model_forward.2} parent=0 // pred_fallthru
    _

// kernel: target_model_forward.3
$region0: #{target_model_forward.3}
  #allocation0 [shape = 'u32[]', space=smem, size = 0x4, offset = 0x4, fixed_abs, tag = 'smem constant byte address 0x4 - core index']
  #allocation1 [shape = 'u32[144,128]{1,0:T(1,128)}', space=vmem, size = 0x12000, scoped, tag = 'internal scratch']
  #allocation2 [shape = 'f32[64,256]{1,0:T(8,128)}', space=vmem, size = 0x10000, scoped, tag = 'scratch operand']
  %s0 = inlined_call_operand.vmem [shape: bf16[64,64], index: 0, kind: input, shape index: {}]
  %s1 = inlined_call_operand.vmem [shape: bf16[64,256], index: 1, kind: input, shape index: {}]
  %s2 = inlined_call_operand.vmem [shape: f32[1,256], index: 2, kind: input, shape index: {}]
  %s3 = inlined_call_operand.vmem [shape: bf16[64,256], index: 3, kind: input, shape index: {}]
  %s4 = inlined_call_operand.vmem [shape: bf16[64,4], index: 4, kind: input, shape index: {}]
  %s5 = inlined_call_operand.vmem [shape: f32[1,4], index: 5, kind: input, shape index: {}]
  %s6 = inlined_call_operand.vmem [shape: f32[8,8,64], index: 6, kind: output, shape index: {0}]
  %s7 = inlined_call_operand.vmem [shape: f32[8,4], index: 7, kind: output, shape index: {1}]
  %8 = xla_tuple %s6, %s7
  %s9 = sld [smem:[#allocation0]]
  $region42: #{target_model_forward.3} parent=0
    _
  %s11 = ssub.s32 1, %s9
  %s12 = scalar_select 0, %s11, %s9
  // Predicated region
  $region2: #{target_model_forward.3} parent=0 // pred_check
    _
  $region3: #{target_model_forward.3} parent=0 // pred_check_branch
    %14 = sbr.rel (0) target = $region5
  $region4: #{target_model_forward.3} parent=0 // pred_region
    _
  $region5: #{target_model_forward.3} parent=0 // pred_fallthru
    _
  // Predicated region
  $region6: #{target_model_forward.3} parent=0 // pred_check
    _
  $region7: #{target_model_forward.3} parent=0 // pred_check_branch
    %16 = sbr.rel (0) target = $region9
  $region8: #{target_model_forward.3} parent=0 // pred_region
    _
  $region9: #{target_model_forward.3} parent=0 // pred_fallthru
    _
  // Predicated region
  $region10: #{target_model_forward.3} parent=0 // pred_check
    _
  $region11: #{target_model_forward.3} parent=0 // pred_check_branch
    %18 = sbr.rel (0) target = $region13
  $region12: #{target_model_forward.3} parent=0 // pred_region
    _
  $region13: #{target_model_forward.3} parent=0 // pred_fallthru
    _
  // Predicated region
  $region14: #{target_model_forward.3} parent=0 // pred_check
    _
  $region15: #{target_model_forward.3} parent=0 // pred_check_branch
    %20 = sbr.rel (0) target = $region17
  $region16: #{target_model_forward.3} parent=0 // pred_region
    _
  $region17: #{target_model_forward.3} parent=0 // pred_fallthru
    _
  // Predicated region
  $region18: #{target_model_forward.3} parent=0 // pred_check
    _
  $region19: #{target_model_forward.3} parent=0 // pred_check_branch
    %22 = sbr.rel (0) target = $region21
  $region20: #{target_model_forward.3} parent=0 // pred_region
    _
  $region21: #{target_model_forward.3} parent=0 // pred_fallthru
    _
  // Predicated region
  $region22: #{target_model_forward.3} parent=0 // pred_check
    _
  $region23: #{target_model_forward.3} parent=0 // pred_check_branch
    %24 = sbr.rel (0) target = $region25
  $region24: #{target_model_forward.3} parent=0 // pred_region
    _
  $region25: #{target_model_forward.3} parent=0 // pred_fallthru
    _
  %v26 = vld [vmem:[%s0] sm:$0xf]
  %v27 = vld [vmem:[%s0 + $0x4] sm:$0xf]
  %v28 = vld [vmem:[%s0 + $0x8] sm:$0xf]
  %v29 = vld [vmem:[%s0 + $0xc] sm:$0xf]
  %v30 = vld [vmem:[%s0 + $0x10] sm:$0xf]
  %v31 = vld [vmem:[%s0 + $0x14] sm:$0xf]
  %v32 = vld [vmem:[%s0 + $0x18] sm:$0xf]
  %v33 = vld [vmem:[%s0 + $0x1c] sm:$0xf]
  %v34 = vld [vmem:[%s1] sm:$0xff]
  %v35 = vld [vmem:[%s1 + $0x8] sm:$0xff]
  %v36 = vld [vmem:[%s1 + $0x10] sm:$0xff]
  %v37 = vld [vmem:[%s1 + $0x18] sm:$0xff]
  %v38 = vld [vmem:[%s1 + $0x20] sm:$0xff]
  %v39 = vld [vmem:[%s1 + $0x28] sm:$0xff]
  %v40 = vld [vmem:[%s1 + $0x30] sm:$0xff]
  %v41 = vld [vmem:[%s1 + $0x38] sm:$0xff]
  %v42 = vld [vmem:[%s2] sm:$0x3]
  %v44 = vlaneseq
  %v45 = vshrl.u32 %v44, 7
  %v46 = vsub.s32 0, %v45
  %v47 = vrot.slane %v42, %v46
  %v48 = vlaneseq
  %v49 = vshrl.u32 %v48, 7
  %v50 = vsub.s32 1, %v49
  %v51 = vrot.slane %v42, %v50
  %v62 = vunpack.c.l.b16 %v26
  %v63 = vunpack.c.l.b16 %v27
  %v64 = vunpack.c.l.b16 %v28
  %v65 = vunpack.c.l.b16 %v29
  %v66 = vunpack.c.l.b16 %v30
  %v67 = vunpack.c.l.b16 %v31
  %v68 = vunpack.c.l.b16 %v32
  %v69 = vunpack.c.l.b16 %v33
  %v70 = vpack.c.b16 %v63, %v62
  %v71 = vpack.c.b16 %v65, %v64
  %v72 = vpack.c.b16 %v67, %v66
  %v73 = vpack.c.b16 %v69, %v68
  %v82 = vunpack.c.l.b16 %v34
  %v83 = vunpack.c.h.b16 %v34
  %v84 = vunpack.c.l.b16 %v35
  %v85 = vunpack.c.h.b16 %v35
  %v86 = vunpack.c.l.b16 %v36
  %v87 = vunpack.c.h.b16 %v36
  %v88 = vunpack.c.l.b16 %v37
  %v89 = vunpack.c.h.b16 %v37
  %v90 = vunpack.c.l.b16 %v38
  %v91 = vunpack.c.h.b16 %v38
  %v92 = vunpack.c.l.b16 %v39
  %v93 = vunpack.c.h.b16 %v39
  %v94 = vunpack.c.l.b16 %v40
  %v95 = vunpack.c.h.b16 %v40
  %v96 = vunpack.c.l.b16 %v41
  %v97 = vunpack.c.h.b16 %v41
  %v98 = vpack.c.b16 %v84, %v82
  %v99 = vpack.c.b16 %v85, %v83
  %v100 = vpack.c.b16 %v88, %v86
  %v101 = vpack.c.b16 %v89, %v87
  %v102 = vpack.c.b16 %v92, %v90
  %v103 = vpack.c.b16 %v93, %v91
  %v104 = vpack.c.b16 %v96, %v94
  %v105 = vpack.c.b16 %v97, %v95
  %vm114 = vcmask 523264
  %v116 = vsel %vm114, %v70, 0
  %v119 = vsel %vm114, %v71, 0
  %v122 = vsel %vm114, %v72, 0
  %v125 = vsel %vm114, %v73, 0
  %127 = vmatprep.subr.bf16.mxu0 %v99
  %128 = vmatpush1.bf16.msra.mxu0 %v98
  %129 = vmatprep.subr.bf16.mxu0 %v101
  %130 = vmatpush1.bf16.msra.mxu0 %v100
  %131 = vmatprep.subr.bf16.mxu0 %v103
  %132 = vmatpush1.bf16.msra.mxu0 %v102
  %133 = vmatprep.subr.bf16.mxu0 %v105
  %134 = vmatpush1.bf16.msra.mxu0 %v104
  %135 = vmatprep.subr.bf16.mxu0 0
  %136 = vmatpush1.bf16.msra.mxu0 0
  %137 = vmatprep.subr.bf16.mxu0 0
  %138 = vmatpush1.bf16.msra.mxu0 0
  %139 = vmatprep.subr.bf16.mxu0 0
  %140 = vmatpush1.bf16.msra.mxu0 0
  %141 = vmatprep.subr.bf16.mxu0 0
  %142 = vmatpush1.bf16.msra.mxu0 0
  %143 = vmatprep.subr.bf16.mxu0 0
  %144 = vmatpush1.bf16.msra.mxu0 0
  %145 = vmatprep.subr.bf16.mxu0 0
  %146 = vmatpush1.bf16.msra.mxu0 0
  %147 = vmatprep.subr.bf16.mxu0 0
  %148 = vmatpush1.bf16.msra.mxu0 0
  %149 = vmatprep.subr.bf16.mxu0 0
  %150 = vmatpush1.bf16.msra.mxu0 0
  %151 = vmatprep.subr.bf16.mxu0 0
  %152 = vmatpush1.bf16.msra.mxu0 0
  %153 = vmatprep.subr.bf16.mxu0 0
  %154 = vmatpush1.bf16.msra.mxu0 0
  %155 = vmatprep.subr.bf16.mxu0 0
  %156 = vmatpush1.bf16.msra.mxu0 0
  %157 = vmatprep.subr.bf16.mxu0 0
  %158 = vmatpush1.bf16.msra.mxu0 0
  %159 = vmatprep.mubr.bf16.mxu0 0
  %160 = vmatmul.mubr.bf16.gmra.mrb[0].mxu0 %v116
  %v161 = vpop.f32.mrb[0].mxu0
  %v162 = vadd.f32 %v47, %v161
  %v163 = vpop.f32.mrb[0].mxu0
  %v164 = vadd.f32 %v51, %v163
  %v165 = vpop.f32.mrb[0].mxu0
  %v166 = vadd.f32 %v47, %v165
  %v167 = vpop.f32.mrb[0].mxu0
  %v168 = vadd.f32 %v51, %v167
  %169 = vmatprep.mubr.bf16.mxu0 0
  %170 = vmatmul.mubr.bf16.gmra.mrb[0].mxu0 %v119
  %v171 = vpop.f32.mrb[0].mxu0
  %v172 = vadd.f32 %v47, %v171
  %v173 = vpop.f32.mrb[0].mxu0
  %v174 = vadd.f32 %v51, %v173
  %v175 = vpop.f32.mrb[0].mxu0
  %v176 = vadd.f32 %v47, %v175
  %v177 = vpop.f32.mrb[0].mxu0
  %v178 = vadd.f32 %v51, %v177
  %179 = vmatprep.mubr.bf16.mxu0 0
  %180 = vmatmul.mubr.bf16.gmra.mrb[0].mxu0 %v122
  %v181 = vpop.f32.mrb[0].mxu0
  %v182 = vadd.f32 %v47, %v181
  %v183 = vpop.f32.mrb[0].mxu0
  %v184 = vadd.f32 %v51, %v183
  %v185 = vpop.f32.mrb[0].mxu0
  %v186 = vadd.f32 %v47, %v185
  %v187 = vpop.f32.mrb[0].mxu0
  %v188 = vadd.f32 %v51, %v187
  %189 = vmatprep.mubr.bf16.mxu0 0
  %190 = vmatmul.mubr.bf16.gmra.mrb[0].mxu0 %v125
  %v191 = vpop.f32.mrb[0].mxu0
  %v192 = vadd.f32 %v47, %v191
  %v193 = vpop.f32.mrb[0].mxu0
  %v194 = vadd.f32 %v51, %v193
  %v195 = vpop.f32.mrb[0].mxu0
  %v196 = vadd.f32 %v47, %v195
  %v197 = vpop.f32.mrb[0].mxu0
  %v198 = vadd.f32 %v51, %v197
  %199 = vdwg.mxu0
  %200 = vst [vmem:[#allocation2] sm:$0xff] %v162
  %201 = vst [vmem:[#allocation2 + $0x8] sm:$0xff] %v164
  %202 = vst [vmem:[#allocation2 + $0x10] sm:$0xff] %v166
  %203 = vst [vmem:[#allocation2 + $0x18] sm:$0xff] %v168
  %204 = vst [vmem:[#allocation2 + $0x20] sm:$0xff] %v172
  %205 = vst [vmem:[#allocation2 + $0x28] sm:$0xff] %v174
  %206 = vst [vmem:[#allocation2 + $0x30] sm:$0xff] %v176
  %207 = vst [vmem:[#allocation2 + $0x38] sm:$0xff] %v178
  %208 = vst [vmem:[#allocation2 + $0x40] sm:$0xff] %v182
  %209 = vst [vmem:[#allocation2 + $0x48] sm:$0xff] %v184
  %210 = vst [vmem:[#allocation2 + $0x50] sm:$0xff] %v186
  %211 = vst [vmem:[#allocation2 + $0x58] sm:$0xff] %v188
  %212 = vst [vmem:[#allocation2 + $0x60] sm:$0xff] %v192
  %213 = vst [vmem:[#allocation2 + $0x68] sm:$0xff] %v194
  %214 = vst [vmem:[#allocation2 + $0x70] sm:$0xff] %v196
  %215 = vst [vmem:[#allocation2 + $0x78] sm:$0xff] %v198
  %v216 = vld [vmem:[%s3] sm:$0xff]
  %v217 = vld [vmem:[%s3 + $0x8] sm:$0xff]
  %v218 = vld [vmem:[%s3 + $0x10] sm:$0xff]
  %v219 = vld [vmem:[%s3 + $0x18] sm:$0xff]
  %v220 = vld [vmem:[%s3 + $0x20] sm:$0xff]
  %v221 = vld [vmem:[%s3 + $0x28] sm:$0xff]
  %v222 = vld [vmem:[%s3 + $0x30] sm:$0xff]
  %v223 = vld [vmem:[%s3 + $0x38] sm:$0xff]
  %s224 = smul.u32 0, 2
  %s225 = smul.addr %s224, 8
  %s226 = scalar_lea.vmem [#allocation2], %s225
  %v227 = vld [vmem:[%s226] sm:$0xff]
  %s228 = smul.u32 7, 2
  %s229 = smul.addr %s228, 8
  %s230 = scalar_lea.vmem [#allocation2], %s229
  %v231 = vld [vmem:[%s230 + $0x8] sm:$0xff]
  %v232 = vpack.c.bf16 0.0, 0.0
  %v241 = vunpack.c.l.b16 %v216
  %v242 = vunpack.c.h.b16 %v216
  %v243 = vunpack.c.l.b16 %v217
  %v244 = vunpack.c.h.b16 %v217
  %v245 = vunpack.c.l.b16 %v218
  %v246 = vunpack.c.h.b16 %v218
  %v247 = vunpack.c.l.b16 %v219
  %v248 = vunpack.c.h.b16 %v219
  %v249 = vunpack.c.l.b16 %v220
  %v250 = vunpack.c.h.b16 %v220
  %v251 = vunpack.c.l.b16 %v221
  %v252 = vunpack.c.h.b16 %v221
  %v253 = vunpack.c.l.b16 %v222
  %v254 = vunpack.c.h.b16 %v222
  %v255 = vunpack.c.l.b16 %v223
  %v256 = vunpack.c.h.b16 %v223
  %v257 = vpack.c.b16 %v243, %v241
  %v258 = vpack.c.b16 %v244, %v242
  %v259 = vpack.c.b16 %v247, %v245
  %v260 = vpack.c.b16 %v248, %v246
  %v261 = vpack.c.b16 %v251, %v249
  %v262 = vpack.c.b16 %v252, %v250
  %v263 = vpack.c.b16 %v255, %v253
  %v264 = vpack.c.b16 %v256, %v254
  %v274 = vsel %vm114, %v232, 0
  %276 = vmatprep.subr.bf16.mxu0 %v258
  %277 = vmatpush1.bf16.msra.mxu0 %v257
  %278 = vmatprep.subr.bf16.mxu0 %v260
  %279 = vmatpush1.bf16.msra.mxu0 %v259
  %280 = vmatprep.subr.bf16.mxu0 %v262
  %281 = vmatpush1.bf16.msra.mxu0 %v261
  %282 = vmatprep.subr.bf16.mxu0 %v264
  %283 = vmatpush1.bf16.msra.mxu0 %v263
  %284 = vmatprep.subr.bf16.mxu0 0
  %285 = vmatpush1.bf16.msra.mxu0 0
  %286 = vmatprep.subr.bf16.mxu0 0
  %287 = vmatpush1.bf16.msra.mxu0 0
  %288 = vmatprep.subr.bf16.mxu0 0
  %289 = vmatpush1.bf16.msra.mxu0 0
  %290 = vmatprep.subr.bf16.mxu0 0
  %291 = vmatpush1.bf16.msra.mxu0 0
  %292 = vmatprep.subr.bf16.mxu0 0
  %293 = vmatpush1.bf16.msra.mxu0 0
  %294 = vmatprep.subr.bf16.mxu0 0
  %295 = vmatpush1.bf16.msra.mxu0 0
  %296 = vmatprep.subr.bf16.mxu0 0
  %297 = vmatpush1.bf16.msra.mxu0 0
  %298 = vmatprep.subr.bf16.mxu0 0
  %299 = vmatpush1.bf16.msra.mxu0 0
  %300 = vmatprep.subr.bf16.mxu0 0
  %301 = vmatpush1.bf16.msra.mxu0 0
  %302 = vmatprep.subr.bf16.mxu0 0
  %303 = vmatpush1.bf16.msra.mxu0 0
  %304 = vmatprep.subr.bf16.mxu0 0
  %305 = vmatpush1.bf16.msra.mxu0 0
  %306 = vmatprep.subr.bf16.mxu0 0
  %307 = vmatpush1.bf16.msra.mxu0 0
  %308 = vmatprep.mubr.bf16.mxu0 0
  %309 = vmatmul.mubr.bf16.gmra.mrb[0].mxu0 %v274
  %v310 = vpop.f32.mrb[0].mxu0
  %v311 = vadd.f32 0.0, %v310
  %v312 = vpop.f32.mrb[0].mxu0
  %v313 = vadd.f32 0.0, %v312
  %v314 = vpop.f32.mrb[0].mxu0
  %v315 = vpop.f32.mrb[0].mxu0
  %316 = vdwg.mxu0
  %v317 = vadd.f32 %v227, %v311
  %v318 = vmul.f32 %v317, 0.5
  %v319 = vtanh.pop %v318
  %v320 = vadd.f32 %v319, 1.0
  %v321 = vmul.f32 %v320, 0.5
  %v322 = vtanh.pop %v317
  %v323 = vmul.f32 %v321, 0.0
  %325 = vrot.lane.b32.xlu0 %v322, 64
  %v326 = vpop.permute.xlu0 %325
  %v328 = vmul.f32 %v321, %v326
  %330 = vrot.lane.b32.xlu0 %v328, 32
  %v331 = vpop.permute.xlu0 %330
  %v333 = vadd.f32 %v323, %v331
  %v334 = vtanh.pop %v333
  %336 = vrot.lane.b32.xlu0 %v334, 64
  %v337 = vpop.permute.xlu0 %336
  %v339 = vmul.f32 %v321, %v337
  %v340 = vadd.f32 %v231, %v313
  %v341 = vmul.f32 %v340, 0.5
  %v342 = vtanh.pop %v341
  %v343 = vadd.f32 %v342, 1.0
  %v344 = vmul.f32 %v343, 0.5
  %v345 = vtanh.pop %v340
  %v346 = vmul.f32 %v344, 0.0
  %348 = vrot.lane.b32.xlu0 %v345, 64
  %v349 = vpop.permute.xlu0 %348
  %v351 = vmul.f32 %v344, %v349
  %353 = vrot.lane.b32.xlu0 %v351, 32
  %v354 = vpop.permute.xlu0 %353
  %v356 = vadd.f32 %v346, %v354
  %v357 = vtanh.pop %v356
  %359 = vrot.lane.b32.xlu0 %v357, 64
  %v360 = vpop.permute.xlu0 %359
  %v362 = vmul.f32 %v344, %v360
  %364 = vrot.lane.b32.xlu0 %v339, 32
  %v365 = vpop.permute.xlu0 %364
  %vm367 = vcmask 261120
  %368 = vst.msk [vmem:[%s6] sm:$0xff] %vm367, %v365
  %370 = vrot.lane.b32.xlu0 %v362, 64
  %v371 = vpop.permute.xlu0 %370
  %s373 = scalar_lea.vmem %s6, 56
  %vm374 = vcmask 523520
  %375 = vst.msk [vmem:[%s373] sm:$0xff] %vm374, %v371
  %s376 = smul.u32 1, 2
  %s377 = smul.addr %s376, 8
  %s378 = scalar_lea.vmem [#allocation2], %s377
  %v379 = vld [vmem:[%s378] sm:$0xff]
  %s380 = smul.u32 6, 2
  %s381 = smul.addr %s380, 8
  %s382 = scalar_lea.vmem [#allocation2], %s381
  %v383 = vld [vmem:[%s382 + $0x8] sm:$0xff]
  %v384 = vsel %vm367, %v365, %v371
  %v385 = vpack.c.bf16 %v384, %v384
  %v387 = vsel %vm114, %v385, 0
  %389 = vmatprep.subr.bf16.mxu0 %v258
  %390 = vmatpush1.bf16.msra.mxu0 %v257
  %391 = vmatprep.subr.bf16.mxu0 %v260
  %392 = vmatpush1.bf16.msra.mxu0 %v259
  %393 = vmatprep.subr.bf16.mxu0 %v262
  %394 = vmatpush1.bf16.msra.mxu0 %v261
  %395 = vmatprep.subr.bf16.mxu0 %v264
  %396 = vmatpush1.bf16.msra.mxu0 %v263
  %397 = vmatprep.subr.bf16.mxu0 0
  %398 = vmatpush1.bf16.msra.mxu0 0
  %399 = vmatprep.subr.bf16.mxu0 0
  %400 = vmatpush1.bf16.msra.mxu0 0
  %401 = vmatprep.subr.bf16.mxu0 0
  %402 = vmatpush1.bf16.msra.mxu0 0
  %403 = vmatprep.subr.bf16.mxu0 0
  %404 = vmatpush1.bf16.msra.mxu0 0
  %405 = vmatprep.subr.bf16.mxu0 0
  %406 = vmatpush1.bf16.msra.mxu0 0
  %407 = vmatprep.subr.bf16.mxu0 0
  %408 = vmatpush1.bf16.msra.mxu0 0
  %409 = vmatprep.subr.bf16.mxu0 0
  %410 = vmatpush1.bf16.msra.mxu0 0
  %411 = vmatprep.subr.bf16.mxu0 0
  %412 = vmatpush1.bf16.msra.mxu0 0
  %413 = vmatprep.subr.bf16.mxu0 0
  %414 = vmatpush1.bf16.msra.mxu0 0
  %415 = vmatprep.subr.bf16.mxu0 0
  %416 = vmatpush1.bf16.msra.mxu0 0
  %417 = vmatprep.subr.bf16.mxu0 0
  %418 = vmatpush1.bf16.msra.mxu0 0
  %419 = vmatprep.subr.bf16.mxu0 0
  %420 = vmatpush1.bf16.msra.mxu0 0
  %421 = vmatprep.mubr.bf16.mxu0 0
  %422 = vmatmul.mubr.bf16.gmra.mrb[0].mxu0 %v387
  %v423 = vpop.f32.mrb[0].mxu0
  %v424 = vadd.f32 0.0, %v423
  %v425 = vpop.f32.mrb[0].mxu0
  %v426 = vadd.f32 0.0, %v425
  %v427 = vpop.f32.mrb[0].mxu0
  %v428 = vpop.f32.mrb[0].mxu0
  %429 = vdwg.mxu0
  %v430 = vadd.f32 %v379, %v424
  %v431 = vmul.f32 %v430, 0.5
  %v432 = vtanh.pop %v431
  %v433 = vadd.f32 %v432, 1.0
  %v434 = vmul.f32 %v433, 0.5
  %v435 = vtanh.pop %v430
  %v436 = vmul.f32 %v434, %v333
  %438 = vrot.lane.b32.xlu0 %v435, 64
  %v439 = vpop.permute.xlu0 %438
  %v441 = vmul.f32 %v434, %v439
  %443 = vrot.lane.b32.xlu0 %v441, 32
  %v444 = vpop.permute.xlu0 %443
  %v446 = vadd.f32 %v436, %v444
  %v447 = vtanh.pop %v446
  %449 = vrot.lane.b32.xlu0 %v447, 64
  %v450 = vpop.permute.xlu0 %449
  %v452 = vmul.f32 %v434, %v450
  %v453 = vadd.f32 %v383, %v426
  %v454 = vmul.f32 %v453, 0.5
  %v455 = vtanh.pop %v454
  %v456 = vadd.f32 %v455, 1.0
  %v457 = vmul.f32 %v456, 0.5
  %v458 = vtanh.pop %v453
  %v459 = vmul.f32 %v457, %v356
  %461 = vrot.lane.b32.xlu0 %v458, 64
  %v462 = vpop.permute.xlu0 %461
  %v464 = vmul.f32 %v457, %v462
  %466 = vrot.lane.b32.xlu0 %v464, 32
  %v467 = vpop.permute.xlu0 %466
  %v469 = vadd.f32 %v459, %v467
  %v470 = vtanh.pop %v469
  %472 = vrot.lane.b32.xlu0 %v470, 64
  %v473 = vpop.permute.xlu0 %472
  %v475 = vmul.f32 %v457, %v473
  %477 = vrot.lane.b32.xlu0 %v452, 32
  %v478 = vpop.permute.xlu0 %477
  %s480 = scalar_lea.vmem %s6, 8
  %481 = vst.msk [vmem:[%s480] sm:$0xff] %vm367, %v478
  %483 = vrot.lane.b32.xlu0 %v475, 64
  %v484 = vpop.permute.xlu0 %483
  %s486 = scalar_lea.vmem %s6, 48
  %487 = vst.msk [vmem:[%s486] sm:$0xff] %vm374, %v484
  %s488 = smul.u32 2, 2
  %s489 = smul.addr %s488, 8
  %s490 = scalar_lea.vmem [#allocation2], %s489
  %v491 = vld [vmem:[%s490] sm:$0xff]
  %s492 = smul.u32 5, 2
  %s493 = smul.addr %s492, 8
  %s494 = scalar_lea.vmem [#allocation2], %s493
  %v495 = vld [vmem:[%s494 + $0x8] sm:$0xff]
  %v496 = vsel %vm367, %v478, %v484
  %v497 = vpack.c.bf16 %v496, %v496
  %v499 = vsel %vm114, %v497, 0
  %501 = vmatprep.subr.bf16.mxu0 %v258
  %502 = vmatpush1.bf16.msra.mxu0 %v257
  %503 = vmatprep.subr.bf16.mxu0 %v260
  %504 = vmatpush1.bf16.msra.mxu0 %v259
  %505 = vmatprep.subr.bf16.mxu0 %v262
  %506 = vmatpush1.bf16.msra.mxu0 %v261
  %507 = vmatprep.subr.bf16.mxu0 %v264
  %508 = vmatpush1.bf16.msra.mxu0 %v263
  %509 = vmatprep.subr.bf16.mxu0 0
  %510 = vmatpush1.bf16.msra.mxu0 0
  %511 = vmatprep.subr.bf16.mxu0 0
  %512 = vmatpush1.bf16.msra.mxu0 0
  %513 = vmatprep.subr.bf16.mxu0 0
  %514 = vmatpush1.bf16.msra.mxu0 0
  %515 = vmatprep.subr.bf16.mxu0 0
  %516 = vmatpush1.bf16.msra.mxu0 0
  %517 = vmatprep.subr.bf16.mxu0 0
  %518 = vmatpush1.bf16.msra.mxu0 0
  %519 = vmatprep.subr.bf16.mxu0 0
  %520 = vmatpush1.bf16.msra.mxu0 0
  %521 = vmatprep.subr.bf16.mxu0 0
  %522 = vmatpush1.bf16.msra.mxu0 0
  %523 = vmatprep.subr.bf16.mxu0 0
  %524 = vmatpush1.bf16.msra.mxu0 0
  %525 = vmatprep.subr.bf16.mxu0 0
  %526 = vmatpush1.bf16.msra.mxu0 0
  %527 = vmatprep.subr.bf16.mxu0 0
  %528 = vmatpush1.bf16.msra.mxu0 0
  %529 = vmatprep.subr.bf16.mxu0 0
  %530 = vmatpush1.bf16.msra.mxu0 0
  %531 = vmatprep.subr.bf16.mxu0 0
  %532 = vmatpush1.bf16.msra.mxu0 0
  %533 = vmatprep.mubr.bf16.mxu0 0
  %534 = vmatmul.mubr.bf16.gmra.mrb[0].mxu0 %v499
  %v535 = vpop.f32.mrb[0].mxu0
  %v536 = vadd.f32 0.0, %v535
  %v537 = vpop.f32.mrb[0].mxu0
  %v538 = vadd.f32 0.0, %v537
  %v539 = vpop.f32.mrb[0].mxu0
  %v540 = vpop.f32.mrb[0].mxu0
  %541 = vdwg.mxu0
  %v542 = vadd.f32 %v491, %v536
  %v543 = vmul.f32 %v542, 0.5
  %v544 = vtanh.pop %v543
  %v545 = vadd.f32 %v544, 1.0
  %v546 = vmul.f32 %v545, 0.5
  %v547 = vtanh.pop %v542
  %v548 = vmul.f32 %v546, %v446
  %550 = vrot.lane.b32.xlu0 %v547, 64
  %v551 = vpop.permute.xlu0 %550
  %v553 = vmul.f32 %v546, %v551
  %555 = vrot.lane.b32.xlu0 %v553, 32
  %v556 = vpop.permute.xlu0 %555
  %v558 = vadd.f32 %v548, %v556
  %v559 = vtanh.pop %v558
  %561 = vrot.lane.b32.xlu0 %v559, 64
  %v562 = vpop.permute.xlu0 %561
  %v564 = vmul.f32 %v546, %v562
  %v565 = vadd.f32 %v495, %v538
  %v566 = vmul.f32 %v565, 0.5
  %v567 = vtanh.pop %v566
  %v568 = vadd.f32 %v567, 1.0
  %v569 = vmul.f32 %v568, 0.5
  %v570 = vtanh.pop %v565
  %v571 = vmul.f32 %v569, %v469
  %573 = vrot.lane.b32.xlu0 %v570, 64
  %v574 = vpop.permute.xlu0 %573
  %v576 = vmul.f32 %v569, %v574
  %578 = vrot.lane.b32.xlu0 %v576, 32
  %v579 = vpop.permute.xlu0 %578
  %v581 = vadd.f32 %v571, %v579
  %v582 = vtanh.pop %v581
  %584 = vrot.lane.b32.xlu0 %v582, 64
  %v585 = vpop.permute.xlu0 %584
  %v587 = vmul.f32 %v569, %v585
  %589 = vrot.lane.b32.xlu0 %v564, 32
  %v590 = vpop.permute.xlu0 %589
  %s592 = scalar_lea.vmem %s6, 16
  %593 = vst.msk [vmem:[%s592] sm:$0xff] %vm367, %v590
  %595 = vrot.lane.b32.xlu0 %v587, 64
  %v596 = vpop.permute.xlu0 %595
  %s598 = scalar_lea.vmem %s6, 40
  %599 = vst.msk [vmem:[%s598] sm:$0xff] %vm374, %v596
  %s600 = smul.u32 3, 2
  %s601 = smul.addr %s600, 8
  %s602 = scalar_lea.vmem [#allocation2], %s601
  %v603 = vld [vmem:[%s602] sm:$0xff]
  %s604 = smul.u32 4, 2
  %s605 = smul.addr %s604, 8
  %s606 = scalar_lea.vmem [#allocation2], %s605
  %v607 = vld [vmem:[%s606 + $0x8] sm:$0xff]
  %v608 = vsel %vm367, %v590, %v596
  %v609 = vpack.c.bf16 %v608, %v608
  %v611 = vsel %vm114, %v609, 0
  %613 = vmatprep.subr.bf16.mxu0 %v258
  %614 = vmatpush1.bf16.msra.mxu0 %v257
  %615 = vmatprep.subr.bf16.mxu0 %v260
  %616 = vmatpush1.bf16.msra.mxu0 %v259
  %617 = vmatprep.subr.bf16.mxu0 %v262
  %618 = vmatpush1.bf16.msra.mxu0 %v261
  %619 = vmatprep.subr.bf16.mxu0 %v264
  %620 = vmatpush1.bf16.msra.mxu0 %v263
  %621 = vmatprep.subr.bf16.mxu0 0
  %622 = vmatpush1.bf16.msra.mxu0 0
  %623 = vmatprep.subr.bf16.mxu0 0
  %624 = vmatpush1.bf16.msra.mxu0 0
  %625 = vmatprep.subr.bf16.mxu0 0
  %626 = vmatpush1.bf16.msra.mxu0 0
  %627 = vmatprep.subr.bf16.mxu0 0
  %628 = vmatpush1.bf16.msra.mxu0 0
  %629 = vmatprep.subr.bf16.mxu0 0
  %630 = vmatpush1.bf16.msra.mxu0 0
  %631 = vmatprep.subr.bf16.mxu0 0
  %632 = vmatpush1.bf16.msra.mxu0 0
  %633 = vmatprep.subr.bf16.mxu0 0
  %634 = vmatpush1.bf16.msra.mxu0 0
  %635 = vmatprep.subr.bf16.mxu0 0
  %636 = vmatpush1.bf16.msra.mxu0 0
  %637 = vmatprep.subr.bf16.mxu0 0
  %638 = vmatpush1.bf16.msra.mxu0 0
  %639 = vmatprep.subr.bf16.mxu0 0
  %640 = vmatpush1.bf16.msra.mxu0 0
  %641 = vmatprep.subr.bf16.mxu0 0
  %642 = vmatpush1.bf16.msra.mxu0 0
  %643 = vmatprep.subr.bf16.mxu0 0
  %644 = vmatpush1.bf16.msra.mxu0 0
  %645 = vmatprep.mubr.bf16.mxu0 0
  %646 = vmatmul.mubr.bf16.gmra.mrb[0].mxu0 %v611
  %v647 = vpop.f32.mrb[0].mxu0
  %v648 = vadd.f32 0.0, %v647
  %v649 = vpop.f32.mrb[0].mxu0
  %v650 = vadd.f32 0.0, %v649
  %v651 = vpop.f32.mrb[0].mxu0
  %v652 = vpop.f32.mrb[0].mxu0
  %653 = vdwg.mxu0
  %v654 = vadd.f32 %v603, %v648
  %v655 = vmul.f32 %v654, 0.5
  %v656 = vtanh.pop %v655
  %v657 = vadd.f32 %v656, 1.0
  %v658 = vmul.f32 %v657, 0.5
  %v659 = vtanh.pop %v654
  %v660 = vmul.f32 %v658, %v558
  %662 = vrot.lane.b32.xlu0 %v659, 64
  %v663 = vpop.permute.xlu0 %662
  %v665 = vmul.f32 %v658, %v663
  %667 = vrot.lane.b32.xlu0 %v665, 32
  %v668 = vpop.permute.xlu0 %667
  %v670 = vadd.f32 %v660, %v668
  %v671 = vtanh.pop %v670
  %673 = vrot.lane.b32.xlu0 %v671, 64
  %v674 = vpop.permute.xlu0 %673
  %v676 = vmul.f32 %v658, %v674
  %v677 = vadd.f32 %v607, %v650
  %v678 = vmul.f32 %v677, 0.5
  %v679 = vtanh.pop %v678
  %v680 = vadd.f32 %v679, 1.0
  %v681 = vmul.f32 %v680, 0.5
  %v682 = vtanh.pop %v677
  %v683 = vmul.f32 %v681, %v581
  %685 = vrot.lane.b32.xlu0 %v682, 64
  %v686 = vpop.permute.xlu0 %685
  %v688 = vmul.f32 %v681, %v686
  %690 = vrot.lane.b32.xlu0 %v688, 32
  %v691 = vpop.permute.xlu0 %690
  %v693 = vadd.f32 %v683, %v691
  %v694 = vtanh.pop %v693
  %696 = vrot.lane.b32.xlu0 %v694, 64
  %v697 = vpop.permute.xlu0 %696
  %v699 = vmul.f32 %v681, %v697
  %701 = vrot.lane.b32.xlu0 %v676, 32
  %v702 = vpop.permute.xlu0 %701
  %s704 = scalar_lea.vmem %s6, 24
  %705 = vst.msk [vmem:[%s704] sm:$0xff] %vm367, %v702
  %707 = vrot.lane.b32.xlu0 %v699, 64
  %v708 = vpop.permute.xlu0 %707
  %s710 = scalar_lea.vmem %s6, 32
  %711 = vst.msk [vmem:[%s710] sm:$0xff] %vm374, %v708
  %v712 = vld [vmem:[%s606] sm:$0xff]
  %v713 = vld [vmem:[%s602 + $0x8] sm:$0xff]
  %v714 = vsel %vm367, %v702, %v708
  %v715 = vpack.c.bf16 %v714, %v714
  %v717 = vsel %vm114, %v715, 0
  %719 = vmatprep.subr.bf16.mxu0 %v258
  %720 = vmatpush1.bf16.msra.mxu0 %v257
  %721 = vmatprep.subr.bf16.mxu0 %v260
  %722 = vmatpush1.bf16.msra.mxu0 %v259
  %723 = vmatprep.subr.bf16.mxu0 %v262
  %724 = vmatpush1.bf16.msra.mxu0 %v261
  %725 = vmatprep.subr.bf16.mxu0 %v264
  %726 = vmatpush1.bf16.msra.mxu0 %v263
  %727 = vmatprep.subr.bf16.mxu0 0
  %728 = vmatpush1.bf16.msra.mxu0 0
  %729 = vmatprep.subr.bf16.mxu0 0
  %730 = vmatpush1.bf16.msra.mxu0 0
  %731 = vmatprep.subr.bf16.mxu0 0
  %732 = vmatpush1.bf16.msra.mxu0 0
  %733 = vmatprep.subr.bf16.mxu0 0
  %734 = vmatpush1.bf16.msra.mxu0 0
  %735 = vmatprep.subr.bf16.mxu0 0
  %736 = vmatpush1.bf16.msra.mxu0 0
  %737 = vmatprep.subr.bf16.mxu0 0
  %738 = vmatpush1.bf16.msra.mxu0 0
  %739 = vmatprep.subr.bf16.mxu0 0
  %740 = vmatpush1.bf16.msra.mxu0 0
  %741 = vmatprep.subr.bf16.mxu0 0
  %742 = vmatpush1.bf16.msra.mxu0 0
  %743 = vmatprep.subr.bf16.mxu0 0
  %744 = vmatpush1.bf16.msra.mxu0 0
  %745 = vmatprep.subr.bf16.mxu0 0
  %746 = vmatpush1.bf16.msra.mxu0 0
  %747 = vmatprep.subr.bf16.mxu0 0
  %748 = vmatpush1.bf16.msra.mxu0 0
  %749 = vmatprep.subr.bf16.mxu0 0
  %750 = vmatpush1.bf16.msra.mxu0 0
  %751 = vmatprep.mubr.bf16.mxu0 0
  %752 = vmatmul.mubr.bf16.gmra.mrb[0].mxu0 %v717
  %v753 = vpop.f32.mrb[0].mxu0
  %v754 = vadd.f32 0.0, %v753
  %v755 = vpop.f32.mrb[0].mxu0
  %v756 = vadd.f32 0.0, %v755
  %v757 = vpop.f32.mrb[0].mxu0
  %v758 = vpop.f32.mrb[0].mxu0
  %759 = vdwg.mxu0
  %v760 = vadd.f32 %v712, %v754
  %v761 = vmul.f32 %v760, 0.5
  %v762 = vtanh.pop %v761
  %v763 = vadd.f32 %v762, 1.0
  %v764 = vmul.f32 %v763, 0.5
  %v765 = vtanh.pop %v760
  %v766 = vmul.f32 %v764, %v670
  %768 = vrot.lane.b32.xlu0 %v765, 64
  %v769 = vpop.permute.xlu0 %768
  %v771 = vmul.f32 %v764, %v769
  %773 = vrot.lane.b32.xlu0 %v771, 32
  %v774 = vpop.permute.xlu0 %773
  %v776 = vadd.f32 %v766, %v774
  %v777 = vtanh.pop %v776
  %779 = vrot.lane.b32.xlu0 %v777, 64
  %v780 = vpop.permute.xlu0 %779
  %v782 = vmul.f32 %v764, %v780
  %v783 = vadd.f32 %v713, %v756
  %v784 = vmul.f32 %v783, 0.5
  %v785 = vtanh.pop %v784
  %v786 = vadd.f32 %v785, 1.0
  %v787 = vmul.f32 %v786, 0.5
  %v788 = vtanh.pop %v783
  %v789 = vmul.f32 %v787, %v693
  %791 = vrot.lane.b32.xlu0 %v788, 64
  %v792 = vpop.permute.xlu0 %791
  %v794 = vmul.f32 %v787, %v792
  %796 = vrot.lane.b32.xlu0 %v794, 32
  %v797 = vpop.permute.xlu0 %796
  %v799 = vadd.f32 %v789, %v797
  %v800 = vtanh.pop %v799
  %802 = vrot.lane.b32.xlu0 %v800, 64
  %v803 = vpop.permute.xlu0 %802
  %v805 = vmul.f32 %v787, %v803
  %807 = vrot.lane.b32.xlu0 %v782, 32
  %v808 = vpop.permute.xlu0 %807
  %810 = vst.msk [vmem:[%s710] sm:$0xff] %vm367, %v808
  %812 = vrot.lane.b32.xlu0 %v805, 64
  %v813 = vpop.permute.xlu0 %812
  %815 = vst.msk [vmem:[%s704] sm:$0xff] %vm374, %v813
  %v816 = vld [vmem:[%s494] sm:$0xff]
  %v817 = vld [vmem:[%s490 + $0x8] sm:$0xff]
  %v818 = vsel %vm367, %v808, %v813
  %v819 = vpack.c.bf16 %v818, %v818
  %v821 = vsel %vm114, %v819, 0
  %823 = vmatprep.subr.bf16.mxu0 %v258
  %824 = vmatpush1.bf16.msra.mxu0 %v257
  %825 = vmatprep.subr.bf16.mxu0 %v260
  %826 = vmatpush1.bf16.msra.mxu0 %v259
  %827 = vmatprep.subr.bf16.mxu0 %v262
  %828 = vmatpush1.bf16.msra.mxu0 %v261
  %829 = vmatprep.subr.bf16.mxu0 %v264
  %830 = vmatpush1.bf16.msra.mxu0 %v263
  %831 = vmatprep.subr.bf16.mxu0 0
  %832 = vmatpush1.bf16.msra.mxu0 0
  %833 = vmatprep.subr.bf16.mxu0 0
  %834 = vmatpush1.bf16.msra.mxu0 0
  %835 = vmatprep.subr.bf16.mxu0 0
  %836 = vmatpush1.bf16.msra.mxu0 0
  %837 = vmatprep.subr.bf16.mxu0 0
  %838 = vmatpush1.bf16.msra.mxu0 0
  %839 = vmatprep.subr.bf16.mxu0 0
  %840 = vmatpush1.bf16.msra.mxu0 0
  %841 = vmatprep.subr.bf16.mxu0 0
  %842 = vmatpush1.bf16.msra.mxu0 0
  %843 = vmatprep.subr.bf16.mxu0 0
  %844 = vmatpush1.bf16.msra.mxu0 0
  %845 = vmatprep.subr.bf16.mxu0 0
  %846 = vmatpush1.bf16.msra.mxu0 0
  %847 = vmatprep.subr.bf16.mxu0 0
  %848 = vmatpush1.bf16.msra.mxu0 0
  %849 = vmatprep.subr.bf16.mxu0 0
  %850 = vmatpush1.bf16.msra.mxu0 0
  %851 = vmatprep.subr.bf16.mxu0 0
  %852 = vmatpush1.bf16.msra.mxu0 0
  %853 = vmatprep.subr.bf16.mxu0 0
  %854 = vmatpush1.bf16.msra.mxu0 0
  %855 = vmatprep.mubr.bf16.mxu0 0
  %856 = vmatmul.mubr.bf16.gmra.mrb[0].mxu0 %v821
  %v857 = vpop.f32.mrb[0].mxu0
  %v858 = vadd.f32 0.0, %v857
  %v859 = vpop.f32.mrb[0].mxu0
  %v860 = vadd.f32 0.0, %v859
  %v861 = vpop.f32.mrb[0].mxu0
  %v862 = vpop.f32.mrb[0].mxu0
  %863 = vdwg.mxu0
  %v864 = vadd.f32 %v816, %v858
  %v865 = vmul.f32 %v864, 0.5
  %v866 = vtanh.pop %v865
  %v867 = vadd.f32 %v866, 1.0
  %v868 = vmul.f32 %v867, 0.5
  %v869 = vtanh.pop %v864
  %v870 = vmul.f32 %v868, %v776
  %872 = vrot.lane.b32.xlu0 %v869, 64
  %v873 = vpop.permute.xlu0 %872
  %v875 = vmul.f32 %v868, %v873
  %877 = vrot.lane.b32.xlu0 %v875, 32
  %v878 = vpop.permute.xlu0 %877
  %v880 = vadd.f32 %v870, %v878
  %v881 = vtanh.pop %v880
  %883 = vrot.lane.b32.xlu0 %v881, 64
  %v884 = vpop.permute.xlu0 %883
  %v886 = vmul.f32 %v868, %v884
  %v887 = vadd.f32 %v817, %v860
  %v888 = vmul.f32 %v887, 0.5
  %v889 = vtanh.pop %v888
  %v890 = vadd.f32 %v889, 1.0
  %v891 = vmul.f32 %v890, 0.5
  %v892 = vtanh.pop %v887
  %v893 = vmul.f32 %v891, %v799
  %895 = vrot.lane.b32.xlu0 %v892, 64
  %v896 = vpop.permute.xlu0 %895
  %v898 = vmul.f32 %v891, %v896
  %900 = vrot.lane.b32.xlu0 %v898, 32
  %v901 = vpop.permute.xlu0 %900
  %v903 = vadd.f32 %v893, %v901
  %v904 = vtanh.pop %v903
  %906 = vrot.lane.b32.xlu0 %v904, 64
  %v907 = vpop.permute.xlu0 %906
  %v909 = vmul.f32 %v891, %v907
  %911 = vrot.lane.b32.xlu0 %v886, 32
  %v912 = vpop.permute.xlu0 %911
  %914 = vst.msk [vmem:[%s598] sm:$0xff] %vm367, %v912
  %916 = vrot.lane.b32.xlu0 %v909, 64
  %v917 = vpop.permute.xlu0 %916
  %919 = vst.msk [vmem:[%s592] sm:$0xff] %vm374, %v917
  %v920 = vld [vmem:[%s382] sm:$0xff]
  %v921 = vld [vmem:[%s378 + $0x8] sm:$0xff]
  %v922 = vsel %vm367, %v912, %v917
  %v923 = vpack.c.bf16 %v922, %v922
  %v925 = vsel %vm114, %v923, 0
  %927 = vmatprep.subr.bf16.mxu0 %v258
  %928 = vmatpush1.bf16.msra.mxu0 %v257
  %929 = vmatprep.subr.bf16.mxu0 %v260
  %930 = vmatpush1.bf16.msra.mxu0 %v259
  %931 = vmatprep.subr.bf16.mxu0 %v262
  %932 = vmatpush1.bf16.msra.mxu0 %v261
  %933 = vmatprep.subr.bf16.mxu0 %v264
  %934 = vmatpush1.bf16.msra.mxu0 %v263
  %935 = vmatprep.subr.bf16.mxu0 0
  %936 = vmatpush1.bf16.msra.mxu0 0
  %937 = vmatprep.subr.bf16.mxu0 0
  %938 = vmatpush1.bf16.msra.mxu0 0
  %939 = vmatprep.subr.bf16.mxu0 0
  %940 = vmatpush1.bf16.msra.mxu0 0
  %941 = vmatprep.subr.bf16.mxu0 0
  %942 = vmatpush1.bf16.msra.mxu0 0
  %943 = vmatprep.subr.bf16.mxu0 0
  %944 = vmatpush1.bf16.msra.mxu0 0
  %945 = vmatprep.subr.bf16.mxu0 0
  %946 = vmatpush1.bf16.msra.mxu0 0
  %947 = vmatprep.subr.bf16.mxu0 0
  %948 = vmatpush1.bf16.msra.mxu0 0
  %949 = vmatprep.subr.bf16.mxu0 0
  %950 = vmatpush1.bf16.msra.mxu0 0
  %951 = vmatprep.subr.bf16.mxu0 0
  %952 = vmatpush1.bf16.msra.mxu0 0
  %953 = vmatprep.subr.bf16.mxu0 0
  %954 = vmatpush1.bf16.msra.mxu0 0
  %955 = vmatprep.subr.bf16.mxu0 0
  %956 = vmatpush1.bf16.msra.mxu0 0
  %957 = vmatprep.subr.bf16.mxu0 0
  %958 = vmatpush1.bf16.msra.mxu0 0
  %959 = vmatprep.mubr.bf16.mxu0 0
  %960 = vmatmul.mubr.bf16.gmra.mrb[0].mxu0 %v925
  %v961 = vpop.f32.mrb[0].mxu0
  %v962 = vadd.f32 0.0, %v961
  %v963 = vpop.f32.mrb[0].mxu0
  %v964 = vadd.f32 0.0, %v963
  %v965 = vpop.f32.mrb[0].mxu0
  %v966 = vpop.f32.mrb[0].mxu0
  %967 = vdwg.mxu0
  %v968 = vadd.f32 %v920, %v962
  %v969 = vmul.f32 %v968, 0.5
  %v970 = vtanh.pop %v969
  %v971 = vadd.f32 %v970, 1.0
  %v972 = vmul.f32 %v971, 0.5
  %v973 = vtanh.pop %v968
  %v974 = vmul.f32 %v972, %v880
  %976 = vrot.lane.b32.xlu0 %v973, 64
  %v977 = vpop.permute.xlu0 %976
  %v979 = vmul.f32 %v972, %v977
  %981 = vrot.lane.b32.xlu0 %v979, 32
  %v982 = vpop.permute.xlu0 %981
  %v984 = vadd.f32 %v974, %v982
  %v985 = vtanh.pop %v984
  %987 = vrot.lane.b32.xlu0 %v985, 64
  %v988 = vpop.permute.xlu0 %987
  %v990 = vmul.f32 %v972, %v988
  %v991 = vadd.f32 %v921, %v964
  %v992 = vmul.f32 %v991, 0.5
  %v993 = vtanh.pop %v992
  %v994 = vadd.f32 %v993, 1.0
  %v995 = vmul.f32 %v994, 0.5
  %v996 = vtanh.pop %v991
  %v997 = vmul.f32 %v995, %v903
  %999 = vrot.lane.b32.xlu0 %v996, 64
  %v1000 = vpop.permute.xlu0 %999
  %v1002 = vmul.f32 %v995, %v1000
  %1004 = vrot.lane.b32.xlu0 %v1002, 32
  %v1005 = vpop.permute.xlu0 %1004
  %v1007 = vadd.f32 %v997, %v1005
  %v1008 = vtanh.pop %v1007
  %1010 = vrot.lane.b32.xlu0 %v1008, 64
  %v1011 = vpop.permute.xlu0 %1010
  %v1013 = vmul.f32 %v995, %v1011
  %1015 = vrot.lane.b32.xlu0 %v990, 32
  %v1016 = vpop.permute.xlu0 %1015
  %1018 = vst.msk [vmem:[%s486] sm:$0xff] %vm367, %v1016
  %1020 = vrot.lane.b32.xlu0 %v1013, 64
  %v1021 = vpop.permute.xlu0 %1020
  %1023 = vst.msk [vmem:[%s480] sm:$0xff] %vm374, %v1021
  %v1024 = vld [vmem:[%s230] sm:$0xff]
  %v1025 = vld [vmem:[%s226 + $0x8] sm:$0xff]
  %v1026 = vsel %vm367, %v1016, %v1021
  %v1027 = vpack.c.bf16 %v1026, %v1026
  %v1029 = vsel %vm114, %v1027, 0
  %1031 = vmatprep.subr.bf16.mxu0 %v258
  %1032 = vmatpush1.bf16.msra.mxu0 %v257
  %1033 = vmatprep.subr.bf16.mxu0 %v260
  %1034 = vmatpush1.bf16.msra.mxu0 %v259
  %1035 = vmatprep.subr.bf16.mxu0 %v262
  %1036 = vmatpush1.bf16.msra.mxu0 %v261
  %1037 = vmatprep.subr.bf16.mxu0 %v264
  %1038 = vmatpush1.bf16.msra.mxu0 %v263
  %1039 = vmatprep.subr.bf16.mxu0 0
  %1040 = vmatpush1.bf16.msra.mxu0 0
  %1041 = vmatprep.subr.bf16.mxu0 0
  %1042 = vmatpush1.bf16.msra.mxu0 0
  %1043 = vmatprep.subr.bf16.mxu0 0
  %1044 = vmatpush1.bf16.msra.mxu0 0
  %1045 = vmatprep.subr.bf16.mxu0 0
  %1046 = vmatpush1.bf16.msra.mxu0 0
  %1047 = vmatprep.subr.bf16.mxu0 0
  %1048 = vmatpush1.bf16.msra.mxu0 0
  %1049 = vmatprep.subr.bf16.mxu0 0
  %1050 = vmatpush1.bf16.msra.mxu0 0
  %1051 = vmatprep.subr.bf16.mxu0 0
  %1052 = vmatpush1.bf16.msra.mxu0 0
  %1053 = vmatprep.subr.bf16.mxu0 0
  %1054 = vmatpush1.bf16.msra.mxu0 0
  %1055 = vmatprep.subr.bf16.mxu0 0
  %1056 = vmatpush1.bf16.msra.mxu0 0
  %1057 = vmatprep.subr.bf16.mxu0 0
  %1058 = vmatpush1.bf16.msra.mxu0 0
  %1059 = vmatprep.subr.bf16.mxu0 0
  %1060 = vmatpush1.bf16.msra.mxu0 0
  %1061 = vmatprep.subr.bf16.mxu0 0
  %1062 = vmatpush1.bf16.msra.mxu0 0
  %1063 = vmatprep.mubr.bf16.mxu0 0
  %1064 = vmatmul.mubr.bf16.gmra.mrb[0].mxu0 %v1029
  %v1065 = vpop.f32.mrb[0].mxu0
  %v1066 = vadd.f32 0.0, %v1065
  %v1067 = vpop.f32.mrb[0].mxu0
  %v1068 = vadd.f32 0.0, %v1067
  %v1069 = vpop.f32.mrb[0].mxu0
  %v1070 = vpop.f32.mrb[0].mxu0
  %1071 = vdwg.mxu0
  %v1072 = vadd.f32 %v1024, %v1066
  %v1073 = vmul.f32 %v1072, 0.5
  %v1074 = vtanh.pop %v1073
  %v1075 = vadd.f32 %v1074, 1.0
  %v1076 = vmul.f32 %v1075, 0.5
  %v1077 = vtanh.pop %v1072
  %v1078 = vmul.f32 %v1076, %v984
  %1080 = vrot.lane.b32.xlu0 %v1077, 64
  %v1081 = vpop.permute.xlu0 %1080
  %v1083 = vmul.f32 %v1076, %v1081
  %1085 = vrot.lane.b32.xlu0 %v1083, 32
  %v1086 = vpop.permute.xlu0 %1085
  %v1088 = vadd.f32 %v1078, %v1086
  %v1089 = vtanh.pop %v1088
  %1091 = vrot.lane.b32.xlu0 %v1089, 64
  %v1092 = vpop.permute.xlu0 %1091
  %v1094 = vmul.f32 %v1076, %v1092
  %v1095 = vadd.f32 %v1025, %v1068
  %v1096 = vmul.f32 %v1095, 0.5
  %v1097 = vtanh.pop %v1096
  %v1098 = vadd.f32 %v1097, 1.0
  %v1099 = vmul.f32 %v1098, 0.5
  %v1100 = vtanh.pop %v1095
  %v1101 = vmul.f32 %v1099, %v1007
  %1103 = vrot.lane.b32.xlu0 %v1100, 64
  %v1104 = vpop.permute.xlu0 %1103
  %v1106 = vmul.f32 %v1099, %v1104
  %1108 = vrot.lane.b32.xlu0 %v1106, 32
  %v1109 = vpop.permute.xlu0 %1108
  %v1111 = vadd.f32 %v1101, %v1109
  %v1112 = vtanh.pop %v1111
  %1114 = vrot.lane.b32.xlu0 %v1112, 64
  %v1115 = vpop.permute.xlu0 %1114
  %v1117 = vmul.f32 %v1099, %v1115
  %1119 = vrot.lane.b32.xlu0 %v1094, 32
  %v1120 = vpop.permute.xlu0 %1119
  %1122 = vst.msk [vmem:[%s373] sm:$0xff] %vm367, %v1120
  %1124 = vrot.lane.b32.xlu0 %v1117, 64
  %v1125 = vpop.permute.xlu0 %1124
  %1127 = vst.msk [vmem:[%s6] sm:$0xff] %vm374, %v1125
  %v1128 = vld [vmem:[%s373] sm:$0xff]
  %v1129 = vpack.c.bf16 %v1128, %v1128
  %v1130 = vld [vmem:[%s4] sm:$0xf]
  %v1131 = vld [vmem:[%s4 + $0x4] sm:$0xf]
  %v1132 = vld [vmem:[%s4 + $0x8] sm:$0xf]
  %v1133 = vld [vmem:[%s4 + $0xc] sm:$0xf]
  %v1134 = vld [vmem:[%s4 + $0x10] sm:$0xf]
  %v1135 = vld [vmem:[%s4 + $0x14] sm:$0xf]
  %v1136 = vld [vmem:[%s4 + $0x18] sm:$0xf]
  %v1137 = vld [vmem:[%s4 + $0x1c] sm:$0xf]
  %v1138 = vld [vmem:[%s5] sm:$0x1]
  %v1140 = vlaneseq
  %v1141 = vshrl.u32 %v1140, 7
  %v1142 = vsub.s32 0, %v1141
  %v1143 = vrot.slane %v1138, %v1142
  %v1153 = vunpack.c.l.b16 %v1130
  %v1154 = vunpack.c.l.b16 %v1131
  %v1155 = vunpack.c.l.b16 %v1132
  %v1156 = vunpack.c.l.b16 %v1133
  %v1157 = vunpack.c.l.b16 %v1134
  %v1158 = vunpack.c.l.b16 %v1135
  %v1159 = vunpack.c.l.b16 %v1136
  %v1160 = vunpack.c.l.b16 %v1137
  %v1161 = vpack.c.b16 %v1154, %v1153
  %v1162 = vpack.c.b16 %v1156, %v1155
  %v1163 = vpack.c.b16 %v1158, %v1157
  %v1164 = vpack.c.b16 %v1160, %v1159
  %v1170 = vsel %vm114, %v1129, 0
  %1172 = vmatprep.subr.bf16.mxu0 0
  %1173 = vmatpush1.bf16.msra.mxu0 %v1161
  %1174 = vmatprep.subr.bf16.mxu0 0
  %1175 = vmatpush1.bf16.msra.mxu0 %v1162
  %1176 = vmatprep.subr.bf16.mxu0 0
  %1177 = vmatpush1.bf16.msra.mxu0 %v1163
  %1178 = vmatprep.subr.bf16.mxu0 0
  %1179 = vmatpush1.bf16.msra.mxu0 %v1164
  %1180 = vmatprep.subr.bf16.mxu0 0
  %1181 = vmatpush1.bf16.msra.mxu0 0
  %1182 = vmatprep.subr.bf16.mxu0 0
  %1183 = vmatpush1.bf16.msra.mxu0 0
  %1184 = vmatprep.subr.bf16.mxu0 0
  %1185 = vmatpush1.bf16.msra.mxu0 0
  %1186 = vmatprep.subr.bf16.mxu0 0
  %1187 = vmatpush1.bf16.msra.mxu0 0
  %1188 = vmatprep.subr.bf16.mxu0 0
  %1189 = vmatpush1.bf16.msra.mxu0 0
  %1190 = vmatprep.subr.bf16.mxu0 0
  %1191 = vmatpush1.bf16.msra.mxu0 0
  %1192 = vmatprep.subr.bf16.mxu0 0
  %1193 = vmatpush1.bf16.msra.mxu0 0
  %1194 = vmatprep.subr.bf16.mxu0 0
  %1195 = vmatpush1.bf16.msra.mxu0 0
  %1196 = vmatprep.subr.bf16.mxu0 0
  %1197 = vmatpush1.bf16.msra.mxu0 0
  %1198 = vmatprep.subr.bf16.mxu0 0
  %1199 = vmatpush1.bf16.msra.mxu0 0
  %1200 = vmatprep.subr.bf16.mxu0 0
  %1201 = vmatpush1.bf16.msra.mxu0 0
  %1202 = vmatprep.subr.bf16.mxu0 0
  %1203 = vmatpush1.bf16.msra.mxu0 0
  %1204 = vmatprep.mubr.bf16.mxu0 0
  %1205 = vmatmul.mubr.bf16.gmra.mrb[0].mxu0 %v1170
  %v1206 = vpop.f32.mrb[0].mxu0
  %v1207 = vadd.f32 %v1143, %v1206
  %v1208 = vpop.f32.mrb[0].mxu0
  %v1209 = vpop.f32.mrb[0].mxu0
  %v1210 = vpop.f32.mrb[0].mxu0
  %1211 = vdwg.mxu0
  %vm1212 = vcmask 31744
  %1213 = vst.msk [vmem:[%s7] sm:$0xff] %vm1212, %v1207
  // Predicated region
  $region26: #{target_model_forward.3} parent=0 // pred_check
    _
  $region27: #{target_model_forward.3} parent=0 // pred_check_branch
    %1215 = sbr.rel (0) target = $region29
  $region28: #{target_model_forward.3} parent=0 // pred_region
    _
  $region29: #{target_model_forward.3} parent=0 // pred_fallthru
    _
  // Predicated region
  $region30: #{target_model_forward.3} parent=0 // pred_check
    _
  $region31: #{target_model_forward.3} parent=0 // pred_check_branch
    %1217 = sbr.rel (0) target = $region33
  $region32: #{target_model_forward.3} parent=0 // pred_region
    _
  $region33: #{target_model_forward.3} parent=0 // pred_fallthru
    _
  // Predicated region
  $region34: #{target_model_forward.3} parent=0 // pred_check
    _
  $region35: #{target_model_forward.3} parent=0 // pred_check_branch
    %1219 = sbr.rel (0) target = $region37
  $region36: #{target_model_forward.3} parent=0 // pred_region
    _
  $region37: #{target_model_forward.3} parent=0 // pred_fallthru
    _
  // Predicated region
  $region38: #{target_model_forward.3} parent=0 // pred_check
    _
  $region39: #{target_model_forward.3} parent=0 // pred_check_branch
    %1221 = sbr.rel (0) target = $region41
  $region40: #{target_model_forward.3} parent=0 // pred_region
    _
  $region41: #{target_model_forward.3} parent=0 // pred_fallthru
    _

</llo_original>
